<compile_context>
chip_gen: v7x
topology: tpu7x:2x2x1
jax: 0.10.0
libtpu: 0.0.40
codegen_flags: <defaults>
</compile_context>

<pallas_src>
import functools
import math

import numpy as np
import jax
import jax.numpy as jnp
from jax.experimental import pallas as pl
from jax.experimental.pallas import tpu as pltpu


LN_EPS = 1e-5  # PyTorch nn.LayerNorm default

PACKED_ORDER = (
    "w_qkv_s", "b_qkv_s", "wo_s", "bo_s",
    "wq_e", "bq_e", "w_kv_e", "b_kv_e", "wo_e", "bo_e",
    "w1", "b1", "w2", "b2",
    "ln_g", "ln_b",
)


def _decoder_layer_kernel(n_heads, head_dim, emit_attn, compute_dtype, *refs):
    (trg_q_ref, trg_kv_ref, enc_ref, tmask_ref, smask_ref,
     w_qkv_s, b_qkv_s, wo_s, bo_s,
     wq_e, bq_e, w_kv_e, b_kv_e, wo_e, bo_e,
     w1, b1, w2, b2, ln_g, ln_b) = refs[:21]
    out_ref = refs[21]
    attn_ref = refs[22] if emit_attn else None

    hid = n_heads * head_dim
    inv_scale = jnp.float32(1.0 / math.sqrt(head_dim))
    cdt = compute_dtype

    x = trg_q_ref[0]              # (TQ, H)  query rows of this tile (f32)
    x_kv = trg_kv_ref[0]          # (T,  H)  full target sequence for self K/V
    enc = enc_ref[0]              # (S,  H)  encoder output
    tmask_add = tmask_ref[0, 0]   # (TQ, T)  additive mask (0 / -1e10)
    smask_add = smask_ref[0, 0]   # (1,  S)  additive mask (0 / -1e10)

    def softmax_rows(e):          # e: (TQ, TK) f32
        m = jnp.max(e, axis=-1, keepdims=True)
        p = jnp.exp(e - m)
        denom = jnp.sum(p, axis=-1, keepdims=True)
        # approx reciprocal lowers to the (otherwise idle) EUP slot.
        return p * pl.reciprocal(denom, approx=True)

    def layer_norm(v, row):
        mu = jnp.mean(v, axis=-1, keepdims=True)
        var = jnp.mean((v - mu) ** 2, axis=-1, keepdims=True)
        g = ln_g[row:row + 1, :]
        b = ln_b[row:row + 1, :]
        return (v - mu) * jax.lax.rsqrt(var + LN_EPS) * g + b

    def attention(q, k, v, add_mask, attn_store):
        # q: (TQ, H) f32, already scaled by 1/sqrt(head_dim); k, v: (TK, H) f32.
        # Static per-head loop over contiguous lane slices (no (T, nh, hd)
        # reshape / transpose in the hot path).
        ctx_parts = []
        for h in range(n_heads):
            sl = slice(h * head_dim, (h + 1) * head_dim)
            qh = q[:, sl].astype(cdt)
            kh = k[:, sl].astype(cdt)
            vh = v[:, sl].astype(cdt)
            e = jax.lax.dot_general(                      # q @ k^T on the MXU
                qh, kh, (((1,), (1,)), ((), ())),
                preferred_element_type=jnp.float32)       # (TQ, TK) f32
            e = e + add_mask
            p = softmax_rows(e)
            if attn_store is not None:
                attn_store[0, h] = p.astype(attn_store.dtype)
            ctx_parts.append(jnp.dot(p.astype(cdt), vh,
                                     preferred_element_type=jnp.float32))
        return jnp.concatenate(ctx_parts, axis=-1)        # (TQ, H) f32

    # ---------------- masked self-attention + residual + LN -----------------
    x16 = x.astype(cdt)
    xkv16 = x_kv.astype(cdt)
    wqkv_s = w_qkv_s[...]                                 # (H, 3H) bf16
    q_s = (jnp.dot(x16, wqkv_s[:, :hid], preferred_element_type=jnp.float32)
           + b_qkv_s[:, :hid]) * inv_scale
    kv_s = (jnp.dot(xkv16, wqkv_s[:, hid:], preferred_element_type=jnp.float32)
            + b_qkv_s[:, hid:])
    sa_ctx = attention(q_s, kv_s[:, :hid], kv_s[:, hid:], tmask_add, None)
    sa = jnp.dot(sa_ctx.astype(cdt), wo_s[...],
                 preferred_element_type=jnp.float32) + bo_s[...]
    x = layer_norm(x + sa, 0)

    # --------------- encoder-decoder attention + residual + LN --------------
    x16 = x.astype(cdt)
    enc16 = enc.astype(cdt)
    q_e = (jnp.dot(x16, wq_e[...], preferred_element_type=jnp.float32)
           + bq_e[...]) * inv_scale
    kv_e = (jnp.dot(enc16, w_kv_e[...], preferred_element_type=jnp.float32)
            + b_kv_e[...])
    ea_ctx = attention(q_e, kv_e[:, :hid], kv_e[:, hid:], smask_add, attn_ref)
    ea = jnp.dot(ea_ctx.astype(cdt), wo_e[...],
                 preferred_element_type=jnp.float32) + bo_e[...]
    x = layer_norm(x + ea, 1)

    # --------------- positionwise feedforward + residual + LN ---------------
    h1 = jnp.maximum(
        jnp.dot(x.astype(cdt), w1[...], preferred_element_type=jnp.float32)
        + b1[...], 0.0)
    ff = jnp.dot(h1.astype(cdt), w2[...],
                 preferred_element_type=jnp.float32) + b2[...]
    x = layer_norm(x + ff, 2)

    out_ref[0] = x.astype(out_ref.dtype)


def _pack_params(params, compute_dtype):
    """Pack the 26 raw parameters into 16 arrays (weights in compute_dtype)."""
    wdt = compute_dtype
    f32 = jnp.float32
    packed = {
        "w_qkv_s": jnp.concatenate(
            [params["wq_s"], params["wk_s"], params["wv_s"]], axis=1).astype(wdt),
        "b_qkv_s": jnp.concatenate(
            [params["bq_s"], params["bk_s"], params["bv_s"]], axis=1).astype(f32),
        "wo_s": params["wo_s"].astype(wdt),
        "bo_s": params["bo_s"].astype(f32),
        "wq_e": params["wq_e"].astype(wdt),
        "bq_e": params["bq_e"].astype(f32),
        "w_kv_e": jnp.concatenate(
            [params["wk_e"], params["wv_e"]], axis=1).astype(wdt),
        "b_kv_e": jnp.concatenate(
            [params["bk_e"], params["bv_e"]], axis=1).astype(f32),
        "wo_e": params["wo_e"].astype(wdt),
        "bo_e": params["bo_e"].astype(f32),
        "w1": params["w1"].astype(wdt),
        "b1": params["b1"].astype(f32),
        "w2": params["w2"].astype(wdt),
        "b2": params["b2"].astype(f32),
        "ln_g": jnp.concatenate(
            [params["g_sa"], params["g_ea"], params["g_ff"]], axis=0).astype(f32),
        "ln_b": jnp.concatenate(
            [params["be_sa"], params["be_ea"], params["be_ff"]], axis=0).astype(f32),
    }
    return [packed[k] for k in PACKED_ORDER]


def decoder_layer(trg, enc_src, trg_mask, src_mask, params, n_heads, *,
                  block_q=None, return_attention=True,
                  compute_dtype=jnp.bfloat16):
    B, T, H = trg.shape
    S = enc_src.shape[1]
    assert H % n_heads == 0
    head_dim = H // n_heads
    PF = params["w1"].shape[1]

    if block_q is None:
        block_q = min(T, 128)
    assert T % block_q == 0, "target length must be divisible by block_q"
    assert block_q == T or block_q % 8 == 0
    nq = T // block_q

    param_list = _pack_params(params, compute_dtype)

    # Additive masks precomputed once on the host (single VPU add in-kernel
    # instead of a per-head compare+select).
    neg = jnp.float32(-1e10)
    tmask_add = jnp.where(trg_mask == 0, neg, jnp.float32(0.0))
    smask_add = jnp.where(src_mask == 0, neg, jnp.float32(0.0))

    def param_spec(a):
        nd = a.ndim
        return pl.BlockSpec(a.shape, lambda b, q, _nd=nd: (0,) * _nd)

    in_specs = [
        pl.BlockSpec((1, block_q, H), lambda b, q: (b, q, 0)),        # trg (Q rows)
        pl.BlockSpec((1, T, H), lambda b, q: (b, 0, 0)),              # trg (K/V)
        pl.BlockSpec((1, S, H), lambda b, q: (b, 0, 0)),              # enc_src
        pl.BlockSpec((1, 1, block_q, T), lambda b, q: (b, 0, q, 0)),  # trg mask
        pl.BlockSpec((1, 1, 1, S), lambda b, q: (b, 0, 0, 0)),        # src mask
    ] + [param_spec(p) for p in param_list]

    out_spec = pl.BlockSpec((1, block_q, H), lambda b, q: (b, q, 0))
    out_sds = jax.ShapeDtypeStruct((B, T, H), jnp.float32)
    if return_attention:
        out_specs = [out_spec,
                     pl.BlockSpec((1, n_heads, block_q, S),
                                  lambda b, q: (b, 0, q, 0))]
        out_shape = (out_sds,
                     jax.ShapeDtypeStruct((B, n_heads, T, S), jnp.float32))
    else:
        out_specs = out_spec
        out_shape = out_sds

    kernel = functools.partial(_decoder_layer_kernel, n_heads, head_dim,
                               return_attention, compute_dtype)

    # --- explicit VMEM budget from the actual block sizes (with headroom) ----
    param_bytes = sum(int(np.prod(p.shape)) * np.dtype(p.dtype).itemsize
                      for p in param_list)
    act_in = 2 * 4 * (block_q * H + T * H + S * H + block_q * T + S)
    act_out = 2 * 4 * (block_q * H
                       + (n_heads * block_q * S if return_attention else 0))
    work = 4 * (2 * T * H + 2 * S * H + block_q * PF
                + 4 * block_q * max(T, S) + 8 * block_q * H)
    est = 2 * param_bytes + act_in + act_out + work + (4 << 20)
    try:
        cap = int(0.75 * pltpu.get_tpu_info().vmem_capacity_bytes)
    except Exception:
        cap = 48 * (1 << 20)  # conservative: below v7x's 64 MiB physical VMEM
    vmem_limit = int(min(max(est, 16 * (1 << 20)), max(cap, 16 * (1 << 20))))

    # --- advisory cost estimate so XLA can overlap neighbouring ops ----------
    flops = 2 * B * (4 * T * H * H                 # self-attn projections
                     + 2 * T * T * H               # self-attn scores + ctx
                     + 2 * T * H * H + 2 * S * H * H   # enc-attn projections
                     + 2 * T * S * H               # enc-attn scores + ctx
                     + 2 * T * H * PF)             # feedforward
    transcendentals = B * n_heads * (T * T + T * S)
    bytes_accessed = (param_bytes
                      + 4 * B * (2 * T * H + S * H + T * T + S)
                      + 4 * B * T * H
                      + (4 * B * n_heads * T * S if return_attention else 0))

    result = pl.pallas_call(
        kernel,
        out_shape=out_shape,
        grid_spec=pltpu.PrefetchScalarGridSpec(
            num_scalar_prefetch=0,
            grid=(B, nq),
            in_specs=in_specs,
            out_specs=out_specs,
        ),
        compiler_params=pltpu.CompilerParams(
            dimension_semantics=("parallel", "parallel"),
            vmem_limit_bytes=vmem_limit),
        cost_estimate=pl.CostEstimate(flops=int(flops),
                                      transcendentals=int(transcendentals),
                                      bytes_accessed=int(bytes_accessed)),
    )(trg, trg, enc_src, tmask_add, smask_add, *param_list)

    if return_attention:
        return result
    return result, None


# ------------------------- pure-JAX reference (f32) --------------------------
def _mha_ref(q_in, kv_in, mask, wq, bq, wk, bk, wv, bv, wo, bo, n_heads):
    B, Tq, H = q_in.shape
    Tk = kv_in.shape[1]
    hd = H // n_heads
    q = q_in @ wq + bq
    k = kv_in @ wk + bk
    v = kv_in @ wv + bv
    qh = q.reshape(B, Tq, n_heads, hd).transpose(0, 2, 1, 3)
    kh = k.reshape(B, Tk, n_heads, hd).transpose(0, 2, 1, 3)
    vh = v.reshape(B, Tk, n_heads, hd).transpose(0, 2, 1, 3)
    energy = (qh @ kh.transpose(0, 1, 3, 2)) / np.sqrt(hd).astype(np.float32)
    energy = jnp.where(mask == 0, -1e10, energy)
    attn = jax.nn.softmax(energy, axis=-1)
    ctx = (attn @ vh).transpose(0, 2, 1, 3).reshape(B, Tq, H)
    return ctx @ wo + bo, attn


def _ln_ref(x, g, b):
    mu = jnp.mean(x, axis=-1, keepdims=True)
    var = jnp.mean((x - mu) ** 2, axis=-1, keepdims=True)
    return (x - mu) / jnp.sqrt(var + LN_EPS) * g + b


def decoder_layer_ref(trg, enc_src, trg_mask, src_mask, p, n_heads):
    sa, _ = _mha_ref(trg, trg, trg_mask,
                     p["wq_s"], p["bq_s"], p["wk_s"], p["bk_s"],
                     p["wv_s"], p["bv_s"], p["wo_s"], p["bo_s"], n_heads)
    x = _ln_ref(trg + sa, p["g_sa"], p["be_sa"])
    ea, attn = _mha_ref(x, enc_src, src_mask,
                        p["wq_e"], p["bq_e"], p["wk_e"], p["bk_e"],
                        p["wv_e"], p["bv_e"], p["wo_e"], p["bo_e"], n_heads)
    x = _ln_ref(x + ea, p["g_ea"], p["be_ea"])
    ff = jnp.maximum(x @ p["w1"] + p["b1"], 0.0) @ p["w2"] + p["b2"]
    x = _ln_ref(x + ff, p["g_ff"], p["be_ff"])
    return x, attn


# ------------------------------ parameter init -------------------------------
def init_params(key, hid_dim, pf_dim):
    params = {}
    keys = iter(jax.random.split(key, 32))

    def rnd(shape, scale=0.1):
        return scale * jax.random.normal(next(keys), shape, dtype=jnp.float32)

    for suffix in ("s", "e"):
        for name in ("q", "k", "v", "o"):
            params[f"w{name}_{suffix}"] = rnd((hid_dim, hid_dim))
            params[f"b{name}_{suffix}"] = rnd((1, hid_dim))
    params["w1"] = rnd((hid_dim, pf_dim))
    params["b1"] = rnd((1, pf_dim))
    params["w2"] = rnd((pf_dim, hid_dim))
    params["b2"] = rnd((1, hid_dim))
    for ln in ("sa", "ea", "ff"):
        params[f"g_{ln}"] = jnp.ones((1, hid_dim), jnp.float32)
        params[f"be_{ln}"] = jnp.zeros((1, hid_dim), jnp.float32)
    return params


if __name__ == "__main__":
    B, T, S = 2, 16, 8           # batch, target seq len, source seq len
    HID, NH, PF = 32, 4, 64      # hid_dim, n_heads, pf_dim

    key = jax.random.PRNGKey(0)
    k_trg, k_enc, k_par = jax.random.split(key, 3)

    trg = jax.random.normal(k_trg, (B, T, HID), dtype=jnp.float32)
    enc_src = jax.random.normal(k_enc, (B, S, HID), dtype=jnp.float32)

    # causal target mask [B, 1, T, T]
    trg_mask = jnp.tril(jnp.ones((T, T), jnp.int32))[None, None].repeat(B, axis=0)
    # source padding mask [B, 1, 1, S] (batch 1 has 2 padded positions)
    src_lens = jnp.array([S, S - 2])
    src_mask = (jnp.arange(S)[None, :] < src_lens[:, None]).astype(jnp.int32)
    src_mask = src_mask[:, None, None, :]

    params = init_params(k_par, HID, PF)

    # block_q=8 -> two query tiles per batch element (exercises the T tiling).
    out, attn = decoder_layer(trg, enc_src, trg_mask, src_mask, params, NH,
                              block_q=8, return_attention=True)
    jax.block_until_ready((out, attn))

    ref_out, ref_attn = decoder_layer_ref(trg, enc_src, trg_mask, src_mask,
                                          params, NH)
    # bf16 MXU inputs + approx reciprocal -> relaxed tolerances vs f32 reference.
    np.testing.assert_allclose(np.asarray(out), np.asarray(ref_out),
                               rtol=5e-2, atol=5e-2)
    np.testing.assert_allclose(np.asarray(attn), np.asarray(ref_attn),
                               rtol=5e-2, atol=5e-2)

    print("KERNEL_OK")
</pallas_src>

<mosaic_0001>
module attributes {stable_mosaic.version = 11 : i64} {
  func.func @_decoder_layer_kernel(%arg0: i32, %arg1: i32, %arg2: memref<1x8x32xf32, #tpu.memory_space<vmem>>, %arg3: memref<1x16x32xf32, #tpu.memory_space<vmem>>, %arg4: memref<1x8x32xf32, #tpu.memory_space<vmem>>, %arg5: memref<1x1x8x16xf32, #tpu.memory_space<vmem>>, %arg6: memref<1x1x1x8xf32, #tpu.memory_space<vmem>>, %arg7: memref<32x96xbf16, #tpu.memory_space<vmem>>, %arg8: memref<1x96xf32, #tpu.memory_space<vmem>>, %arg9: memref<32x32xbf16, #tpu.memory_space<vmem>>, %arg10: memref<1x32xf32, #tpu.memory_space<vmem>>, %arg11: memref<32x32xbf16, #tpu.memory_space<vmem>>, %arg12: memref<1x32xf32, #tpu.memory_space<vmem>>, %arg13: memref<32x64xbf16, #tpu.memory_space<vmem>>, %arg14: memref<1x64xf32, #tpu.memory_space<vmem>>, %arg15: memref<32x32xbf16, #tpu.memory_space<vmem>>, %arg16: memref<1x32xf32, #tpu.memory_space<vmem>>, %arg17: memref<32x64xbf16, #tpu.memory_space<vmem>>, %arg18: memref<1x64xf32, #tpu.memory_space<vmem>>, %arg19: memref<64x32xbf16, #tpu.memory_space<vmem>>, %arg20: memref<1x32xf32, #tpu.memory_space<vmem>>, %arg21: memref<3x32xf32, #tpu.memory_space<vmem>>, %arg22: memref<3x32xf32, #tpu.memory_space<vmem>>, %arg23: memref<1x8x32xf32, #tpu.memory_space<vmem>>, %arg24: memref<1x4x8x8xf32, #tpu.memory_space<vmem>>) attributes {dimension_semantics = [#tpu.dimension_semantics<parallel>, #tpu.dimension_semantics<parallel>], iteration_bounds = array<i64: 2, 2>, scalar_prefetch = 0 : i64, scratch_operands = 0 : i64, tpu.core_type = #tpu.core_type<tc>, window_params = [{transform_indices = @transform_0, window_bounds = array<i64: 1, 8, 32>}, {transform_indices = @transform_1, window_bounds = array<i64: 1, 16, 32>}, {transform_indices = @transform_2, window_bounds = array<i64: 1, 8, 32>}, {transform_indices = @transform_3, window_bounds = array<i64: 1, 1, 8, 16>}, {transform_indices = @transform_4, window_bounds = array<i64: 1, 1, 1, 8>}, {pipeline_mode = #tpu.pipeline_mode<synchronous>, transform_indices = @transform_5, window_bounds = array<i64: 32, 96>}, {pipeline_mode = #tpu.pipeline_mode<synchronous>, transform_indices = @transform_6, window_bounds = array<i64: 1, 96>}, {pipeline_mode = #tpu.pipeline_mode<synchronous>, transform_indices = @transform_7, window_bounds = array<i64: 32, 32>}, {pipeline_mode = #tpu.pipeline_mode<synchronous>, transform_indices = @transform_8, window_bounds = array<i64: 1, 32>}, {pipeline_mode = #tpu.pipeline_mode<synchronous>, transform_indices = @transform_9, window_bounds = array<i64: 32, 32>}, {pipeline_mode = #tpu.pipeline_mode<synchronous>, transform_indices = @transform_10, window_bounds = array<i64: 1, 32>}, {pipeline_mode = #tpu.pipeline_mode<synchronous>, transform_indices = @transform_11, window_bounds = array<i64: 32, 64>}, {pipeline_mode = #tpu.pipeline_mode<synchronous>, transform_indices = @transform_12, window_bounds = array<i64: 1, 64>}, {pipeline_mode = #tpu.pipeline_mode<synchronous>, transform_indices = @transform_13, window_bounds = array<i64: 32, 32>}, {pipeline_mode = #tpu.pipeline_mode<synchronous>, transform_indices = @transform_14, window_bounds = array<i64: 1, 32>}, {pipeline_mode = #tpu.pipeline_mode<synchronous>, transform_indices = @transform_15, window_bounds = array<i64: 32, 64>}, {pipeline_mode = #tpu.pipeline_mode<synchronous>, transform_indices = @transform_16, window_bounds = array<i64: 1, 64>}, {pipeline_mode = #tpu.pipeline_mode<synchronous>, transform_indices = @transform_17, window_bounds = array<i64: 64, 32>}, {pipeline_mode = #tpu.pipeline_mode<synchronous>, transform_indices = @transform_18, window_bounds = array<i64: 1, 32>}, {pipeline_mode = #tpu.pipeline_mode<synchronous>, transform_indices = @transform_19, window_bounds = array<i64: 3, 32>}, {pipeline_mode = #tpu.pipeline_mode<synchronous>, transform_indices = @transform_20, window_bounds = array<i64: 3, 32>}, {transform_indices = @transform_21, window_bounds = array<i64: 1, 8, 32>}, {transform_indices = @transform_22, window_bounds = array<i64: 1, 4, 8, 8>}]} {
    %c0 = arith.constant 0 : index
    %c0_0 = arith.constant 0 : index
    %c0_1 = arith.constant 0 : index
    %0 = vector.load %arg2[%c0, %c0_0, %c0_1] : memref<1x8x32xf32, #tpu.memory_space<vmem>>, vector<1x8x32xf32>
    %1 = vector.shape_cast %0 : vector<1x8x32xf32> to vector<8x32xf32>
    %c0_2 = arith.constant 0 : index
    %c0_3 = arith.constant 0 : index
    %c0_4 = arith.constant 0 : index
    %2 = vector.load %arg3[%c0_2, %c0_3, %c0_4] : memref<1x16x32xf32, #tpu.memory_space<vmem>>, vector<1x16x32xf32>
    %3 = vector.shape_cast %2 : vector<1x16x32xf32> to vector<16x32xf32>
    %c0_5 = arith.constant 0 : index
    %c0_6 = arith.constant 0 : index
    %c0_7 = arith.constant 0 : index
    %4 = vector.load %arg4[%c0_5, %c0_6, %c0_7] : memref<1x8x32xf32, #tpu.memory_space<vmem>>, vector<1x8x32xf32>
    %5 = vector.shape_cast %4 : vector<1x8x32xf32> to vector<8x32xf32>
    %c0_8 = arith.constant 0 : index
    %c0_9 = arith.constant 0 : index
    %c0_10 = arith.constant 0 : index
    %c0_11 = arith.constant 0 : index
    %6 = vector.load %arg5[%c0_8, %c0_9, %c0_10, %c0_11] : memref<1x1x8x16xf32, #tpu.memory_space<vmem>>, vector<1x1x8x16xf32>
    %7 = vector.shape_cast %6 : vector<1x1x8x16xf32> to vector<8x16xf32>
    %c0_12 = arith.constant 0 : index
    %c0_13 = arith.constant 0 : index
    %c0_14 = arith.constant 0 : index
    %c0_15 = arith.constant 0 : index
    %8 = vector.load %arg6[%c0_12, %c0_13, %c0_14, %c0_15] : memref<1x1x1x8xf32, #tpu.memory_space<vmem>>, vector<1x1x1x8xf32>
    %9 = vector.shape_cast %8 : vector<1x1x1x8xf32> to vector<1x8xf32>
    %10 = arith.truncf %1 : vector<8x32xf32> to vector<8x32xbf16>
    %11 = arith.truncf %3 : vector<16x32xf32> to vector<16x32xbf16>
    %c0_16 = arith.constant 0 : index
    %c0_17 = arith.constant 0 : index
    %12 = vector.load %arg7[%c0_16, %c0_17] : memref<32x96xbf16, #tpu.memory_space<vmem>>, vector<32x96xbf16>
    %13 = vector.extract_strided_slice %12 {offsets = [0, 0], sizes = [32, 32], strides = [1, 1]} : vector<32x96xbf16> to vector<32x32xbf16>
    %cst = arith.constant dense<0.000000e+00> : vector<8x32xf32>
    %14 = tpu.matmul %10, %13, %cst {dimension_numbers = #tpu.dot_dimension_numbers<[1], [0], [0], [1], [0, 0, 1, 1], [], []>} : vector<8x32xbf16>, vector<32x32xbf16>, vector<8x32xf32> -> vector<8x32xf32>
    %c0_18 = arith.constant 0 : index
    %c0_19 = arith.constant 0 : index
    %15 = vector.load %arg8[%c0_18, %c0_19] : memref<1x96xf32, #tpu.memory_space<vmem>>, vector<1x32xf32>
    %16 = vector.broadcast %15 : vector<1x32xf32> to vector<8x32xf32>
    %17 = arith.addf %14, %16 : vector<8x32xf32>
    %cst_20 = arith.constant 0.353553385 : f32
    %18 = vector.broadcast %cst_20 : f32 to vector<8x32xf32>
    %19 = arith.mulf %17, %18 : vector<8x32xf32>
    %20 = vector.extract_strided_slice %12 {offsets = [0, 32], sizes = [32, 64], strides = [1, 1]} : vector<32x96xbf16> to vector<32x64xbf16>
    %cst_21 = arith.constant dense<0.000000e+00> : vector<16x64xf32>
    %21 = tpu.matmul %11, %20, %cst_21 {dimension_numbers = #tpu.dot_dimension_numbers<[1], [0], [0], [1], [0, 0, 1, 1], [], []>} : vector<16x32xbf16>, vector<32x64xbf16>, vector<16x64xf32> -> vector<16x64xf32>
    %c0_22 = arith.constant 0 : index
    %c32 = arith.constant 32 : index
    %22 = vector.load %arg8[%c0_22, %c32] : memref<1x96xf32, #tpu.memory_space<vmem>>, vector<1x64xf32>
    %23 = vector.broadcast %22 : vector<1x64xf32> to vector<16x64xf32>
    %24 = arith.addf %21, %23 : vector<16x64xf32>
    %25 = vector.extract_strided_slice %24 {offsets = [0, 0], sizes = [16, 32], strides = [1, 1]} : vector<16x64xf32> to vector<16x32xf32>
    %26 = vector.extract_strided_slice %24 {offsets = [0, 32], sizes = [16, 32], strides = [1, 1]} : vector<16x64xf32> to vector<16x32xf32>
    %27 = vector.extract_strided_slice %19 {offsets = [0, 0], sizes = [8, 8], strides = [1, 1]} : vector<8x32xf32> to vector<8x8xf32>
    %28 = arith.truncf %27 : vector<8x8xf32> to vector<8x8xbf16>
    %29 = vector.extract_strided_slice %25 {offsets = [0, 0], sizes = [16, 8], strides = [1, 1]} : vector<16x32xf32> to vector<16x8xf32>
    %30 = arith.truncf %29 : vector<16x8xf32> to vector<16x8xbf16>
    %31 = vector.extract_strided_slice %26 {offsets = [0, 0], sizes = [16, 8], strides = [1, 1]} : vector<16x32xf32> to vector<16x8xf32>
    %32 = arith.truncf %31 : vector<16x8xf32> to vector<16x8xbf16>
    %cst_23 = arith.constant dense<0.000000e+00> : vector<8x16xf32>
    %33 = tpu.matmul %28, %30, %cst_23 {dimension_numbers = #tpu.dot_dimension_numbers<[1], [1], [0], [0], [0, 0, 1, 0], [], []>} : vector<8x8xbf16>, vector<16x8xbf16>, vector<8x16xf32> -> vector<8x16xf32>
    %34 = arith.addf %33, %7 : vector<8x16xf32>
    %cst_24 = arith.constant dense<0xFF800000> : vector<8xf32>
    %35 = vector.multi_reduction <maximumf>, %34, %cst_24 [1] : vector<8x16xf32> to vector<8xf32>
    %36 = vector.shape_cast %35 : vector<8xf32> to vector<8x1xf32>
    %37 = vector.broadcast %36 : vector<8x1xf32> to vector<8x16xf32>
    %38 = arith.subf %34, %37 : vector<8x16xf32>
    %39 = math.exp %38 : vector<8x16xf32>
    %cst_25 = arith.constant dense<0.000000e+00> : vector<8xf32>
    %40 = vector.multi_reduction <add>, %39, %cst_25 [1] : vector<8x16xf32> to vector<8xf32>
    %41 = vector.shape_cast %40 : vector<8xf32> to vector<8x1xf32>
    %42 = tpu.reciprocal %41 {approx = true} : vector<8x1xf32> -> vector<8x1xf32>
    %43 = vector.broadcast %42 : vector<8x1xf32> to vector<8x16xf32>
    %44 = arith.mulf %39, %43 : vector<8x16xf32>
    %45 = arith.truncf %44 : vector<8x16xf32> to vector<8x16xbf16>
    %cst_26 = arith.constant dense<0.000000e+00> : vector<8x8xf32>
    %46 = tpu.matmul %45, %32, %cst_26 {dimension_numbers = #tpu.dot_dimension_numbers<[1], [0], [0], [1], [0, 0, 1, 1], [], []>} : vector<8x16xbf16>, vector<16x8xbf16>, vector<8x8xf32> -> vector<8x8xf32>
    %47 = vector.extract_strided_slice %19 {offsets = [0, 8], sizes = [8, 8], strides = [1, 1]} : vector<8x32xf32> to vector<8x8xf32>
    %48 = arith.truncf %47 : vector<8x8xf32> to vector<8x8xbf16>
    %49 = vector.extract_strided_slice %25 {offsets = [0, 8], sizes = [16, 8], strides = [1, 1]} : vector<16x32xf32> to vector<16x8xf32>
    %50 = arith.truncf %49 : vector<16x8xf32> to vector<16x8xbf16>
    %51 = vector.extract_strided_slice %26 {offsets = [0, 8], sizes = [16, 8], strides = [1, 1]} : vector<16x32xf32> to vector<16x8xf32>
    %52 = arith.truncf %51 : vector<16x8xf32> to vector<16x8xbf16>
    %cst_27 = arith.constant dense<0.000000e+00> : vector<8x16xf32>
    %53 = tpu.matmul %48, %50, %cst_27 {dimension_numbers = #tpu.dot_dimension_numbers<[1], [1], [0], [0], [0, 0, 1, 0], [], []>} : vector<8x8xbf16>, vector<16x8xbf16>, vector<8x16xf32> -> vector<8x16xf32>
    %54 = arith.addf %53, %7 : vector<8x16xf32>
    %cst_28 = arith.constant dense<0xFF800000> : vector<8xf32>
    %55 = vector.multi_reduction <maximumf>, %54, %cst_28 [1] : vector<8x16xf32> to vector<8xf32>
    %56 = vector.shape_cast %55 : vector<8xf32> to vector<8x1xf32>
    %57 = vector.broadcast %56 : vector<8x1xf32> to vector<8x16xf32>
    %58 = arith.subf %54, %57 : vector<8x16xf32>
    %59 = math.exp %58 : vector<8x16xf32>
    %cst_29 = arith.constant dense<0.000000e+00> : vector<8xf32>
    %60 = vector.multi_reduction <add>, %59, %cst_29 [1] : vector<8x16xf32> to vector<8xf32>
    %61 = vector.shape_cast %60 : vector<8xf32> to vector<8x1xf32>
    %62 = tpu.reciprocal %61 {approx = true} : vector<8x1xf32> -> vector<8x1xf32>
    %63 = vector.broadcast %62 : vector<8x1xf32> to vector<8x16xf32>
    %64 = arith.mulf %59, %63 : vector<8x16xf32>
    %65 = arith.truncf %64 : vector<8x16xf32> to vector<8x16xbf16>
    %cst_30 = arith.constant dense<0.000000e+00> : vector<8x8xf32>
    %66 = tpu.matmul %65, %52, %cst_30 {dimension_numbers = #tpu.dot_dimension_numbers<[1], [0], [0], [1], [0, 0, 1, 1], [], []>} : vector<8x16xbf16>, vector<16x8xbf16>, vector<8x8xf32> -> vector<8x8xf32>
    %67 = vector.extract_strided_slice %19 {offsets = [0, 16], sizes = [8, 8], strides = [1, 1]} : vector<8x32xf32> to vector<8x8xf32>
    %68 = arith.truncf %67 : vector<8x8xf32> to vector<8x8xbf16>
    %69 = vector.extract_strided_slice %25 {offsets = [0, 16], sizes = [16, 8], strides = [1, 1]} : vector<16x32xf32> to vector<16x8xf32>
    %70 = arith.truncf %69 : vector<16x8xf32> to vector<16x8xbf16>
    %71 = vector.extract_strided_slice %26 {offsets = [0, 16], sizes = [16, 8], strides = [1, 1]} : vector<16x32xf32> to vector<16x8xf32>
    %72 = arith.truncf %71 : vector<16x8xf32> to vector<16x8xbf16>
    %cst_31 = arith.constant dense<0.000000e+00> : vector<8x16xf32>
    %73 = tpu.matmul %68, %70, %cst_31 {dimension_numbers = #tpu.dot_dimension_numbers<[1], [1], [0], [0], [0, 0, 1, 0], [], []>} : vector<8x8xbf16>, vector<16x8xbf16>, vector<8x16xf32> -> vector<8x16xf32>
    %74 = arith.addf %73, %7 : vector<8x16xf32>
    %cst_32 = arith.constant dense<0xFF800000> : vector<8xf32>
    %75 = vector.multi_reduction <maximumf>, %74, %cst_32 [1] : vector<8x16xf32> to vector<8xf32>
    %76 = vector.shape_cast %75 : vector<8xf32> to vector<8x1xf32>
    %77 = vector.broadcast %76 : vector<8x1xf32> to vector<8x16xf32>
    %78 = arith.subf %74, %77 : vector<8x16xf32>
    %79 = math.exp %78 : vector<8x16xf32>
    %cst_33 = arith.constant dense<0.000000e+00> : vector<8xf32>
    %80 = vector.multi_reduction <add>, %79, %cst_33 [1] : vector<8x16xf32> to vector<8xf32>
    %81 = vector.shape_cast %80 : vector<8xf32> to vector<8x1xf32>
    %82 = tpu.reciprocal %81 {approx = true} : vector<8x1xf32> -> vector<8x1xf32>
    %83 = vector.broadcast %82 : vector<8x1xf32> to vector<8x16xf32>
    %84 = arith.mulf %79, %83 : vector<8x16xf32>
    %85 = arith.truncf %84 : vector<8x16xf32> to vector<8x16xbf16>
    %cst_34 = arith.constant dense<0.000000e+00> : vector<8x8xf32>
    %86 = tpu.matmul %85, %72, %cst_34 {dimension_numbers = #tpu.dot_dimension_numbers<[1], [0], [0], [1], [0, 0, 1, 1], [], []>} : vector<8x16xbf16>, vector<16x8xbf16>, vector<8x8xf32> -> vector<8x8xf32>
    %87 = vector.extract_strided_slice %19 {offsets = [0, 24], sizes = [8, 8], strides = [1, 1]} : vector<8x32xf32> to vector<8x8xf32>
    %88 = arith.truncf %87 : vector<8x8xf32> to vector<8x8xbf16>
    %89 = vector.extract_strided_slice %25 {offsets = [0, 24], sizes = [16, 8], strides = [1, 1]} : vector<16x32xf32> to vector<16x8xf32>
    %90 = arith.truncf %89 : vector<16x8xf32> to vector<16x8xbf16>
    %91 = vector.extract_strided_slice %26 {offsets = [0, 24], sizes = [16, 8], strides = [1, 1]} : vector<16x32xf32> to vector<16x8xf32>
    %92 = arith.truncf %91 : vector<16x8xf32> to vector<16x8xbf16>
    %cst_35 = arith.constant dense<0.000000e+00> : vector<8x16xf32>
    %93 = tpu.matmul %88, %90, %cst_35 {dimension_numbers = #tpu.dot_dimension_numbers<[1], [1], [0], [0], [0, 0, 1, 0], [], []>} : vector<8x8xbf16>, vector<16x8xbf16>, vector<8x16xf32> -> vector<8x16xf32>
    %94 = arith.addf %93, %7 : vector<8x16xf32>
    %cst_36 = arith.constant dense<0xFF800000> : vector<8xf32>
    %95 = vector.multi_reduction <maximumf>, %94, %cst_36 [1] : vector<8x16xf32> to vector<8xf32>
    %96 = vector.shape_cast %95 : vector<8xf32> to vector<8x1xf32>
    %97 = vector.broadcast %96 : vector<8x1xf32> to vector<8x16xf32>
    %98 = arith.subf %94, %97 : vector<8x16xf32>
    %99 = math.exp %98 : vector<8x16xf32>
    %cst_37 = arith.constant dense<0.000000e+00> : vector<8xf32>
    %100 = vector.multi_reduction <add>, %99, %cst_37 [1] : vector<8x16xf32> to vector<8xf32>
    %101 = vector.shape_cast %100 : vector<8xf32> to vector<8x1xf32>
    %102 = tpu.reciprocal %101 {approx = true} : vector<8x1xf32> -> vector<8x1xf32>
    %103 = vector.broadcast %102 : vector<8x1xf32> to vector<8x16xf32>
    %104 = arith.mulf %99, %103 : vector<8x16xf32>
    %105 = arith.truncf %104 : vector<8x16xf32> to vector<8x16xbf16>
    %cst_38 = arith.constant dense<0.000000e+00> : vector<8x8xf32>
    %106 = tpu.matmul %105, %92, %cst_38 {dimension_numbers = #tpu.dot_dimension_numbers<[1], [0], [0], [1], [0, 0, 1, 1], [], []>} : vector<8x16xbf16>, vector<16x8xbf16>, vector<8x8xf32> -> vector<8x8xf32>
    %107 = tpu.concatenate %46, %66, %86, %106 in 1 : vector<8x8xf32>, vector<8x8xf32>, vector<8x8xf32>, vector<8x8xf32> -> vector<8x32xf32>
    %108 = arith.truncf %107 : vector<8x32xf32> to vector<8x32xbf16>
    %c0_39 = arith.constant 0 : index
    %c0_40 = arith.constant 0 : index
    %109 = vector.load %arg9[%c0_39, %c0_40] : memref<32x32xbf16, #tpu.memory_space<vmem>>, vector<32x32xbf16>
    %cst_41 = arith.constant dense<0.000000e+00> : vector<8x32xf32>
    %110 = tpu.matmul %108, %109, %cst_41 {dimension_numbers = #tpu.dot_dimension_numbers<[1], [0], [0], [1], [0, 0, 1, 1], [], []>} : vector<8x32xbf16>, vector<32x32xbf16>, vector<8x32xf32> -> vector<8x32xf32>
    %c0_42 = arith.constant 0 : index
    %c0_43 = arith.constant 0 : index
    %111 = vector.load %arg10[%c0_42, %c0_43] : memref<1x32xf32, #tpu.memory_space<vmem>>, vector<1x32xf32>
    %112 = vector.broadcast %111 : vector<1x32xf32> to vector<8x32xf32>
    %113 = arith.addf %110, %112 : vector<8x32xf32>
    %114 = arith.addf %1, %113 : vector<8x32xf32>
    %cst_44 = arith.constant dense<0.000000e+00> : vector<8xf32>
    %115 = vector.multi_reduction <add>, %114, %cst_44 [1] : vector<8x32xf32> to vector<8xf32>
    %116 = vector.shape_cast %115 : vector<8xf32> to vector<8x1xf32>
    %cst_45 = arith.constant 3.200000e+01 : f32
    %117 = vector.broadcast %cst_45 : f32 to vector<8x1xf32>
    %118 = arith.divf %116, %117 : vector<8x1xf32>
    %119 = vector.broadcast %118 : vector<8x1xf32> to vector<8x32xf32>
    %120 = arith.subf %114, %119 : vector<8x32xf32>
    %121 = arith.mulf %120, %120 : vector<8x32xf32>
    %cst_46 = arith.constant dense<0.000000e+00> : vector<8xf32>
    %122 = vector.multi_reduction <add>, %121, %cst_46 [1] : vector<8x32xf32> to vector<8xf32>
    %123 = vector.shape_cast %122 : vector<8xf32> to vector<8x1xf32>
    %cst_47 = arith.constant 3.200000e+01 : f32
    %124 = vector.broadcast %cst_47 : f32 to vector<8x1xf32>
    %125 = arith.divf %123, %124 : vector<8x1xf32>
    %c0_48 = arith.constant 0 : index
    %c0_49 = arith.constant 0 : index
    %126 = vector.load %arg21[%c0_48, %c0_49] : memref<3x32xf32, #tpu.memory_space<vmem>>, vector<1x32xf32>
    %c0_50 = arith.constant 0 : index
    %c0_51 = arith.constant 0 : index
    %127 = vector.load %arg22[%c0_50, %c0_51] : memref<3x32xf32, #tpu.memory_space<vmem>>, vector<1x32xf32>
    %128 = vector.broadcast %118 : vector<8x1xf32> to vector<8x32xf32>
    %129 = arith.subf %114, %128 : vector<8x32xf32>
    %cst_52 = arith.constant 9.99999974E-6 : f32
    %130 = vector.broadcast %cst_52 : f32 to vector<8x1xf32>
    %131 = arith.addf %125, %130 : vector<8x1xf32>
    %132 = math.rsqrt %131 : vector<8x1xf32>
    %133 = vector.broadcast %132 : vector<8x1xf32> to vector<8x32xf32>
    %134 = arith.mulf %129, %133 : vector<8x32xf32>
    %135 = vector.broadcast %126 : vector<1x32xf32> to vector<8x32xf32>
    %136 = arith.mulf %134, %135 : vector<8x32xf32>
    %137 = vector.broadcast %127 : vector<1x32xf32> to vector<8x32xf32>
    %138 = arith.addf %136, %137 : vector<8x32xf32>
    %139 = arith.truncf %138 : vector<8x32xf32> to vector<8x32xbf16>
    %140 = arith.truncf %5 : vector<8x32xf32> to vector<8x32xbf16>
    %c0_53 = arith.constant 0 : index
    %c0_54 = arith.constant 0 : index
    %141 = vector.load %arg11[%c0_53, %c0_54] : memref<32x32xbf16, #tpu.memory_space<vmem>>, vector<32x32xbf16>
    %cst_55 = arith.constant dense<0.000000e+00> : vector<8x32xf32>
    %142 = tpu.matmul %139, %141, %cst_55 {dimension_numbers = #tpu.dot_dimension_numbers<[1], [0], [0], [1], [0, 0, 1, 1], [], []>} : vector<8x32xbf16>, vector<32x32xbf16>, vector<8x32xf32> -> vector<8x32xf32>
    %c0_56 = arith.constant 0 : index
    %c0_57 = arith.constant 0 : index
    %143 = vector.load %arg12[%c0_56, %c0_57] : memref<1x32xf32, #tpu.memory_space<vmem>>, vector<1x32xf32>
    %144 = vector.broadcast %143 : vector<1x32xf32> to vector<8x32xf32>
    %145 = arith.addf %142, %144 : vector<8x32xf32>
    %cst_58 = arith.constant 0.353553385 : f32
    %146 = vector.broadcast %cst_58 : f32 to vector<8x32xf32>
    %147 = arith.mulf %145, %146 : vector<8x32xf32>
    %c0_59 = arith.constant 0 : index
    %c0_60 = arith.constant 0 : index
    %148 = vector.load %arg13[%c0_59, %c0_60] : memref<32x64xbf16, #tpu.memory_space<vmem>>, vector<32x64xbf16>
    %cst_61 = arith.constant dense<0.000000e+00> : vector<8x64xf32>
    %149 = tpu.matmul %140, %148, %cst_61 {dimension_numbers = #tpu.dot_dimension_numbers<[1], [0], [0], [1], [0, 0, 1, 1], [], []>} : vector<8x32xbf16>, vector<32x64xbf16>, vector<8x64xf32> -> vector<8x64xf32>
    %c0_62 = arith.constant 0 : index
    %c0_63 = arith.constant 0 : index
    %150 = vector.load %arg14[%c0_62, %c0_63] : memref<1x64xf32, #tpu.memory_space<vmem>>, vector<1x64xf32>
    %151 = vector.broadcast %150 : vector<1x64xf32> to vector<8x64xf32>
    %152 = arith.addf %149, %151 : vector<8x64xf32>
    %153 = vector.extract_strided_slice %152 {offsets = [0, 0], sizes = [8, 32], strides = [1, 1]} : vector<8x64xf32> to vector<8x32xf32>
    %154 = vector.extract_strided_slice %152 {offsets = [0, 32], sizes = [8, 32], strides = [1, 1]} : vector<8x64xf32> to vector<8x32xf32>
    %155 = vector.extract_strided_slice %147 {offsets = [0, 0], sizes = [8, 8], strides = [1, 1]} : vector<8x32xf32> to vector<8x8xf32>
    %156 = arith.truncf %155 : vector<8x8xf32> to vector<8x8xbf16>
    %157 = vector.extract_strided_slice %153 {offsets = [0, 0], sizes = [8, 8], strides = [1, 1]} : vector<8x32xf32> to vector<8x8xf32>
    %158 = arith.truncf %157 : vector<8x8xf32> to vector<8x8xbf16>
    %159 = vector.extract_strided_slice %154 {offsets = [0, 0], sizes = [8, 8], strides = [1, 1]} : vector<8x32xf32> to vector<8x8xf32>
    %160 = arith.truncf %159 : vector<8x8xf32> to vector<8x8xbf16>
    %cst_64 = arith.constant dense<0.000000e+00> : vector<8x8xf32>
    %161 = tpu.matmul %156, %158, %cst_64 {dimension_numbers = #tpu.dot_dimension_numbers<[1], [1], [0], [0], [0, 0, 1, 0], [], []>} : vector<8x8xbf16>, vector<8x8xbf16>, vector<8x8xf32> -> vector<8x8xf32>
    %162 = vector.broadcast %9 : vector<1x8xf32> to vector<8x8xf32>
    %163 = arith.addf %161, %162 : vector<8x8xf32>
    %cst_65 = arith.constant dense<0xFF800000> : vector<8xf32>
    %164 = vector.multi_reduction <maximumf>, %163, %cst_65 [1] : vector<8x8xf32> to vector<8xf32>
    %165 = vector.shape_cast %164 : vector<8xf32> to vector<8x1xf32>
    %166 = vector.broadcast %165 : vector<8x1xf32> to vector<8x8xf32>
    %167 = arith.subf %163, %166 : vector<8x8xf32>
    %168 = math.exp %167 : vector<8x8xf32>
    %cst_66 = arith.constant dense<0.000000e+00> : vector<8xf32>
    %169 = vector.multi_reduction <add>, %168, %cst_66 [1] : vector<8x8xf32> to vector<8xf32>
    %170 = vector.shape_cast %169 : vector<8xf32> to vector<8x1xf32>
    %171 = tpu.reciprocal %170 {approx = true} : vector<8x1xf32> -> vector<8x1xf32>
    %172 = vector.broadcast %171 : vector<8x1xf32> to vector<8x8xf32>
    %173 = arith.mulf %168, %172 : vector<8x8xf32>
    %c0_67 = arith.constant 0 : index
    %c0_68 = arith.constant 0 : index
    %c0_69 = arith.constant 0 : index
    %c0_70 = arith.constant 0 : index
    %174 = vector.load %arg24[%c0_67, %c0_68, %c0_69, %c0_70] : memref<1x4x8x8xf32, #tpu.memory_space<vmem>>, vector<1x1x8x8xf32>
    %175 = vector.shape_cast %174 : vector<1x1x8x8xf32> to vector<8x8xf32>
    %176 = vector.shape_cast %173 : vector<8x8xf32> to vector<1x1x8x8xf32>
    tpu.vector_store %arg24[%c0_67, %c0_68, %c0_69, %c0_70], %176 {strides = array<i32>} : memref<1x4x8x8xf32, #tpu.memory_space<vmem>>, vector<1x1x8x8xf32>,
    %177 = arith.truncf %173 : vector<8x8xf32> to vector<8x8xbf16>
    %cst_71 = arith.constant dense<0.000000e+00> : vector<8x8xf32>
    %178 = tpu.matmul %177, %160, %cst_71 {dimension_numbers = #tpu.dot_dimension_numbers<[1], [0], [0], [1], [0, 0, 1, 1], [], []>} : vector<8x8xbf16>, vector<8x8xbf16>, vector<8x8xf32> -> vector<8x8xf32>
    %179 = vector.extract_strided_slice %147 {offsets = [0, 8], sizes = [8, 8], strides = [1, 1]} : vector<8x32xf32> to vector<8x8xf32>
    %180 = arith.truncf %179 : vector<8x8xf32> to vector<8x8xbf16>
    %181 = vector.extract_strided_slice %153 {offsets = [0, 8], sizes = [8, 8], strides = [1, 1]} : vector<8x32xf32> to vector<8x8xf32>
    %182 = arith.truncf %181 : vector<8x8xf32> to vector<8x8xbf16>
    %183 = vector.extract_strided_slice %154 {offsets = [0, 8], sizes = [8, 8], strides = [1, 1]} : vector<8x32xf32> to vector<8x8xf32>
    %184 = arith.truncf %183 : vector<8x8xf32> to vector<8x8xbf16>
    %cst_72 = arith.constant dense<0.000000e+00> : vector<8x8xf32>
    %185 = tpu.matmul %180, %182, %cst_72 {dimension_numbers = #tpu.dot_dimension_numbers<[1], [1], [0], [0], [0, 0, 1, 0], [], []>} : vector<8x8xbf16>, vector<8x8xbf16>, vector<8x8xf32> -> vector<8x8xf32>
    %186 = vector.broadcast %9 : vector<1x8xf32> to vector<8x8xf32>
    %187 = arith.addf %185, %186 : vector<8x8xf32>
    %cst_73 = arith.constant dense<0xFF800000> : vector<8xf32>
    %188 = vector.multi_reduction <maximumf>, %187, %cst_73 [1] : vector<8x8xf32> to vector<8xf32>
    %189 = vector.shape_cast %188 : vector<8xf32> to vector<8x1xf32>
    %190 = vector.broadcast %189 : vector<8x1xf32> to vector<8x8xf32>
    %191 = arith.subf %187, %190 : vector<8x8xf32>
    %192 = math.exp %191 : vector<8x8xf32>
    %cst_74 = arith.constant dense<0.000000e+00> : vector<8xf32>
    %193 = vector.multi_reduction <add>, %192, %cst_74 [1] : vector<8x8xf32> to vector<8xf32>
    %194 = vector.shape_cast %193 : vector<8xf32> to vector<8x1xf32>
    %195 = tpu.reciprocal %194 {approx = true} : vector<8x1xf32> -> vector<8x1xf32>
    %196 = vector.broadcast %195 : vector<8x1xf32> to vector<8x8xf32>
    %197 = arith.mulf %192, %196 : vector<8x8xf32>
    %c0_75 = arith.constant 0 : index
    %c1 = arith.constant 1 : index
    %c0_76 = arith.constant 0 : index
    %c0_77 = arith.constant 0 : index
    %198 = vector.load %arg24[%c0_75, %c1, %c0_76, %c0_77] : memref<1x4x8x8xf32, #tpu.memory_space<vmem>>, vector<1x1x8x8xf32>
    %199 = vector.shape_cast %198 : vector<1x1x8x8xf32> to vector<8x8xf32>
    %200 = vector.shape_cast %197 : vector<8x8xf32> to vector<1x1x8x8xf32>
    tpu.vector_store %arg24[%c0_75, %c1, %c0_76, %c0_77], %200 {strides = array<i32>} : memref<1x4x8x8xf32, #tpu.memory_space<vmem>>, vector<1x1x8x8xf32>,
    %201 = arith.truncf %197 : vector<8x8xf32> to vector<8x8xbf16>
    %cst_78 = arith.constant dense<0.000000e+00> : vector<8x8xf32>
    %202 = tpu.matmul %201, %184, %cst_78 {dimension_numbers = #tpu.dot_dimension_numbers<[1], [0], [0], [1], [0, 0, 1, 1], [], []>} : vector<8x8xbf16>, vector<8x8xbf16>, vector<8x8xf32> -> vector<8x8xf32>
    %203 = vector.extract_strided_slice %147 {offsets = [0, 16], sizes = [8, 8], strides = [1, 1]} : vector<8x32xf32> to vector<8x8xf32>
    %204 = arith.truncf %203 : vector<8x8xf32> to vector<8x8xbf16>
    %205 = vector.extract_strided_slice %153 {offsets = [0, 16], sizes = [8, 8], strides = [1, 1]} : vector<8x32xf32> to vector<8x8xf32>
    %206 = arith.truncf %205 : vector<8x8xf32> to vector<8x8xbf16>
    %207 = vector.extract_strided_slice %154 {offsets = [0, 16], sizes = [8, 8], strides = [1, 1]} : vector<8x32xf32> to vector<8x8xf32>
    %208 = arith.truncf %207 : vector<8x8xf32> to vector<8x8xbf16>
    %cst_79 = arith.constant dense<0.000000e+00> : vector<8x8xf32>
    %209 = tpu.matmul %204, %206, %cst_79 {dimension_numbers = #tpu.dot_dimension_numbers<[1], [1], [0], [0], [0, 0, 1, 0], [], []>} : vector<8x8xbf16>, vector<8x8xbf16>, vector<8x8xf32> -> vector<8x8xf32>
    %210 = vector.broadcast %9 : vector<1x8xf32> to vector<8x8xf32>
    %211 = arith.addf %209, %210 : vector<8x8xf32>
    %cst_80 = arith.constant dense<0xFF800000> : vector<8xf32>
    %212 = vector.multi_reduction <maximumf>, %211, %cst_80 [1] : vector<8x8xf32> to vector<8xf32>
    %213 = vector.shape_cast %212 : vector<8xf32> to vector<8x1xf32>
    %214 = vector.broadcast %213 : vector<8x1xf32> to vector<8x8xf32>
    %215 = arith.subf %211, %214 : vector<8x8xf32>
    %216 = math.exp %215 : vector<8x8xf32>
    %cst_81 = arith.constant dense<0.000000e+00> : vector<8xf32>
    %217 = vector.multi_reduction <add>, %216, %cst_81 [1] : vector<8x8xf32> to vector<8xf32>
    %218 = vector.shape_cast %217 : vector<8xf32> to vector<8x1xf32>
    %219 = tpu.reciprocal %218 {approx = true} : vector<8x1xf32> -> vector<8x1xf32>
    %220 = vector.broadcast %219 : vector<8x1xf32> to vector<8x8xf32>
    %221 = arith.mulf %216, %220 : vector<8x8xf32>
    %c0_82 = arith.constant 0 : index
    %c2 = arith.constant 2 : index
    %c0_83 = arith.constant 0 : index
    %c0_84 = arith.constant 0 : index
    %222 = vector.load %arg24[%c0_82, %c2, %c0_83, %c0_84] : memref<1x4x8x8xf32, #tpu.memory_space<vmem>>, vector<1x1x8x8xf32>
    %223 = vector.shape_cast %222 : vector<1x1x8x8xf32> to vector<8x8xf32>
    %224 = vector.shape_cast %221 : vector<8x8xf32> to vector<1x1x8x8xf32>
    tpu.vector_store %arg24[%c0_82, %c2, %c0_83, %c0_84], %224 {strides = array<i32>} : memref<1x4x8x8xf32, #tpu.memory_space<vmem>>, vector<1x1x8x8xf32>,
    %225 = arith.truncf %221 : vector<8x8xf32> to vector<8x8xbf16>
    %cst_85 = arith.constant dense<0.000000e+00> : vector<8x8xf32>
    %226 = tpu.matmul %225, %208, %cst_85 {dimension_numbers = #tpu.dot_dimension_numbers<[1], [0], [0], [1], [0, 0, 1, 1], [], []>} : vector<8x8xbf16>, vector<8x8xbf16>, vector<8x8xf32> -> vector<8x8xf32>
    %227 = vector.extract_strided_slice %147 {offsets = [0, 24], sizes = [8, 8], strides = [1, 1]} : vector<8x32xf32> to vector<8x8xf32>
    %228 = arith.truncf %227 : vector<8x8xf32> to vector<8x8xbf16>
    %229 = vector.extract_strided_slice %153 {offsets = [0, 24], sizes = [8, 8], strides = [1, 1]} : vector<8x32xf32> to vector<8x8xf32>
    %230 = arith.truncf %229 : vector<8x8xf32> to vector<8x8xbf16>
    %231 = vector.extract_strided_slice %154 {offsets = [0, 24], sizes = [8, 8], strides = [1, 1]} : vector<8x32xf32> to vector<8x8xf32>
    %232 = arith.truncf %231 : vector<8x8xf32> to vector<8x8xbf16>
    %cst_86 = arith.constant dense<0.000000e+00> : vector<8x8xf32>
    %233 = tpu.matmul %228, %230, %cst_86 {dimension_numbers = #tpu.dot_dimension_numbers<[1], [1], [0], [0], [0, 0, 1, 0], [], []>} : vector<8x8xbf16>, vector<8x8xbf16>, vector<8x8xf32> -> vector<8x8xf32>
    %234 = vector.broadcast %9 : vector<1x8xf32> to vector<8x8xf32>
    %235 = arith.addf %233, %234 : vector<8x8xf32>
    %cst_87 = arith.constant dense<0xFF800000> : vector<8xf32>
    %236 = vector.multi_reduction <maximumf>, %235, %cst_87 [1] : vector<8x8xf32> to vector<8xf32>
    %237 = vector.shape_cast %236 : vector<8xf32> to vector<8x1xf32>
    %238 = vector.broadcast %237 : vector<8x1xf32> to vector<8x8xf32>
    %239 = arith.subf %235, %238 : vector<8x8xf32>
    %240 = math.exp %239 : vector<8x8xf32>
    %cst_88 = arith.constant dense<0.000000e+00> : vector<8xf32>
    %241 = vector.multi_reduction <add>, %240, %cst_88 [1] : vector<8x8xf32> to vector<8xf32>
    %242 = vector.shape_cast %241 : vector<8xf32> to vector<8x1xf32>
    %243 = tpu.reciprocal %242 {approx = true} : vector<8x1xf32> -> vector<8x1xf32>
    %244 = vector.broadcast %243 : vector<8x1xf32> to vector<8x8xf32>
    %245 = arith.mulf %240, %244 : vector<8x8xf32>
    %c0_89 = arith.constant 0 : index
    %c3 = arith.constant 3 : index
    %c0_90 = arith.constant 0 : index
    %c0_91 = arith.constant 0 : index
    %246 = vector.load %arg24[%c0_89, %c3, %c0_90, %c0_91] : memref<1x4x8x8xf32, #tpu.memory_space<vmem>>, vector<1x1x8x8xf32>
    %247 = vector.shape_cast %246 : vector<1x1x8x8xf32> to vector<8x8xf32>
    %248 = vector.shape_cast %245 : vector<8x8xf32> to vector<1x1x8x8xf32>
    tpu.vector_store %arg24[%c0_89, %c3, %c0_90, %c0_91], %248 {strides = array<i32>} : memref<1x4x8x8xf32, #tpu.memory_space<vmem>>, vector<1x1x8x8xf32>,
    %249 = arith.truncf %245 : vector<8x8xf32> to vector<8x8xbf16>
    %cst_92 = arith.constant dense<0.000000e+00> : vector<8x8xf32>
    %250 = tpu.matmul %249, %232, %cst_92 {dimension_numbers = #tpu.dot_dimension_numbers<[1], [0], [0], [1], [0, 0, 1, 1], [], []>} : vector<8x8xbf16>, vector<8x8xbf16>, vector<8x8xf32> -> vector<8x8xf32>
    %251 = tpu.concatenate %178, %202, %226, %250 in 1 : vector<8x8xf32>, vector<8x8xf32>, vector<8x8xf32>, vector<8x8xf32> -> vector<8x32xf32>
    %252 = arith.truncf %251 : vector<8x32xf32> to vector<8x32xbf16>
    %c0_93 = arith.constant 0 : index
    %c0_94 = arith.constant 0 : index
    %253 = vector.load %arg15[%c0_93, %c0_94] : memref<32x32xbf16, #tpu.memory_space<vmem>>, vector<32x32xbf16>
    %cst_95 = arith.constant dense<0.000000e+00> : vector<8x32xf32>
    %254 = tpu.matmul %252, %253, %cst_95 {dimension_numbers = #tpu.dot_dimension_numbers<[1], [0], [0], [1], [0, 0, 1, 1], [], []>} : vector<8x32xbf16>, vector<32x32xbf16>, vector<8x32xf32> -> vector<8x32xf32>
    %c0_96 = arith.constant 0 : index
    %c0_97 = arith.constant 0 : index
    %255 = vector.load %arg16[%c0_96, %c0_97] : memref<1x32xf32, #tpu.memory_space<vmem>>, vector<1x32xf32>
    %256 = vector.broadcast %255 : vector<1x32xf32> to vector<8x32xf32>
    %257 = arith.addf %254, %256 : vector<8x32xf32>
    %258 = arith.addf %138, %257 : vector<8x32xf32>
    %cst_98 = arith.constant dense<0.000000e+00> : vector<8xf32>
    %259 = vector.multi_reduction <add>, %258, %cst_98 [1] : vector<8x32xf32> to vector<8xf32>
    %260 = vector.shape_cast %259 : vector<8xf32> to vector<8x1xf32>
    %cst_99 = arith.constant 3.200000e+01 : f32
    %261 = vector.broadcast %cst_99 : f32 to vector<8x1xf32>
    %262 = arith.divf %260, %261 : vector<8x1xf32>
    %263 = vector.broadcast %262 : vector<8x1xf32> to vector<8x32xf32>
    %264 = arith.subf %258, %263 : vector<8x32xf32>
    %265 = arith.mulf %264, %264 : vector<8x32xf32>
    %cst_100 = arith.constant dense<0.000000e+00> : vector<8xf32>
    %266 = vector.multi_reduction <add>, %265, %cst_100 [1] : vector<8x32xf32> to vector<8xf32>
    %267 = vector.shape_cast %266 : vector<8xf32> to vector<8x1xf32>
    %cst_101 = arith.constant 3.200000e+01 : f32
    %268 = vector.broadcast %cst_101 : f32 to vector<8x1xf32>
    %269 = arith.divf %267, %268 : vector<8x1xf32>
    %c1_102 = arith.constant 1 : index
    %c0_103 = arith.constant 0 : index
    %270 = vector.load %arg21[%c1_102, %c0_103] : memref<3x32xf32, #tpu.memory_space<vmem>>, vector<1x32xf32>
    %c1_104 = arith.constant 1 : index
    %c0_105 = arith.constant 0 : index
    %271 = vector.load %arg22[%c1_104, %c0_105] : memref<3x32xf32, #tpu.memory_space<vmem>>, vector<1x32xf32>
    %272 = vector.broadcast %262 : vector<8x1xf32> to vector<8x32xf32>
    %273 = arith.subf %258, %272 : vector<8x32xf32>
    %cst_106 = arith.constant 9.99999974E-6 : f32
    %274 = vector.broadcast %cst_106 : f32 to vector<8x1xf32>
    %275 = arith.addf %269, %274 : vector<8x1xf32>
    %276 = math.rsqrt %275 : vector<8x1xf32>
    %277 = vector.broadcast %276 : vector<8x1xf32> to vector<8x32xf32>
    %278 = arith.mulf %273, %277 : vector<8x32xf32>
    %279 = vector.broadcast %270 : vector<1x32xf32> to vector<8x32xf32>
    %280 = arith.mulf %278, %279 : vector<8x32xf32>
    %281 = vector.broadcast %271 : vector<1x32xf32> to vector<8x32xf32>
    %282 = arith.addf %280, %281 : vector<8x32xf32>
    %283 = arith.truncf %282 : vector<8x32xf32> to vector<8x32xbf16>
    %c0_107 = arith.constant 0 : index
    %c0_108 = arith.constant 0 : index
    %284 = vector.load %arg17[%c0_107, %c0_108] : memref<32x64xbf16, #tpu.memory_space<vmem>>, vector<32x64xbf16>
    %cst_109 = arith.constant dense<0.000000e+00> : vector<8x64xf32>
    %285 = tpu.matmul %283, %284, %cst_109 {dimension_numbers = #tpu.dot_dimension_numbers<[1], [0], [0], [1], [0, 0, 1, 1], [], []>} : vector<8x32xbf16>, vector<32x64xbf16>, vector<8x64xf32> -> vector<8x64xf32>
    %c0_110 = arith.constant 0 : index
    %c0_111 = arith.constant 0 : index
    %286 = vector.load %arg18[%c0_110, %c0_111] : memref<1x64xf32, #tpu.memory_space<vmem>>, vector<1x64xf32>
    %287 = vector.broadcast %286 : vector<1x64xf32> to vector<8x64xf32>
    %288 = arith.addf %285, %287 : vector<8x64xf32>
    %cst_112 = arith.constant 0.000000e+00 : f32
    %289 = vector.broadcast %cst_112 : f32 to vector<8x64xf32>
    %290 = arith.maximumf %288, %289 : vector<8x64xf32>
    %291 = arith.truncf %290 : vector<8x64xf32> to vector<8x64xbf16>
    %c0_113 = arith.constant 0 : index
    %c0_114 = arith.constant 0 : index
    %292 = vector.load %arg19[%c0_113, %c0_114] : memref<64x32xbf16, #tpu.memory_space<vmem>>, vector<64x32xbf16>
    %cst_115 = arith.constant dense<0.000000e+00> : vector<8x32xf32>
    %293 = tpu.matmul %291, %292, %cst_115 {dimension_numbers = #tpu.dot_dimension_numbers<[1], [0], [0], [1], [0, 0, 1, 1], [], []>} : vector<8x64xbf16>, vector<64x32xbf16>, vector<8x32xf32> -> vector<8x32xf32>
    %c0_116 = arith.constant 0 : index
    %c0_117 = arith.constant 0 : index
    %294 = vector.load %arg20[%c0_116, %c0_117] : memref<1x32xf32, #tpu.memory_space<vmem>>, vector<1x32xf32>
    %295 = vector.broadcast %294 : vector<1x32xf32> to vector<8x32xf32>
    %296 = arith.addf %293, %295 : vector<8x32xf32>
    %297 = arith.addf %282, %296 : vector<8x32xf32>
    %cst_118 = arith.constant dense<0.000000e+00> : vector<8xf32>
    %298 = vector.multi_reduction <add>, %297, %cst_118 [1] : vector<8x32xf32> to vector<8xf32>
    %299 = vector.shape_cast %298 : vector<8xf32> to vector<8x1xf32>
    %cst_119 = arith.constant 3.200000e+01 : f32
    %300 = vector.broadcast %cst_119 : f32 to vector<8x1xf32>
    %301 = arith.divf %299, %300 : vector<8x1xf32>
    %302 = vector.broadcast %301 : vector<8x1xf32> to vector<8x32xf32>
    %303 = arith.subf %297, %302 : vector<8x32xf32>
    %304 = arith.mulf %303, %303 : vector<8x32xf32>
    %cst_120 = arith.constant dense<0.000000e+00> : vector<8xf32>
    %305 = vector.multi_reduction <add>, %304, %cst_120 [1] : vector<8x32xf32> to vector<8xf32>
    %306 = vector.shape_cast %305 : vector<8xf32> to vector<8x1xf32>
    %cst_121 = arith.constant 3.200000e+01 : f32
    %307 = vector.broadcast %cst_121 : f32 to vector<8x1xf32>
    %308 = arith.divf %306, %307 : vector<8x1xf32>
    %c2_122 = arith.constant 2 : index
    %c0_123 = arith.constant 0 : index
    %309 = vector.load %arg21[%c2_122, %c0_123] : memref<3x32xf32, #tpu.memory_space<vmem>>, vector<1x32xf32>
    %c2_124 = arith.constant 2 : index
    %c0_125 = arith.constant 0 : index
    %310 = vector.load %arg22[%c2_124, %c0_125] : memref<3x32xf32, #tpu.memory_space<vmem>>, vector<1x32xf32>
    %311 = vector.broadcast %301 : vector<8x1xf32> to vector<8x32xf32>
    %312 = arith.subf %297, %311 : vector<8x32xf32>
    %cst_126 = arith.constant 9.99999974E-6 : f32
    %313 = vector.broadcast %cst_126 : f32 to vector<8x1xf32>
    %314 = arith.addf %308, %313 : vector<8x1xf32>
    %315 = math.rsqrt %314 : vector<8x1xf32>
    %316 = vector.broadcast %315 : vector<8x1xf32> to vector<8x32xf32>
    %317 = arith.mulf %312, %316 : vector<8x32xf32>
    %318 = vector.broadcast %309 : vector<1x32xf32> to vector<8x32xf32>
    %319 = arith.mulf %317, %318 : vector<8x32xf32>
    %320 = vector.broadcast %310 : vector<1x32xf32> to vector<8x32xf32>
    %321 = arith.addf %319, %320 : vector<8x32xf32>
    %c0_127 = arith.constant 0 : index
    %c0_128 = arith.constant 0 : index
    %c0_129 = arith.constant 0 : index
    %322 = vector.load %arg23[%c0_127, %c0_128, %c0_129] : memref<1x8x32xf32, #tpu.memory_space<vmem>>, vector<1x8x32xf32>
    %323 = vector.shape_cast %322 : vector<1x8x32xf32> to vector<8x32xf32>
    %324 = vector.shape_cast %321 : vector<8x32xf32> to vector<1x8x32xf32>
    tpu.vector_store %arg23[%c0_127, %c0_128, %c0_129], %324 {strides = array<i32>} : memref<1x8x32xf32, #tpu.memory_space<vmem>>, vector<1x8x32xf32>,
    return
  }
  func.func @transform_0(%arg0: i32, %arg1: i32) -> (i32, i32, i32) {
    %c0_i32 = arith.constant 0 : i32
    %c0_i32_0 = arith.constant 0 : i32
    return %arg0, %arg1, %c0_i32 : i32, i32, i32
  }
  func.func @transform_1(%arg0: i32, %arg1: i32) -> (i32, i32, i32) {
    %c0_i32 = arith.constant 0 : i32
    %c0_i32_0 = arith.constant 0 : i32
    %c0_i32_1 = arith.constant 0 : i32
    return %arg0, %c0_i32, %c0_i32_0 : i32, i32, i32
  }
  func.func @transform_2(%arg0: i32, %arg1: i32) -> (i32, i32, i32) {
    %c0_i32 = arith.constant 0 : i32
    %c0_i32_0 = arith.constant 0 : i32
    %c0_i32_1 = arith.constant 0 : i32
    return %arg0, %c0_i32, %c0_i32_0 : i32, i32, i32
  }
  func.func @transform_3(%arg0: i32, %arg1: i32) -> (i32, i32, i32, i32) {
    %c0_i32 = arith.constant 0 : i32
    %c0_i32_0 = arith.constant 0 : i32
    %c0_i32_1 = arith.constant 0 : i32
    return %arg0, %c0_i32, %arg1, %c0_i32_0 : i32, i32, i32, i32
  }
  func.func @transform_4(%arg0: i32, %arg1: i32) -> (i32, i32, i32, i32) {
    %c0_i32 = arith.constant 0 : i32
    %c0_i32_0 = arith.constant 0 : i32
    %c0_i32_1 = arith.constant 0 : i32
    %c0_i32_2 = arith.constant 0 : i32
    return %arg0, %c0_i32, %c0_i32_0, %c0_i32_1 : i32, i32, i32, i32
  }
  func.func @transform_5(%arg0: i32, %arg1: i32) -> (i32, i32) {
    %c0_i32 = arith.constant 0 : i32
    %c0_i32_0 = arith.constant 0 : i32
    %c0_i32_1 = arith.constant 0 : i32
    return %c0_i32, %c0_i32_0 : i32, i32
  }
  func.func @transform_6(%arg0: i32, %arg1: i32) -> (i32, i32) {
    %c0_i32 = arith.constant 0 : i32
    %c0_i32_0 = arith.constant 0 : i32
    %c0_i32_1 = arith.constant 0 : i32
    return %c0_i32, %c0_i32_0 : i32, i32
  }
  func.func @transform_7(%arg0: i32, %arg1: i32) -> (i32, i32) {
    %c0_i32 = arith.constant 0 : i32
    %c0_i32_0 = arith.constant 0 : i32
    %c0_i32_1 = arith.constant 0 : i32
    return %c0_i32, %c0_i32_0 : i32, i32
  }
  func.func @transform_8(%arg0: i32, %arg1: i32) -> (i32, i32) {
    %c0_i32 = arith.constant 0 : i32
    %c0_i32_0 = arith.constant 0 : i32
    %c0_i32_1 = arith.constant 0 : i32
    return %c0_i32, %c0_i32_0 : i32, i32
  }
  func.func @transform_9(%arg0: i32, %arg1: i32) -> (i32, i32) {
    %c0_i32 = arith.constant 0 : i32
    %c0_i32_0 = arith.constant 0 : i32
    %c0_i32_1 = arith.constant 0 : i32
    return %c0_i32, %c0_i32_0 : i32, i32
  }
  func.func @transform_10(%arg0: i32, %arg1: i32) -> (i32, i32) {
    %c0_i32 = arith.constant 0 : i32
    %c0_i32_0 = arith.constant 0 : i32
    %c0_i32_1 = arith.constant 0 : i32
    return %c0_i32, %c0_i32_0 : i32, i32
  }
  func.func @transform_11(%arg0: i32, %arg1: i32) -> (i32, i32) {
    %c0_i32 = arith.constant 0 : i32
    %c0_i32_0 = arith.constant 0 : i32
    %c0_i32_1 = arith.constant 0 : i32
    return %c0_i32, %c0_i32_0 : i32, i32
  }
  func.func @transform_12(%arg0: i32, %arg1: i32) -> (i32, i32) {
    %c0_i32 = arith.constant 0 : i32
    %c0_i32_0 = arith.constant 0 : i32
    %c0_i32_1 = arith.constant 0 : i32
    return %c0_i32, %c0_i32_0 : i32, i32
  }
  func.func @transform_13(%arg0: i32, %arg1: i32) -> (i32, i32) {
    %c0_i32 = arith.constant 0 : i32
    %c0_i32_0 = arith.constant 0 : i32
    %c0_i32_1 = arith.constant 0 : i32
    return %c0_i32, %c0_i32_0 : i32, i32
  }
  func.func @transform_14(%arg0: i32, %arg1: i32) -> (i32, i32) {
    %c0_i32 = arith.constant 0 : i32
    %c0_i32_0 = arith.constant 0 : i32
    %c0_i32_1 = arith.constant 0 : i32
    return %c0_i32, %c0_i32_0 : i32, i32
  }
  func.func @transform_15(%arg0: i32, %arg1: i32) -> (i32, i32) {
    %c0_i32 = arith.constant 0 : i32
    %c0_i32_0 = arith.constant 0 : i32
    %c0_i32_1 = arith.constant 0 : i32
    return %c0_i32, %c0_i32_0 : i32, i32
  }
  func.func @transform_16(%arg0: i32, %arg1: i32) -> (i32, i32) {
    %c0_i32 = arith.constant 0 : i32
    %c0_i32_0 = arith.constant 0 : i32
    %c0_i32_1 = arith.constant 0 : i32
    return %c0_i32, %c0_i32_0 : i32, i32
  }
  func.func @transform_17(%arg0: i32, %arg1: i32) -> (i32, i32) {
    %c0_i32 = arith.constant 0 : i32
    %c0_i32_0 = arith.constant 0 : i32
    %c0_i32_1 = arith.constant 0 : i32
    return %c0_i32, %c0_i32_0 : i32, i32
  }
  func.func @transform_18(%arg0: i32, %arg1: i32) -> (i32, i32) {
    %c0_i32 = arith.constant 0 : i32
    %c0_i32_0 = arith.constant 0 : i32
    %c0_i32_1 = arith.constant 0 : i32
    return %c0_i32, %c0_i32_0 : i32, i32
  }
  func.func @transform_19(%arg0: i32, %arg1: i32) -> (i32, i32) {
    %c0_i32 = arith.constant 0 : i32
    %c0_i32_0 = arith.constant 0 : i32
    %c0_i32_1 = arith.constant 0 : i32
    return %c0_i32, %c0_i32_0 : i32, i32
  }
  func.func @transform_20(%arg0: i32, %arg1: i32) -> (i32, i32) {
    %c0_i32 = arith.constant 0 : i32
    %c0_i32_0 = arith.constant 0 : i32
    %c0_i32_1 = arith.constant 0 : i32
    return %c0_i32, %c0_i32_0 : i32, i32
  }
  func.func @transform_21(%arg0: i32, %arg1: i32) -> (i32, i32, i32) {
    %c0_i32 = arith.constant 0 : i32
    %c0_i32_0 = arith.constant 0 : i32
    return %arg0, %arg1, %c0_i32 : i32, i32, i32
  }
  func.func @transform_22(%arg0: i32, %arg1: i32) -> (i32, i32, i32, i32) {
    %c0_i32 = arith.constant 0 : i32
    %c0_i32_0 = arith.constant 0 : i32
    %c0_i32_1 = arith.constant 0 : i32
    return %arg0, %c0_i32, %arg1, %c0_i32_0 : i32, i32, i32, i32
  }
}

</mosaic_0001>

<llo_original>
// kernel: tpu_custom_call.1
$region0: #{tpu_custom_call.1}
  #allocation0 [shape = 'u32[]', space=smem, size = 0x4, offset = 0x4, fixed_abs, tag = 'smem constant byte address 0x4 - core index']
  #allocation1 [shape = 'u32[144,128]{1,0:T(1,128)}', space=vmem, size = 0x12000, scoped, tag = 'internal scratch']
  %s0 = inlined_call_operand.vmem [shape: f32[2,16,32], index: 0, kind: input, shape index: {}]
  %s1 = inlined_call_operand.hbm [shape: f32[2,16,32], index: 1, kind: input, shape index: {}]
  %s2 = inlined_call_operand.vmem [shape: f32[2,8,32], index: 2, kind: input, shape index: {}]
  %s3 = inlined_call_operand.hbm [shape: f32[2,1,16,16], index: 3, kind: input, shape index: {}]
  %s4 = inlined_call_operand.hbm [shape: f32[2,1,1,8], index: 4, kind: input, shape index: {}]
  %s5 = inlined_call_operand.hbm [shape: bf16[32,96], index: 5, kind: input, shape index: {}]
  %s6 = inlined_call_operand.hbm [shape: f32[1,96], index: 6, kind: input, shape index: {}]
  %s7 = inlined_call_operand.hbm [shape: bf16[32,32], index: 7, kind: input, shape index: {}]
  %s8 = inlined_call_operand.hbm [shape: f32[1,32], index: 8, kind: input, shape index: {}]
  %s9 = inlined_call_operand.vmem [shape: bf16[32,32], index: 9, kind: input, shape index: {}]
  %s10 = inlined_call_operand.hbm [shape: f32[1,32], index: 10, kind: input, shape index: {}]
  %s11 = inlined_call_operand.hbm [shape: bf16[32,64], index: 11, kind: input, shape index: {}]
  %s12 = inlined_call_operand.hbm [shape: f32[1,64], index: 12, kind: input, shape index: {}]
  %s13 = inlined_call_operand.vmem [shape: bf16[32,32], index: 13, kind: input, shape index: {}]
  %s14 = inlined_call_operand.hbm [shape: f32[1,32], index: 14, kind: input, shape index: {}]
  %s15 = inlined_call_operand.hbm [shape: bf16[32,64], index: 15, kind: input, shape index: {}]
  %s16 = inlined_call_operand.vmem [shape: f32[1,64], index: 16, kind: input, shape index: {}]
  %s17 = inlined_call_operand.vmem [shape: bf16[64,32], index: 17, kind: input, shape index: {}]
  %s18 = inlined_call_operand.vmem [shape: f32[1,32], index: 18, kind: input, shape index: {}]
  %s19 = inlined_call_operand.vmem [shape: f32[3,32], index: 19, kind: input, shape index: {}]
  %s20 = inlined_call_operand.vmem [shape: f32[3,32], index: 20, kind: input, shape index: {}]
  %s21 = inlined_call_operand.hbm [shape: f32[2,16,32], index: 21, kind: output, shape index: {0}]
  %s22 = inlined_call_operand.vmem [shape: f32[2,4,16,8], index: 22, kind: output, shape index: {1}]
  %23 = xla_tuple %s21, %s22
  %s24 = sld [smem:[#allocation0]]
  $region207: #{tpu_custom_call.1} parent=0
    _
  %s26 = ssub.s32 1, %s24
  %s27 = scalar_select 0, %s26, %s24
  $region1: #{tpu_custom_call.1} parent=0
    #allocation2 [shape = 'u8[16384]{0}', space=vmem, size = 0x4000, scoped, tag = 'input window, operand 1']
    #allocation3 [shape = 's32[2]{0}', space=sflag, size = 0x8, scoped, tag = 'scoped memory for tpu_custom_call.1']
    #allocation4 [shape = 's32[2]{0}', space=sflag, size = 0x8, scoped, tag = 'scoped memory for tpu_custom_call.1']
    #allocation5 [shape = 'u8[8192]{0}', space=vmem, size = 0x2000, scoped, tag = 'input window, operand 3']
    #allocation6 [shape = 's32[2]{0}', space=sflag, size = 0x8, scoped, tag = 'scoped memory for tpu_custom_call.1']
    #allocation7 [shape = 'u8[1024]{0}', space=vmem, size = 0x400, scoped, tag = 'input window, operand 4']
    #allocation8 [shape = 'u8[8192]{0}', space=vmem, size = 0x2000, scoped, tag = 'input window, operand 5, single buffered']
    #allocation9 [shape = 's32[1]{0}', space=sflag, size = 0x4, scoped, tag = 'scoped memory for tpu_custom_call.1']
    #allocation10 [shape = 'u8[512]{0}', space=vmem, size = 0x400, scoped, tag = 'input window, operand 6, single buffered']
    #allocation11 [shape = 'u8[8192]{0}', space=vmem, size = 0x2000, scoped, tag = 'input window, operand 7, single buffered']
    #allocation12 [shape = 's32[1]{0}', space=sflag, size = 0x4, scoped, tag = 'scoped memory for tpu_custom_call.1']
    #allocation13 [shape = 'u8[512]{0}', space=vmem, size = 0x400, scoped, tag = 'input window, operand 8, single buffered']
    #allocation14 [shape = 'u8[512]{0}', space=vmem, size = 0x400, scoped, tag = 'input window, operand 10, single buffered']
    #allocation15 [shape = 's32[1]{0}', space=sflag, size = 0x4, scoped, tag = 'scoped memory for tpu_custom_call.1']
    #allocation16 [shape = 'u8[8192]{0}', space=vmem, size = 0x2000, scoped, tag = 'input window, operand 11, single buffered']
    #allocation17 [shape = 'u8[512]{0}', space=vmem, size = 0x400, scoped, tag = 'input window, operand 12, single buffered']
    #allocation18 [shape = 's32[1]{0}', space=sflag, size = 0x4, scoped, tag = 'scoped memory for tpu_custom_call.1']
    #allocation19 [shape = 'u8[512]{0}', space=vmem, size = 0x400, scoped, tag = 'input window, operand 14, single buffered']
    #allocation20 [shape = 'u8[8192]{0}', space=vmem, size = 0x2000, scoped, tag = 'input window, operand 15, single buffered']
    #allocation21 [shape = 's32[1]{0}', space=sflag, size = 0x4, scoped, tag = 'scoped memory for tpu_custom_call.1']
    #allocation22 [shape = 'u8[8192]{0}', space=vmem, size = 0x2000, scoped, tag = 'output window, operand 0']
    #allocation23 [shape = 'u8[32768]{0}', space=vmem, size = 0x8000, scoped, tag = 'output window, operand 1']
    %28 = vsyncpa [#allocation3], 0
    %s29 = scalar_lea.sflag [#allocation3], 1
    %30 = vsyncpa %s29, 0
    %31 = vsyncpa [#allocation6], 0
    %s32 = scalar_lea.sflag [#allocation6], 1
    %33 = vsyncpa %s32, 0
    %34 = vsyncpa [#allocation9], 0
    %35 = vsyncpa [#allocation12], 0
    %36 = vsyncpa [#allocation15], 0
    %37 = vsyncpa [#allocation18], 0
    %38 = vsyncpa [#allocation21], 0
    %39 = vsyncpa [#allocation4], 0
    %s40 = scalar_lea.sflag [#allocation4], 1
    %41 = vsyncpa %s40, 0
    loop: start=0, step=1, limit=6
    $region2: #{tpu_custom_call.1} parent=1 // loop_pre_header
      _
    $region3: #{tpu_custom_call.1} parent=1 // loop_header
      %s43 = sphi 0, %s47
      %p44 = scmp.ge.s32.totalorder %s43, 6
      %s50 = sphi 0, %s62
      %s51 = sphi 0, %s58
      %s52 = sphi 0, %s50
      %s53 = sphi 0, %s51
      %s54 = sphi 0, %s52
      %s55 = sphi 0, %s53
      %s67 = sphi 0, %s69
      %s70 = sphi 0, %s67
      %s71 = sphi 0, %s70
      %s87 = sphi 0, %s71
      %s93 = sphi 0, %s95
      %s96 = sphi 0, %s93
      %s97 = sphi 0, %s96
      %s113 = sphi 0, %s97
      %s119 = sphi 0, %s121
      %s122 = sphi 0, %s119
      %s123 = sphi 0, %s122
      %s139 = sphi 0, %s123
      %s147 = sphi 0, %s149
      %s150 = sphi 0, %s147
      %s151 = sphi 0, %s150
      %s167 = sphi 0, %s151
      %s173 = sphi 0, %s175
      %s176 = sphi 0, %s173
      %s177 = sphi 0, %s176
      %s193 = sphi 0, %s177
      %s197 = sphi 0, %s197
      %s199 = sphi 0, %s197
      %s200 = sphi 0, %s199
      %s214 = sphi 0, %s200
      %s218 = sphi 0, %s218
      %s220 = sphi 0, %s218
      %s221 = sphi 0, %s220
      %s235 = sphi 0, %s221
      %s239 = sphi 0, %s239
      %s241 = sphi 0, %s239
      %s242 = sphi 0, %s241
      %s256 = sphi 0, %s242
      %s260 = sphi 0, %s260
      %s262 = sphi 0, %s260
      %s263 = sphi 0, %s262
      %s277 = sphi 0, %s263
      %s281 = sphi 0, %s281
      %s283 = sphi 0, %s281
      %s284 = sphi 0, %s283
      %s298 = sphi 0, %s284
      %s302 = sphi 0, %s302
      %s304 = sphi 0, %s302
      %s305 = sphi 0, %s304
      %s319 = sphi 0, %s305
      %s323 = sphi 0, %s323
      %s325 = sphi 0, %s323
      %s326 = sphi 0, %s325
      %s340 = sphi 0, %s326
      %s344 = sphi 0, %s344
      %s346 = sphi 0, %s344
      %s347 = sphi 0, %s346
      %s361 = sphi 0, %s347
      %s365 = sphi 0, %s365
      %s367 = sphi 0, %s365
      %s368 = sphi 0, %s367
      %s382 = sphi 0, %s368
      %s386 = sphi 0, %s386
      %s388 = sphi 0, %s386
      %s389 = sphi 0, %s388
      %s403 = sphi 0, %s389
      %s407 = sphi 0, %s407
      %s409 = sphi 0, %s407
      %s410 = sphi 0, %s409
      %s424 = sphi 0, %s410
      %s428 = sphi 0, %s428
      %s430 = sphi 0, %s428
      %s431 = sphi 0, %s430
      %s445 = sphi 0, %s431
      %s449 = sphi 0, %s449
      %s451 = sphi 0, %s449
      %s452 = sphi 0, %s451
      %s466 = sphi 0, %s452
      %s470 = sphi 0, %s470
      %s472 = sphi 0, %s470
      %s473 = sphi 0, %s472
      %s487 = sphi 0, %s473
      %s491 = sphi 0, %s491
      %s493 = sphi 0, %s491
      %s494 = sphi 0, %s493
      %s508 = sphi 0, %s494
      %s512 = sphi 0, %s512
      %s514 = sphi 0, %s512
      %s515 = sphi 0, %s514
      %s529 = sphi 0, %s515
      %s537 = sphi 0, %s539
      %s540 = sphi 0, %s537
      %s541 = sphi 0, %s540
      %s557 = sphi 0, %s541
      %s565 = sphi 0, %s567
      %s568 = sphi 0, %s565
      %s569 = sphi 0, %s568
      %s585 = sphi 0, %s569
    $region4: #{tpu_custom_call.1} parent=1 // loop_header_branch
      %46 = sbr.rel (%p44) target = $region8
    $region5: #{tpu_custom_call.1} parent=1 // loop_body
      %s48 = ssub.s32 %s43, 1
      %s49 = ssub.s32 %s43, 2
      %s56 = sadd.s32 1, %s51
      %p57 = scmp.ge.s32.totalorder %s56, 2
      %s58 = scalar_select %p57, 0, %s56
      %s59 = sadd.s32 1, %s50
      %s60 = scalar_select %p57, %s59, %s50
      %p61 = scmp.ge.s32.totalorder %s60, 2
      %s62 = scalar_select %p61, 0, %s60
      %s63 = ssub.s32 %s50, %s62
      %s64 = ssub.s32 %s51, %s58
      %s65 = sor.u32 %s63, %s64
      %p66 = scmp.eq.s32.totalorder %s65, 0
      %s68 = sadd.s32 %s67, 1
      %s69 = scalar_select %p66, %s67, %s68
      %p72 = pneg %p66
      %p73 = scmp.eq.s32.totalorder %s43, 3
      %p74 = por %p72, %p73
      %p75 = scmp.ne.s32.totalorder %s67, %s70
      %p76 = scmp.eq.s32.totalorder %s43, 0
      %p77 = por %p75, %p76
      %p78 = scmp.ne.s32.totalorder %s67, %s70
      %p79 = scmp.eq.s32.totalorder %s48, 3
      %p80 = por %p78, %p79
      %p81 = scmp.ne.s32.totalorder %s70, %s71
      %p82 = scmp.eq.s32.totalorder %s48, 0
      %p83 = por %p81, %p82
      %p84 = scmp.ne.s32.totalorder %s70, %s71
      %p85 = scmp.eq.s32.totalorder %s49, 3
      %p86 = por %p84, %p85
      %p88 = scmp.ne.s32.totalorder %s71, %s87
      %p89 = scmp.eq.s32.totalorder %s49, 0
      %p90 = por %p88, %p89
      %s91 = ssub.s32 %s50, %s62
      %p92 = scmp.eq.s32.totalorder %s91, 0
      %s94 = sadd.s32 %s93, 1
      %s95 = scalar_select %p92, %s93, %s94
      %p98 = pneg %p92
      %p99 = scmp.eq.s32.totalorder %s43, 3
      %p100 = por %p98, %p99
      %p101 = scmp.ne.s32.totalorder %s93, %s96
      %p102 = scmp.eq.s32.totalorder %s43, 0
      %p103 = por %p101, %p102
      %p104 = scmp.ne.s32.totalorder %s93, %s96
      %p105 = scmp.eq.s32.totalorder %s48, 3
      %p106 = por %p104, %p105
      %p107 = scmp.ne.s32.totalorder %s96, %s97
      %p108 = scmp.eq.s32.totalorder %s48, 0
      %p109 = por %p107, %p108
      %p110 = scmp.ne.s32.totalorder %s96, %s97
      %p111 = scmp.eq.s32.totalorder %s49, 3
      %p112 = por %p110, %p111
      %p114 = scmp.ne.s32.totalorder %s97, %s113
      %p115 = scmp.eq.s32.totalorder %s49, 0
      %p116 = por %p114, %p115
      %s117 = ssub.s32 %s50, %s62
      %p118 = scmp.eq.s32.totalorder %s117, 0
      %s120 = sadd.s32 %s119, 1
      %s121 = scalar_select %p118, %s119, %s120
      %p124 = pneg %p118
      %p125 = scmp.eq.s32.totalorder %s43, 3
      %p126 = por %p124, %p125
      %p127 = scmp.ne.s32.totalorder %s119, %s122
      %p128 = scmp.eq.s32.totalorder %s43, 0
      %p129 = por %p127, %p128
      %p130 = scmp.ne.s32.totalorder %s119, %s122
      %p131 = scmp.eq.s32.totalorder %s48, 3
      %p132 = por %p130, %p131
      %p133 = scmp.ne.s32.totalorder %s122, %s123
      %p134 = scmp.eq.s32.totalorder %s48, 0
      %p135 = por %p133, %p134
      %p136 = scmp.ne.s32.totalorder %s122, %s123
      %p137 = scmp.eq.s32.totalorder %s49, 3
      %p138 = por %p136, %p137
      %p140 = scmp.ne.s32.totalorder %s123, %s139
      %p141 = scmp.eq.s32.totalorder %s49, 0
      %p142 = por %p140, %p141
      %s143 = ssub.s32 %s50, %s62
      %s144 = ssub.s32 %s51, %s58
      %s145 = sor.u32 %s143, %s144
      %p146 = scmp.eq.s32.totalorder %s145, 0
      %s148 = sadd.s32 %s147, 1
      %s149 = scalar_select %p146, %s147, %s148
      %p152 = pneg %p146
      %p153 = scmp.eq.s32.totalorder %s43, 3
      %p154 = por %p152, %p153
      %p155 = scmp.ne.s32.totalorder %s147, %s150
      %p156 = scmp.eq.s32.totalorder %s43, 0
      %p157 = por %p155, %p156
      %p158 = scmp.ne.s32.totalorder %s147, %s150
      %p159 = scmp.eq.s32.totalorder %s48, 3
      %p160 = por %p158, %p159
      %p161 = scmp.ne.s32.totalorder %s150, %s151
      %p162 = scmp.eq.s32.totalorder %s48, 0
      %p163 = por %p161, %p162
      %p164 = scmp.ne.s32.totalorder %s150, %s151
      %p165 = scmp.eq.s32.totalorder %s49, 3
      %p166 = por %p164, %p165
      %p168 = scmp.ne.s32.totalorder %s151, %s167
      %p169 = scmp.eq.s32.totalorder %s49, 0
      %p170 = por %p168, %p169
      %s171 = ssub.s32 %s50, %s62
      %p172 = scmp.eq.s32.totalorder %s171, 0
      %s174 = sadd.s32 %s173, 1
      %s175 = scalar_select %p172, %s173, %s174
      %p178 = pneg %p172
      %p179 = scmp.eq.s32.totalorder %s43, 3
      %p180 = por %p178, %p179
      %p181 = scmp.ne.s32.totalorder %s173, %s176
      %p182 = scmp.eq.s32.totalorder %s43, 0
      %p183 = por %p181, %p182
      %p184 = scmp.ne.s32.totalorder %s173, %s176
      %p185 = scmp.eq.s32.totalorder %s48, 3
      %p186 = por %p184, %p185
      %p187 = scmp.ne.s32.totalorder %s176, %s177
      %p188 = scmp.eq.s32.totalorder %s48, 0
      %p189 = por %p187, %p188
      %p190 = scmp.ne.s32.totalorder %s176, %s177
      %p191 = scmp.eq.s32.totalorder %s49, 3
      %p192 = por %p190, %p191
      %p194 = scmp.ne.s32.totalorder %s177, %s193
      %p195 = scmp.eq.s32.totalorder %s49, 0
      %p196 = por %p194, %p195
      %s198 = sadd.s32 %s197, 1
      %p201 = scmp.eq.s32.totalorder %s43, 3
      %p202 = scmp.ne.s32.totalorder %s197, %s199
      %p203 = scmp.eq.s32.totalorder %s43, 0
      %p204 = por %p202, %p203
      %p205 = scmp.ne.s32.totalorder %s197, %s199
      %p206 = scmp.eq.s32.totalorder %s48, 3
      %p207 = por %p205, %p206
      %p208 = scmp.ne.s32.totalorder %s199, %s200
      %p209 = scmp.eq.s32.totalorder %s48, 0
      %p210 = por %p208, %p209
      %p211 = scmp.ne.s32.totalorder %s199, %s200
      %p212 = scmp.eq.s32.totalorder %s49, 3
      %p213 = por %p211, %p212
      %p215 = scmp.ne.s32.totalorder %s200, %s214
      %p216 = scmp.eq.s32.totalorder %s49, 0
      %p217 = por %p215, %p216
      %s219 = sadd.s32 %s218, 1
      %p222 = scmp.eq.s32.totalorder %s43, 3
      %p223 = scmp.ne.s32.totalorder %s218, %s220
      %p224 = scmp.eq.s32.totalorder %s43, 0
      %p225 = por %p223, %p224
      %p226 = scmp.ne.s32.totalorder %s218, %s220
      %p227 = scmp.eq.s32.totalorder %s48, 3
      %p228 = por %p226, %p227
      %p229 = scmp.ne.s32.totalorder %s220, %s221
      %p230 = scmp.eq.s32.totalorder %s48, 0
      %p231 = por %p229, %p230
      %p232 = scmp.ne.s32.totalorder %s220, %s221
      %p233 = scmp.eq.s32.totalorder %s49, 3
      %p234 = por %p232, %p233
      %p236 = scmp.ne.s32.totalorder %s221, %s235
      %p237 = scmp.eq.s32.totalorder %s49, 0
      %p238 = por %p236, %p237
      %s240 = sadd.s32 %s239, 1
      %p243 = scmp.eq.s32.totalorder %s43, 3
      %p244 = scmp.ne.s32.totalorder %s239, %s241
      %p245 = scmp.eq.s32.totalorder %s43, 0
      %p246 = por %p244, %p245
      %p247 = scmp.ne.s32.totalorder %s239, %s241
      %p248 = scmp.eq.s32.totalorder %s48, 3
      %p249 = por %p247, %p248
      %p250 = scmp.ne.s32.totalorder %s241, %s242
      %p251 = scmp.eq.s32.totalorder %s48, 0
      %p252 = por %p250, %p251
      %p253 = scmp.ne.s32.totalorder %s241, %s242
      %p254 = scmp.eq.s32.totalorder %s49, 3
      %p255 = por %p253, %p254
      %p257 = scmp.ne.s32.totalorder %s242, %s256
      %p258 = scmp.eq.s32.totalorder %s49, 0
      %p259 = por %p257, %p258
      %s261 = sadd.s32 %s260, 1
      %p264 = scmp.eq.s32.totalorder %s43, 3
      %p265 = scmp.ne.s32.totalorder %s260, %s262
      %p266 = scmp.eq.s32.totalorder %s43, 0
      %p267 = por %p265, %p266
      %p268 = scmp.ne.s32.totalorder %s260, %s262
      %p269 = scmp.eq.s32.totalorder %s48, 3
      %p270 = por %p268, %p269
      %p271 = scmp.ne.s32.totalorder %s262, %s263
      %p272 = scmp.eq.s32.totalorder %s48, 0
      %p273 = por %p271, %p272
      %p274 = scmp.ne.s32.totalorder %s262, %s263
      %p275 = scmp.eq.s32.totalorder %s49, 3
      %p276 = por %p274, %p275
      %p278 = scmp.ne.s32.totalorder %s263, %s277
      %p279 = scmp.eq.s32.totalorder %s49, 0
      %p280 = por %p278, %p279
      %s282 = sadd.s32 %s281, 1
      %p285 = scmp.eq.s32.totalorder %s43, 3
      %p286 = scmp.ne.s32.totalorder %s281, %s283
      %p287 = scmp.eq.s32.totalorder %s43, 0
      %p288 = por %p286, %p287
      %p289 = scmp.ne.s32.totalorder %s281, %s283
      %p290 = scmp.eq.s32.totalorder %s48, 3
      %p291 = por %p289, %p290
      %p292 = scmp.ne.s32.totalorder %s283, %s284
      %p293 = scmp.eq.s32.totalorder %s48, 0
      %p294 = por %p292, %p293
      %p295 = scmp.ne.s32.totalorder %s283, %s284
      %p296 = scmp.eq.s32.totalorder %s49, 3
      %p297 = por %p295, %p296
      %p299 = scmp.ne.s32.totalorder %s284, %s298
      %p300 = scmp.eq.s32.totalorder %s49, 0
      %p301 = por %p299, %p300
      %s303 = sadd.s32 %s302, 1
      %p306 = scmp.eq.s32.totalorder %s43, 3
      %p307 = scmp.ne.s32.totalorder %s302, %s304
      %p308 = scmp.eq.s32.totalorder %s43, 0
      %p309 = por %p307, %p308
      %p310 = scmp.ne.s32.totalorder %s302, %s304
      %p311 = scmp.eq.s32.totalorder %s48, 3
      %p312 = por %p310, %p311
      %p313 = scmp.ne.s32.totalorder %s304, %s305
      %p314 = scmp.eq.s32.totalorder %s48, 0
      %p315 = por %p313, %p314
      %p316 = scmp.ne.s32.totalorder %s304, %s305
      %p317 = scmp.eq.s32.totalorder %s49, 3
      %p318 = por %p316, %p317
      %p320 = scmp.ne.s32.totalorder %s305, %s319
      %p321 = scmp.eq.s32.totalorder %s49, 0
      %p322 = por %p320, %p321
      %s324 = sadd.s32 %s323, 1
      %p327 = scmp.eq.s32.totalorder %s43, 3
      %p328 = scmp.ne.s32.totalorder %s323, %s325
      %p329 = scmp.eq.s32.totalorder %s43, 0
      %p330 = por %p328, %p329
      %p331 = scmp.ne.s32.totalorder %s323, %s325
      %p332 = scmp.eq.s32.totalorder %s48, 3
      %p333 = por %p331, %p332
      %p334 = scmp.ne.s32.totalorder %s325, %s326
      %p335 = scmp.eq.s32.totalorder %s48, 0
      %p336 = por %p334, %p335
      %p337 = scmp.ne.s32.totalorder %s325, %s326
      %p338 = scmp.eq.s32.totalorder %s49, 3
      %p339 = por %p337, %p338
      %p341 = scmp.ne.s32.totalorder %s326, %s340
      %p342 = scmp.eq.s32.totalorder %s49, 0
      %p343 = por %p341, %p342
      %s345 = sadd.s32 %s344, 1
      %p348 = scmp.eq.s32.totalorder %s43, 3
      %p349 = scmp.ne.s32.totalorder %s344, %s346
      %p350 = scmp.eq.s32.totalorder %s43, 0
      %p351 = por %p349, %p350
      %p352 = scmp.ne.s32.totalorder %s344, %s346
      %p353 = scmp.eq.s32.totalorder %s48, 3
      %p354 = por %p352, %p353
      %p355 = scmp.ne.s32.totalorder %s346, %s347
      %p356 = scmp.eq.s32.totalorder %s48, 0
      %p357 = por %p355, %p356
      %p358 = scmp.ne.s32.totalorder %s346, %s347
      %p359 = scmp.eq.s32.totalorder %s49, 3
      %p360 = por %p358, %p359
      %p362 = scmp.ne.s32.totalorder %s347, %s361
      %p363 = scmp.eq.s32.totalorder %s49, 0
      %p364 = por %p362, %p363
      %s366 = sadd.s32 %s365, 1
      %p369 = scmp.eq.s32.totalorder %s43, 3
      %p370 = scmp.ne.s32.totalorder %s365, %s367
      %p371 = scmp.eq.s32.totalorder %s43, 0
      %p372 = por %p370, %p371
      %p373 = scmp.ne.s32.totalorder %s365, %s367
      %p374 = scmp.eq.s32.totalorder %s48, 3
      %p375 = por %p373, %p374
      %p376 = scmp.ne.s32.totalorder %s367, %s368
      %p377 = scmp.eq.s32.totalorder %s48, 0
      %p378 = por %p376, %p377
      %p379 = scmp.ne.s32.totalorder %s367, %s368
      %p380 = scmp.eq.s32.totalorder %s49, 3
      %p381 = por %p379, %p380
      %p383 = scmp.ne.s32.totalorder %s368, %s382
      %p384 = scmp.eq.s32.totalorder %s49, 0
      %p385 = por %p383, %p384
      %s387 = sadd.s32 %s386, 1
      %p390 = scmp.eq.s32.totalorder %s43, 3
      %p391 = scmp.ne.s32.totalorder %s386, %s388
      %p392 = scmp.eq.s32.totalorder %s43, 0
      %p393 = por %p391, %p392
      %p394 = scmp.ne.s32.totalorder %s386, %s388
      %p395 = scmp.eq.s32.totalorder %s48, 3
      %p396 = por %p394, %p395
      %p397 = scmp.ne.s32.totalorder %s388, %s389
      %p398 = scmp.eq.s32.totalorder %s48, 0
      %p399 = por %p397, %p398
      %p400 = scmp.ne.s32.totalorder %s388, %s389
      %p401 = scmp.eq.s32.totalorder %s49, 3
      %p402 = por %p400, %p401
      %p404 = scmp.ne.s32.totalorder %s389, %s403
      %p405 = scmp.eq.s32.totalorder %s49, 0
      %p406 = por %p404, %p405
      %s408 = sadd.s32 %s407, 1
      %p411 = scmp.eq.s32.totalorder %s43, 3
      %p412 = scmp.ne.s32.totalorder %s407, %s409
      %p413 = scmp.eq.s32.totalorder %s43, 0
      %p414 = por %p412, %p413
      %p415 = scmp.ne.s32.totalorder %s407, %s409
      %p416 = scmp.eq.s32.totalorder %s48, 3
      %p417 = por %p415, %p416
      %p418 = scmp.ne.s32.totalorder %s409, %s410
      %p419 = scmp.eq.s32.totalorder %s48, 0
      %p420 = por %p418, %p419
      %p421 = scmp.ne.s32.totalorder %s409, %s410
      %p422 = scmp.eq.s32.totalorder %s49, 3
      %p423 = por %p421, %p422
      %p425 = scmp.ne.s32.totalorder %s410, %s424
      %p426 = scmp.eq.s32.totalorder %s49, 0
      %p427 = por %p425, %p426
      %s429 = sadd.s32 %s428, 1
      %p432 = scmp.eq.s32.totalorder %s43, 3
      %p433 = scmp.ne.s32.totalorder %s428, %s430
      %p434 = scmp.eq.s32.totalorder %s43, 0
      %p435 = por %p433, %p434
      %p436 = scmp.ne.s32.totalorder %s428, %s430
      %p437 = scmp.eq.s32.totalorder %s48, 3
      %p438 = por %p436, %p437
      %p439 = scmp.ne.s32.totalorder %s430, %s431
      %p440 = scmp.eq.s32.totalorder %s48, 0
      %p441 = por %p439, %p440
      %p442 = scmp.ne.s32.totalorder %s430, %s431
      %p443 = scmp.eq.s32.totalorder %s49, 3
      %p444 = por %p442, %p443
      %p446 = scmp.ne.s32.totalorder %s431, %s445
      %p447 = scmp.eq.s32.totalorder %s49, 0
      %p448 = por %p446, %p447
      %s450 = sadd.s32 %s449, 1
      %p453 = scmp.eq.s32.totalorder %s43, 3
      %p454 = scmp.ne.s32.totalorder %s449, %s451
      %p455 = scmp.eq.s32.totalorder %s43, 0
      %p456 = por %p454, %p455
      %p457 = scmp.ne.s32.totalorder %s449, %s451
      %p458 = scmp.eq.s32.totalorder %s48, 3
      %p459 = por %p457, %p458
      %p460 = scmp.ne.s32.totalorder %s451, %s452
      %p461 = scmp.eq.s32.totalorder %s48, 0
      %p462 = por %p460, %p461
      %p463 = scmp.ne.s32.totalorder %s451, %s452
      %p464 = scmp.eq.s32.totalorder %s49, 3
      %p465 = por %p463, %p464
      %p467 = scmp.ne.s32.totalorder %s452, %s466
      %p468 = scmp.eq.s32.totalorder %s49, 0
      %p469 = por %p467, %p468
      %s471 = sadd.s32 %s470, 1
      %p474 = scmp.eq.s32.totalorder %s43, 3
      %p475 = scmp.ne.s32.totalorder %s470, %s472
      %p476 = scmp.eq.s32.totalorder %s43, 0
      %p477 = por %p475, %p476
      %p478 = scmp.ne.s32.totalorder %s470, %s472
      %p479 = scmp.eq.s32.totalorder %s48, 3
      %p480 = por %p478, %p479
      %p481 = scmp.ne.s32.totalorder %s472, %s473
      %p482 = scmp.eq.s32.totalorder %s48, 0
      %p483 = por %p481, %p482
      %p484 = scmp.ne.s32.totalorder %s472, %s473
      %p485 = scmp.eq.s32.totalorder %s49, 3
      %p486 = por %p484, %p485
      %p488 = scmp.ne.s32.totalorder %s473, %s487
      %p489 = scmp.eq.s32.totalorder %s49, 0
      %p490 = por %p488, %p489
      %s492 = sadd.s32 %s491, 1
      %p495 = scmp.eq.s32.totalorder %s43, 3
      %p496 = scmp.ne.s32.totalorder %s491, %s493
      %p497 = scmp.eq.s32.totalorder %s43, 0
      %p498 = por %p496, %p497
      %p499 = scmp.ne.s32.totalorder %s491, %s493
      %p500 = scmp.eq.s32.totalorder %s48, 3
      %p501 = por %p499, %p500
      %p502 = scmp.ne.s32.totalorder %s493, %s494
      %p503 = scmp.eq.s32.totalorder %s48, 0
      %p504 = por %p502, %p503
      %p505 = scmp.ne.s32.totalorder %s493, %s494
      %p506 = scmp.eq.s32.totalorder %s49, 3
      %p507 = por %p505, %p506
      %p509 = scmp.ne.s32.totalorder %s494, %s508
      %p510 = scmp.eq.s32.totalorder %s49, 0
      %p511 = por %p509, %p510
      %s513 = sadd.s32 %s512, 1
      %p516 = scmp.eq.s32.totalorder %s43, 3
      %p517 = scmp.ne.s32.totalorder %s512, %s514
      %p518 = scmp.eq.s32.totalorder %s43, 0
      %p519 = por %p517, %p518
      %p520 = scmp.ne.s32.totalorder %s512, %s514
      %p521 = scmp.eq.s32.totalorder %s48, 3
      %p522 = por %p520, %p521
      %p523 = scmp.ne.s32.totalorder %s514, %s515
      %p524 = scmp.eq.s32.totalorder %s48, 0
      %p525 = por %p523, %p524
      %p526 = scmp.ne.s32.totalorder %s514, %s515
      %p527 = scmp.eq.s32.totalorder %s49, 3
      %p528 = por %p526, %p527
      %p530 = scmp.ne.s32.totalorder %s515, %s529
      %p531 = scmp.eq.s32.totalorder %s49, 0
      %p532 = por %p530, %p531
      %s533 = ssub.s32 %s50, %s62
      %s534 = ssub.s32 %s51, %s58
      %s535 = sor.u32 %s533, %s534
      %p536 = scmp.eq.s32.totalorder %s535, 0
      %s538 = sadd.s32 %s537, 1
      %s539 = scalar_select %p536, %s537, %s538
      %p542 = pneg %p536
      %p543 = scmp.eq.s32.totalorder %s43, 3
      %p544 = por %p542, %p543
      %p545 = scmp.ne.s32.totalorder %s537, %s540
      %p546 = scmp.eq.s32.totalorder %s43, 0
      %p547 = por %p545, %p546
      %p548 = scmp.ne.s32.totalorder %s537, %s540
      %p549 = scmp.eq.s32.totalorder %s48, 3
      %p550 = por %p548, %p549
      %p551 = scmp.ne.s32.totalorder %s540, %s541
      %p552 = scmp.eq.s32.totalorder %s48, 0
      %p553 = por %p551, %p552
      %p554 = scmp.ne.s32.totalorder %s540, %s541
      %p555 = scmp.eq.s32.totalorder %s49, 3
      %p556 = por %p554, %p555
      %p558 = scmp.ne.s32.totalorder %s541, %s557
      %p559 = scmp.eq.s32.totalorder %s49, 0
      %p560 = por %p558, %p559
      %s561 = ssub.s32 %s50, %s62
      %s562 = ssub.s32 %s51, %s58
      %s563 = sor.u32 %s561, %s562
      %p564 = scmp.eq.s32.totalorder %s563, 0
      %s566 = sadd.s32 %s565, 1
      %s567 = scalar_select %p564, %s565, %s566
      %p570 = pneg %p564
      %p571 = scmp.eq.s32.totalorder %s43, 3
      %p572 = por %p570, %p571
      %p573 = scmp.ne.s32.totalorder %s565, %s568
      %p574 = scmp.eq.s32.totalorder %s43, 0
      %p575 = por %p573, %p574
      %p576 = scmp.ne.s32.totalorder %s565, %s568
      %p577 = scmp.eq.s32.totalorder %s48, 3
      %p578 = por %p576, %p577
      %p579 = scmp.ne.s32.totalorder %s568, %s569
      %p580 = scmp.eq.s32.totalorder %s48, 0
      %p581 = por %p579, %p580
      %p582 = scmp.ne.s32.totalorder %s568, %s569
      %p583 = scmp.eq.s32.totalorder %s49, 3
      %p584 = por %p582, %p583
      %p586 = scmp.ne.s32.totalorder %s569, %s585
      %p587 = scmp.eq.s32.totalorder %s49, 0
      %p588 = por %p586, %p587
      %p589 = scmp.le.s32.totalorder 1, %s43
      %p590 = scmp.lt.s32.totalorder %s43, 5
      %p591 = pnand %p589, %p590
      %p592 = pneg %p591
      // Predicated region
      $region9: #{tpu_custom_call.1} parent=5 // pred_check
        _
      $region10: #{tpu_custom_call.1} parent=5 // pred_check_branch
        %594 = sbr.rel (%p591) target = $region12
      $region11: #{tpu_custom_call.1} parent=5 // pred_region
        %s595 = ssub.s32 %s43, 1
        // Predicated region
        $region13: #{tpu_custom_call.1} parent=11 // pred_check
          %p596 = pneg %p210
        $region14: #{tpu_custom_call.1} parent=11 // pred_check_branch
          %598 = sbr.rel (%p596) target = $region16
        $region15: #{tpu_custom_call.1} parent=11 // pred_region
          %s600 = ssub.s32 256, 256
          %601 = vsyncadd [#allocation9], %s600
          %s602 = sshll.u32 [#allocation8], 4
          %s603 = int_to_ptr.vmem [resolvable:$true] %s602
          %608 = dma.hbm_to_vmem [thread:$0]  %s5, 256, %s603, [#allocation9], 64, 64, 4
        $region16: #{tpu_custom_call.1} parent=11 // pred_fallthru
          _
        // Predicated region
        $region17: #{tpu_custom_call.1} parent=11 // pred_check
          %p609 = pneg %p231
        $region18: #{tpu_custom_call.1} parent=11 // pred_check_branch
          %611 = sbr.rel (%p609) target = $region20
        $region19: #{tpu_custom_call.1} parent=11 // pred_region
          %s613 = ssub.s32 16, 16
          %614 = vsyncadd [#allocation9], %s613
          %s616 = sshll.u32 [#allocation10], 4
          %s617 = int_to_ptr.vmem [resolvable:$true] %s616
          %619 = dma.hbm_to_vmem [thread:$0]  %s6, 16, %s617, [#allocation9]
        $region20: #{tpu_custom_call.1} parent=11 // pred_fallthru
          _
        // Predicated region
        $region21: #{tpu_custom_call.1} parent=11 // pred_check
          %p620 = pneg %p252
        $region22: #{tpu_custom_call.1} parent=11 // pred_check_branch
          %622 = sbr.rel (%p620) target = $region24
        $region23: #{tpu_custom_call.1} parent=11 // pred_region
          %s624 = ssub.s32 256, 256
          %625 = vsyncadd [#allocation12], %s624
          %s626 = sshll.u32 [#allocation11], 4
          %s627 = int_to_ptr.vmem [resolvable:$true] %s626
          %632 = dma.hbm_to_vmem [thread:$0]  %s7, 256, %s627, [#allocation12], 64, 64, 4
        $region24: #{tpu_custom_call.1} parent=11 // pred_fallthru
          _
        // Predicated region
        $region25: #{tpu_custom_call.1} parent=11 // pred_check
          %p633 = pneg %p273
        $region26: #{tpu_custom_call.1} parent=11 // pred_check_branch
          %635 = sbr.rel (%p633) target = $region28
        $region27: #{tpu_custom_call.1} parent=11 // pred_region
          %s637 = ssub.s32 16, 16
          %638 = vsyncadd [#allocation12], %s637
          %s640 = sshll.u32 [#allocation13], 4
          %s641 = int_to_ptr.vmem [resolvable:$true] %s640
          %643 = dma.hbm_to_vmem [thread:$0]  %s8, 16, %s641, [#allocation12]
        $region28: #{tpu_custom_call.1} parent=11 // pred_fallthru
          _
        // Predicated region
        $region29: #{tpu_custom_call.1} parent=11 // pred_check
          %p644 = pneg %p294
        $region30: #{tpu_custom_call.1} parent=11 // pred_check_branch
          %646 = sbr.rel (%p644) target = $region32
        $region31: #{tpu_custom_call.1} parent=11 // pred_region
          _
        $region32: #{tpu_custom_call.1} parent=11 // pred_fallthru
          _
        // Predicated region
        $region33: #{tpu_custom_call.1} parent=11 // pred_check
          %p647 = pneg %p315
        $region34: #{tpu_custom_call.1} parent=11 // pred_check_branch
          %649 = sbr.rel (%p647) target = $region36
        $region35: #{tpu_custom_call.1} parent=11 // pred_region
          %s651 = ssub.s32 16, 16
          %652 = vsyncadd [#allocation15], %s651
          %s654 = sshll.u32 [#allocation14], 4
          %s655 = int_to_ptr.vmem [resolvable:$true] %s654
          %657 = dma.hbm_to_vmem [thread:$0]  %s10, 16, %s655, [#allocation15]
        $region36: #{tpu_custom_call.1} parent=11 // pred_fallthru
          _
        // Predicated region
        $region37: #{tpu_custom_call.1} parent=11 // pred_check
          %p658 = pneg %p336
        $region38: #{tpu_custom_call.1} parent=11 // pred_check_branch
          %660 = sbr.rel (%p658) target = $region40
        $region39: #{tpu_custom_call.1} parent=11 // pred_region
          %s662 = ssub.s32 256, 256
          %663 = vsyncadd [#allocation15], %s662
          %s664 = sshll.u32 [#allocation16], 4
          %s665 = int_to_ptr.vmem [resolvable:$true] %s664
          %670 = dma.hbm_to_vmem [thread:$0]  %s11, 256, %s665, [#allocation15], 64, 64, 4
        $region40: #{tpu_custom_call.1} parent=11 // pred_fallthru
          _
        // Predicated region
        $region41: #{tpu_custom_call.1} parent=11 // pred_check
          %p671 = pneg %p357
        $region42: #{tpu_custom_call.1} parent=11 // pred_check_branch
          %673 = sbr.rel (%p671) target = $region44
        $region43: #{tpu_custom_call.1} parent=11 // pred_region
          %s675 = ssub.s32 16, 16
          %676 = vsyncadd [#allocation18], %s675
          %s678 = sshll.u32 [#allocation17], 4
          %s679 = int_to_ptr.vmem [resolvable:$true] %s678
          %681 = dma.hbm_to_vmem [thread:$0]  %s12, 16, %s679, [#allocation18]
        $region44: #{tpu_custom_call.1} parent=11 // pred_fallthru
          _
        // Predicated region
        $region45: #{tpu_custom_call.1} parent=11 // pred_check
          %p682 = pneg %p378
        $region46: #{tpu_custom_call.1} parent=11 // pred_check_branch
          %684 = sbr.rel (%p682) target = $region48
        $region47: #{tpu_custom_call.1} parent=11 // pred_region
          _
        $region48: #{tpu_custom_call.1} parent=11 // pred_fallthru
          _
        // Predicated region
        $region49: #{tpu_custom_call.1} parent=11 // pred_check
          %p685 = pneg %p399
        $region50: #{tpu_custom_call.1} parent=11 // pred_check_branch
          %687 = sbr.rel (%p685) target = $region52
        $region51: #{tpu_custom_call.1} parent=11 // pred_region
          %s689 = ssub.s32 16, 16
          %690 = vsyncadd [#allocation18], %s689
          %s692 = sshll.u32 [#allocation19], 4
          %s693 = int_to_ptr.vmem [resolvable:$true] %s692
          %695 = dma.hbm_to_vmem [thread:$0]  %s14, 16, %s693, [#allocation18]
        $region52: #{tpu_custom_call.1} parent=11 // pred_fallthru
          _
        // Predicated region
        $region53: #{tpu_custom_call.1} parent=11 // pred_check
          %p696 = pneg %p420
        $region54: #{tpu_custom_call.1} parent=11 // pred_check_branch
          %698 = sbr.rel (%p696) target = $region56
        $region55: #{tpu_custom_call.1} parent=11 // pred_region
          %s700 = ssub.s32 256, 256
          %701 = vsyncadd [#allocation21], %s700
          %s702 = sshll.u32 [#allocation20], 4
          %s703 = int_to_ptr.vmem [resolvable:$true] %s702
          %708 = dma.hbm_to_vmem [thread:$0]  %s15, 256, %s703, [#allocation21], 64, 64, 4
        $region56: #{tpu_custom_call.1} parent=11 // pred_fallthru
          _
        // Predicated region
        $region57: #{tpu_custom_call.1} parent=11 // pred_check
          %p709 = pneg %p441
        $region58: #{tpu_custom_call.1} parent=11 // pred_check_branch
          %711 = sbr.rel (%p709) target = $region60
        $region59: #{tpu_custom_call.1} parent=11 // pred_region
          _
        $region60: #{tpu_custom_call.1} parent=11 // pred_fallthru
          _
        // Predicated region
        $region61: #{tpu_custom_call.1} parent=11 // pred_check
          %p712 = pneg %p462
        $region62: #{tpu_custom_call.1} parent=11 // pred_check_branch
          %714 = sbr.rel (%p712) target = $region64
        $region63: #{tpu_custom_call.1} parent=11 // pred_region
          _
        $region64: #{tpu_custom_call.1} parent=11 // pred_fallthru
          _
        // Predicated region
        $region65: #{tpu_custom_call.1} parent=11 // pred_check
          %p715 = pneg %p483
        $region66: #{tpu_custom_call.1} parent=11 // pred_check_branch
          %717 = sbr.rel (%p715) target = $region68
        $region67: #{tpu_custom_call.1} parent=11 // pred_region
          _
        $region68: #{tpu_custom_call.1} parent=11 // pred_fallthru
          _
        // Predicated region
        $region69: #{tpu_custom_call.1} parent=11 // pred_check
          %p718 = pneg %p504
        $region70: #{tpu_custom_call.1} parent=11 // pred_check_branch
          %720 = sbr.rel (%p718) target = $region72
        $region71: #{tpu_custom_call.1} parent=11 // pred_region
          _
        $region72: #{tpu_custom_call.1} parent=11 // pred_fallthru
          _
        // Predicated region
        $region73: #{tpu_custom_call.1} parent=11 // pred_check
          %p721 = pneg %p525
        $region74: #{tpu_custom_call.1} parent=11 // pred_check_branch
          %723 = sbr.rel (%p721) target = $region76
        $region75: #{tpu_custom_call.1} parent=11 // pred_region
          _
        $region76: #{tpu_custom_call.1} parent=11 // pred_fallthru
          _
      $region12: #{tpu_custom_call.1} parent=5 // pred_fallthru
        _
      %p724 = scmp.lt.s32.totalorder %s43, 4
      // Predicated region
      $region77: #{tpu_custom_call.1} parent=5 // pred_check
        %p725 = pneg %p724
      $region78: #{tpu_custom_call.1} parent=5 // pred_check_branch
        %727 = sbr.rel (%p725) target = $region80
      $region79: #{tpu_custom_call.1} parent=5 // pred_region
        // Predicated region
        $region81: #{tpu_custom_call.1} parent=79 // pred_check
          %p728 = pneg %p77
        $region82: #{tpu_custom_call.1} parent=79 // pred_check_branch
          %730 = sbr.rel (%p728) target = $region84
        $region83: #{tpu_custom_call.1} parent=79 // pred_region
          %p731 = scmp.lt.s32.totalorder %s50, 1
          %s732 = scalar_select %p731, %s50, 1
          %p733 = scmp.lt.s32.totalorder %s51, 1
          %s734 = scalar_select %p733, %s51, 1
          %s735 = smul.addr %s732, 2
          %s736 = sadd.s32 %s734, %s735
          %s737 = smul.addr %s736, 8
          %s738 = scalar_lea.vmem %s0, %s737
        $region84: #{tpu_custom_call.1} parent=79 // pred_fallthru
          _
        // Predicated region
        $region85: #{tpu_custom_call.1} parent=79 // pred_check
          %p739 = pneg %p103
        $region86: #{tpu_custom_call.1} parent=79 // pred_check_branch
          %741 = sbr.rel (%p739) target = $region88
        $region87: #{tpu_custom_call.1} parent=79 // pred_region
          %s742 = sand.u32 %s93, 1
          %s743 = scalar_lea.sflag [#allocation3], %s742
          %s744 = sand.u32 %s93, 1
          %s745 = smul.addr %s744, 16
          %s746 = scalar_lea.vmem [#allocation2], %s745
          %s748 = ssub.s32 256, 256
          %749 = vsyncadd %s743, %s748
          %s750 = smul.addr %s50, 2
          %s751 = smul.addr %s750, 128
          %s752 = scalar_lea.hbm %s1, %s751
          %s753 = sshll.u32 %s746, 4
          %s754 = int_to_ptr.vmem [resolvable:$true] %s753
          %759 = dma.hbm_to_vmem [thread:$0]  %s752, 256, %s754, %s743, 128, 128, 8
        $region88: #{tpu_custom_call.1} parent=79 // pred_fallthru
          _
        // Predicated region
        $region89: #{tpu_custom_call.1} parent=79 // pred_check
          %p760 = pneg %p129
        $region90: #{tpu_custom_call.1} parent=79 // pred_check_branch
          %762 = sbr.rel (%p760) target = $region92
        $region91: #{tpu_custom_call.1} parent=79 // pred_region
          %p763 = scmp.lt.s32.totalorder %s50, 1
          %s764 = scalar_select %p763, %s50, 1
          %s765 = smul.addr %s764, 8
          %s766 = scalar_lea.vmem %s2, %s765
        $region92: #{tpu_custom_call.1} parent=79 // pred_fallthru
          _
        // Predicated region
        $region93: #{tpu_custom_call.1} parent=79 // pred_check
          %p767 = pneg %p157
        $region94: #{tpu_custom_call.1} parent=79 // pred_check_branch
          %769 = sbr.rel (%p767) target = $region96
        $region95: #{tpu_custom_call.1} parent=79 // pred_region
          %s770 = sand.u32 %s43, 1
          %s771 = scalar_lea.sflag [#allocation6], %s770
          %s772 = sand.u32 %s147, 1
          %s773 = smul.addr %s772, 8
          %s774 = scalar_lea.vmem [#allocation5], %s773
          %s776 = ssub.s32 128, 128
          %777 = vsyncadd %s771, %s776
          %s778 = smul.addr %s50, 2
          %s779 = sadd.s32 %s51, %s778
          %s780 = smul.addr %s779, 128
          %s781 = scalar_lea.hbm %s3, %s780
          %s783 = sshll.u32 %s774, 4
          %s784 = int_to_ptr.vmem [resolvable:$true] %s783
          %786 = dma.hbm_to_vmem [thread:$0]  %s781, 128, %s784, %s771
        $region96: #{tpu_custom_call.1} parent=79 // pred_fallthru
          _
        // Predicated region
        $region97: #{tpu_custom_call.1} parent=79 // pred_check
          %p787 = pneg %p183
        $region98: #{tpu_custom_call.1} parent=79 // pred_check_branch
          %789 = sbr.rel (%p787) target = $region100
        $region99: #{tpu_custom_call.1} parent=79 // pred_region
          %s790 = sand.u32 %s43, 1
          %s791 = scalar_lea.sflag [#allocation6], %s790
          %s792 = sand.u32 %s173, 1
          %s793 = scalar_lea.vmem [#allocation7], %s792
          %s795 = ssub.s32 16, 16
          %796 = vsyncadd %s791, %s795
          %s797 = smul.addr %s50, 16
          %s798 = scalar_lea.hbm %s4, %s797
          %s800 = sshll.u32 %s793, 4
          %s801 = int_to_ptr.vmem [resolvable:$true] %s800
          %803 = dma.hbm_to_vmem [thread:$0]  %s798, 16, %s801, %s791
        $region100: #{tpu_custom_call.1} parent=79 // pred_fallthru
          _
      $region80: #{tpu_custom_call.1} parent=5 // pred_fallthru
        _
      %p804 = scmp.le.s32.totalorder 1, %s43
      %p805 = scmp.lt.s32.totalorder %s43, 5
      %p806 = pnand %p804, %p805
      %p807 = pneg %p806
      // Predicated region
      $region101: #{tpu_custom_call.1} parent=5 // pred_check
        _
      $region102: #{tpu_custom_call.1} parent=5 // pred_check_branch
        %809 = sbr.rel (%p806) target = $region104
      $region103: #{tpu_custom_call.1} parent=5 // pred_region
        %s810 = ssub.s32 %s43, 1
        %s811 = sand.u32 %s96, 1
        %s812 = scalar_lea.sflag [#allocation3], %s811
        %s813 = sand.u32 %s96, 1
        %s814 = smul.addr %s813, 16
        %s815 = scalar_lea.vmem [#allocation2], %s814
        // Predicated region
        $region105: #{tpu_custom_call.1} parent=103 // pred_check
          %p816 = pneg %p109
        $region106: #{tpu_custom_call.1} parent=103 // pred_check_branch
          %818 = sbr.rel (%p816) target = $region108
        $region107: #{tpu_custom_call.1} parent=103 // pred_region
          %819 = dma.done %s812, 256
        $region108: #{tpu_custom_call.1} parent=103 // pred_fallthru
          _
        %s820 = sand.u32 %s48, 1
        %s821 = scalar_lea.sflag [#allocation6], %s820
        %s822 = sand.u32 %s150, 1
        %s823 = smul.addr %s822, 8
        %s824 = scalar_lea.vmem [#allocation5], %s823
        // Predicated region
        $region109: #{tpu_custom_call.1} parent=103 // pred_check
          %p825 = pneg %p163
        $region110: #{tpu_custom_call.1} parent=103 // pred_check_branch
          %827 = sbr.rel (%p825) target = $region112
        $region111: #{tpu_custom_call.1} parent=103 // pred_region
          %828 = dma.done %s821, 128
        $region112: #{tpu_custom_call.1} parent=103 // pred_fallthru
          _
        %s829 = sand.u32 %s48, 1
        %s830 = scalar_lea.sflag [#allocation6], %s829
        %s831 = sand.u32 %s176, 1
        %s832 = scalar_lea.vmem [#allocation7], %s831
        // Predicated region
        $region113: #{tpu_custom_call.1} parent=103 // pred_check
          %p833 = pneg %p189
        $region114: #{tpu_custom_call.1} parent=103 // pred_check_branch
          %835 = sbr.rel (%p833) target = $region116
        $region115: #{tpu_custom_call.1} parent=103 // pred_region
          %836 = dma.done %s830, 16
        $region116: #{tpu_custom_call.1} parent=103 // pred_fallthru
          _
        // Predicated region
        $region117: #{tpu_custom_call.1} parent=103 // pred_check
          %p837 = pneg %p210
        $region118: #{tpu_custom_call.1} parent=103 // pred_check_branch
          %839 = sbr.rel (%p837) target = $region120
        $region119: #{tpu_custom_call.1} parent=103 // pred_region
          %840 = dma.done [#allocation9], 256
        $region120: #{tpu_custom_call.1} parent=103 // pred_fallthru
          _
        // Predicated region
        $region121: #{tpu_custom_call.1} parent=103 // pred_check
          %p841 = pneg %p231
        $region122: #{tpu_custom_call.1} parent=103 // pred_check_branch
          %843 = sbr.rel (%p841) target = $region124
        $region123: #{tpu_custom_call.1} parent=103 // pred_region
          %844 = dma.done [#allocation9], 16
        $region124: #{tpu_custom_call.1} parent=103 // pred_fallthru
          _
        // Predicated region
        $region125: #{tpu_custom_call.1} parent=103 // pred_check
          %p845 = pneg %p252
        $region126: #{tpu_custom_call.1} parent=103 // pred_check_branch
          %847 = sbr.rel (%p845) target = $region128
        $region127: #{tpu_custom_call.1} parent=103 // pred_region
          %848 = dma.done [#allocation12], 256
        $region128: #{tpu_custom_call.1} parent=103 // pred_fallthru
          _
        // Predicated region
        $region129: #{tpu_custom_call.1} parent=103 // pred_check
          %p849 = pneg %p273
        $region130: #{tpu_custom_call.1} parent=103 // pred_check_branch
          %851 = sbr.rel (%p849) target = $region132
        $region131: #{tpu_custom_call.1} parent=103 // pred_region
          %852 = dma.done [#allocation12], 16
        $region132: #{tpu_custom_call.1} parent=103 // pred_fallthru
          _
        // Predicated region
        $region133: #{tpu_custom_call.1} parent=103 // pred_check
          %p853 = pneg %p315
        $region134: #{tpu_custom_call.1} parent=103 // pred_check_branch
          %855 = sbr.rel (%p853) target = $region136
        $region135: #{tpu_custom_call.1} parent=103 // pred_region
          %856 = dma.done [#allocation15], 16
        $region136: #{tpu_custom_call.1} parent=103 // pred_fallthru
          _
        // Predicated region
        $region137: #{tpu_custom_call.1} parent=103 // pred_check
          %p857 = pneg %p336
        $region138: #{tpu_custom_call.1} parent=103 // pred_check_branch
          %859 = sbr.rel (%p857) target = $region140
        $region139: #{tpu_custom_call.1} parent=103 // pred_region
          %860 = dma.done [#allocation15], 256
        $region140: #{tpu_custom_call.1} parent=103 // pred_fallthru
          _
        // Predicated region
        $region141: #{tpu_custom_call.1} parent=103 // pred_check
          %p861 = pneg %p357
        $region142: #{tpu_custom_call.1} parent=103 // pred_check_branch
          %863 = sbr.rel (%p861) target = $region144
        $region143: #{tpu_custom_call.1} parent=103 // pred_region
          %864 = dma.done [#allocation18], 16
        $region144: #{tpu_custom_call.1} parent=103 // pred_fallthru
          _
        // Predicated region
        $region145: #{tpu_custom_call.1} parent=103 // pred_check
          %p865 = pneg %p399
        $region146: #{tpu_custom_call.1} parent=103 // pred_check_branch
          %867 = sbr.rel (%p865) target = $region148
        $region147: #{tpu_custom_call.1} parent=103 // pred_region
          %868 = dma.done [#allocation18], 16
        $region148: #{tpu_custom_call.1} parent=103 // pred_fallthru
          _
        // Predicated region
        $region149: #{tpu_custom_call.1} parent=103 // pred_check
          %p869 = pneg %p420
        $region150: #{tpu_custom_call.1} parent=103 // pred_check_branch
          %871 = sbr.rel (%p869) target = $region152
        $region151: #{tpu_custom_call.1} parent=103 // pred_region
          %872 = dma.done [#allocation21], 256
        $region152: #{tpu_custom_call.1} parent=103 // pred_fallthru
          _
        %p873 = scmp.lt.s32.totalorder %s52, 1
        %s874 = scalar_select %p873, %s52, 1
        %p875 = scmp.lt.s32.totalorder %s53, 1
        %s876 = scalar_select %p875, %s53, 1
        %s877 = smul.addr %s874, 2
        %s878 = sadd.s32 %s876, %s877
        %s879 = smul.addr %s878, 8
        %s880 = scalar_lea.vmem %s0, %s879
        %p881 = pneg %p83
        %p882 = pneg %p80
        %s883 = sand.u32 %s96, 1
        %s884 = scalar_lea.sflag [#allocation3], %s883
        %s885 = sand.u32 %s96, 1
        %s886 = smul.addr %s885, 16
        %s887 = scalar_lea.vmem [#allocation2], %s886
        %p888 = pneg %p109
        %p889 = pneg %p106
        %p890 = scmp.lt.s32.totalorder %s52, 1
        %s891 = scalar_select %p890, %s52, 1
        %s892 = smul.addr %s891, 8
        %s893 = scalar_lea.vmem %s2, %s892
        %p894 = pneg %p135
        %p895 = pneg %p132
        %s896 = sand.u32 %s48, 1
        %s897 = scalar_lea.sflag [#allocation6], %s896
        %s898 = sand.u32 %s150, 1
        %s899 = smul.addr %s898, 8
        %s900 = scalar_lea.vmem [#allocation5], %s899
        %p901 = pneg %p163
        %p902 = pneg %p160
        %s903 = sand.u32 %s48, 1
        %s904 = scalar_lea.sflag [#allocation6], %s903
        %s905 = sand.u32 %s176, 1
        %s906 = scalar_lea.vmem [#allocation7], %s905
        %p907 = pneg %p189
        %p908 = pneg %p186
        %p909 = pneg %p210
        %p910 = pneg %p207
        %p911 = pneg %p231
        %p912 = pneg %p228
        %p913 = pneg %p252
        %p914 = pneg %p249
        %p915 = pneg %p273
        %p916 = pneg %p270
        %p917 = pneg %p294
        %p918 = pneg %p291
        %p919 = pneg %p315
        %p920 = pneg %p312
        %p921 = pneg %p336
        %p922 = pneg %p333
        %p923 = pneg %p357
        %p924 = pneg %p354
        %p925 = pneg %p378
        %p926 = pneg %p375
        %p927 = pneg %p399
        %p928 = pneg %p396
        %p929 = pneg %p420
        %p930 = pneg %p417
        %p931 = pneg %p441
        %p932 = pneg %p438
        %p933 = pneg %p462
        %p934 = pneg %p459
        %p935 = pneg %p483
        %p936 = pneg %p480
        %p937 = pneg %p504
        %p938 = pneg %p501
        %p939 = pneg %p525
        %p940 = pneg %p522
        %p941 = pneg %p553
        %p942 = pneg %p550
        %s943 = sand.u32 %s540, 1
        %s944 = scalar_lea.sflag [#allocation4], %s943
        %s945 = sand.u32 %s540, 1
        %s946 = smul.addr %s945, 8
        %s947 = scalar_lea.vmem [#allocation22], %s946
        %p948 = pneg %p581
        %p949 = pneg %p578
        %s950 = sand.u32 %s568, 1
        %s951 = sand.u32 %s568, 1
        %s952 = smul.addr %s951, 32
        %s953 = scalar_lea.vmem [#allocation23], %s952
        %p954 = scmp.lt.s32.totalorder %s52, 1
        %s955 = scalar_select %p954, %s52, 1
        %p956 = scmp.lt.s32.totalorder %s53, 1
        %s957 = scalar_select %p956, %s53, 1
        %s958 = smul.addr %s955, 2
        %s959 = sadd.s32 %s957, %s958
        %s960 = smul.addr %s959, 8
        %s961 = scalar_lea.vmem %s0, %s960
        %p962 = scmp.lt.s32.totalorder %s52, 1
        %s963 = scalar_select %p962, %s52, 1
        %s964 = smul.addr %s963, 8
        %s965 = scalar_lea.vmem %s2, %s964
        %v967 = vld [vmem:[%s961] sm:$0xff]
        %v968 = vld [vmem:[%s815] sm:$0xff]
        %v969 = vld [vmem:[%s815 + $0x8] sm:$0xff]
        %v970 = vld [vmem:[%s965] sm:$0xff]
        %v971 = vld [vmem:[%s824] sm:$0xff]
        %v972 = vld [vmem:[%s832] sm:$0x1]
        %v973 = vpack.c.bf16 %v967, %v967
        %v974 = vpack.c.bf16 %v969, %v968
        %v975 = vld [vmem:[#allocation8] sm:$0xf]
        %v976 = vld [vmem:[#allocation8 + $0x4] sm:$0xf]
        %v977 = vld [vmem:[#allocation8 + $0x8] sm:$0xf]
        %v978 = vld [vmem:[#allocation8 + $0xc] sm:$0xf]
        %v979 = vld [vmem:[#allocation10] sm:$0x1]
        %v981 = vlaneseq
        %v982 = vshrl.u32 %v981, 7
        %v983 = vsub.s32 0, %v982
        %v984 = vrot.slane %v979, %v983
        %v990 = vunpack.c.l.b16 %v975
        %v991 = vunpack.c.l.b16 %v976
        %v992 = vunpack.c.l.b16 %v977
        %v993 = vunpack.c.l.b16 %v978
        %v994 = vpack.c.b16 %v991, %v990
        %v995 = vpack.c.b16 %v993, %v992
        %vm998 = vcmask 261120
        %v1000 = vsel %vm998, %v973, 0
        %1002 = vmatprep.subr.bf16.mxu0 0
        %1003 = vmatpush1.bf16.msra.mxu0 %v994
        %1004 = vmatprep.subr.bf16.mxu0 0
        %1005 = vmatpush1.bf16.msra.mxu0 %v995
        %1006 = vmatprep.subr.bf16.mxu0 0
        %1007 = vmatpush1.bf16.msra.mxu0 0
        %1008 = vmatprep.subr.bf16.mxu0 0
        %1009 = vmatpush1.bf16.msra.mxu0 0
        %1010 = vmatprep.subr.bf16.mxu0 0
        %1011 = vmatpush1.bf16.msra.mxu0 0
        %1012 = vmatprep.subr.bf16.mxu0 0
        %1013 = vmatpush1.bf16.msra.mxu0 0
        %1014 = vmatprep.subr.bf16.mxu0 0
        %1015 = vmatpush1.bf16.msra.mxu0 0
        %1016 = vmatprep.subr.bf16.mxu0 0
        %1017 = vmatpush1.bf16.msra.mxu0 0
        %1018 = vmatprep.subr.bf16.mxu0 0
        %1019 = vmatpush1.bf16.msra.mxu0 0
        %1020 = vmatprep.subr.bf16.mxu0 0
        %1021 = vmatpush1.bf16.msra.mxu0 0
        %1022 = vmatprep.subr.bf16.mxu0 0
        %1023 = vmatpush1.bf16.msra.mxu0 0
        %1024 = vmatprep.subr.bf16.mxu0 0
        %1025 = vmatpush1.bf16.msra.mxu0 0
        %1026 = vmatprep.subr.bf16.mxu0 0
        %1027 = vmatpush1.bf16.msra.mxu0 0
        %1028 = vmatprep.subr.bf16.mxu0 0
        %1029 = vmatpush1.bf16.msra.mxu0 0
        %1030 = vmatprep.subr.bf16.mxu0 0
        %1031 = vmatpush1.bf16.msra.mxu0 0
        %1032 = vmatprep.subr.bf16.mxu0 0
        %1033 = vmatpush1.bf16.msra.mxu0 0
        %1034 = vmatprep.mubr.bf16.mxu0 0
        %1035 = vmatmul.mubr.bf16.gmra.mrb[0].mxu0 %v1000
        %v1036 = vpop.f32.mrb[0].mxu0
        %v1037 = vadd.f32 %v984, %v1036
        %v1038 = vpop.f32.mrb[0].mxu0
        %v1039 = vpop.f32.mrb[0].mxu0
        %v1040 = vpop.f32.mrb[0].mxu0
        %1041 = vdwg.mxu0
        %v1042 = vmul.f32 %v1037, 0.35355338
        %1043 = vrot.lane.b32.xlu0 %v994, 96
        %v1044 = vpop.permute.xlu0 %1043
        %1045 = vrot.lane.b32.xlu0 %v995, 96
        %v1046 = vpop.permute.xlu0 %1045
        %1049 = vrot.lane.b32.xlu0 %v984, 96
        %v1050 = vpop.permute.xlu0 %1049
        %v1053 = vsel %vm998, %v974, 0
        %1055 = vmatprep.subr.bf16.mxu0 0
        %1056 = vmatpush1.bf16.msra.mxu0 %v1044
        %1057 = vmatprep.subr.bf16.mxu0 0
        %1058 = vmatpush1.bf16.msra.mxu0 %v1046
        %1059 = vmatprep.subr.bf16.mxu0 0
        %1060 = vmatpush1.bf16.msra.mxu0 0
        %1061 = vmatprep.subr.bf16.mxu0 0
        %1062 = vmatpush1.bf16.msra.mxu0 0
        %1063 = vmatprep.subr.bf16.mxu0 0
        %1064 = vmatpush1.bf16.msra.mxu0 0
        %1065 = vmatprep.subr.bf16.mxu0 0
        %1066 = vmatpush1.bf16.msra.mxu0 0
        %1067 = vmatprep.subr.bf16.mxu0 0
        %1068 = vmatpush1.bf16.msra.mxu0 0
        %1069 = vmatprep.subr.bf16.mxu0 0
        %1070 = vmatpush1.bf16.msra.mxu0 0
        %1071 = vmatprep.subr.bf16.mxu0 0
        %1072 = vmatpush1.bf16.msra.mxu0 0
        %1073 = vmatprep.subr.bf16.mxu0 0
        %1074 = vmatpush1.bf16.msra.mxu0 0
        %1075 = vmatprep.subr.bf16.mxu0 0
        %1076 = vmatpush1.bf16.msra.mxu0 0
        %1077 = vmatprep.subr.bf16.mxu0 0
        %1078 = vmatpush1.bf16.msra.mxu0 0
        %1079 = vmatprep.subr.bf16.mxu0 0
        %1080 = vmatpush1.bf16.msra.mxu0 0
        %1081 = vmatprep.subr.bf16.mxu0 0
        %1082 = vmatpush1.bf16.msra.mxu0 0
        %1083 = vmatprep.subr.bf16.mxu0 0
        %1084 = vmatpush1.bf16.msra.mxu0 0
        %1085 = vmatprep.subr.bf16.mxu0 0
        %1086 = vmatpush1.bf16.msra.mxu0 0
        %1087 = vmatprep.mubr.bf16.mxu0 0
        %1088 = vmatmul.mubr.bf16.gmra.mrb[0].mxu0 %v1053
        %v1089 = vpop.f32.mrb[0].mxu0
        %v1090 = vadd.f32 %v1050, %v1089
        %v1091 = vpop.f32.mrb[0].mxu0
        %v1092 = vpop.f32.mrb[0].mxu0
        %v1093 = vadd.f32 %v1050, %v1092
        %v1094 = vpop.f32.mrb[0].mxu0
        %1095 = vdwg.mxu0
        %v1096 = vpack.c.bf16 %v1042, %v1042
        %v1097 = vpack.c.bf16 %v1093, %v1090
        %vm1098 = vcmask 64512
        %v1100 = vsel %vm1098, %v1096, 0
        %v1103 = vsel %vm1098, %v1097, 0
        %1105 = vmatprep.subr.bf16.mxu0 0
        %1106 = vmatpush1.bf16.xpose.msra.mxu0 %v1103
        %1107 = vmatprep.subr.bf16.mxu0 0
        %1108 = vmatpush1.bf16.xpose.msra.mxu0 0
        %1109 = vmatprep.subr.bf16.mxu0 0
        %1110 = vmatpush1.bf16.xpose.msra.mxu0 0
        %1111 = vmatprep.subr.bf16.mxu0 0
        %1112 = vmatpush1.bf16.xpose.msra.mxu0 0
        %1113 = vmatprep.subr.bf16.mxu0 0
        %1114 = vmatpush1.bf16.xpose.msra.mxu0 0
        %1115 = vmatprep.subr.bf16.mxu0 0
        %1116 = vmatpush1.bf16.xpose.msra.mxu0 0
        %1117 = vmatprep.subr.bf16.mxu0 0
        %1118 = vmatpush1.bf16.xpose.msra.mxu0 0
        %1119 = vmatprep.subr.bf16.mxu0 0
        %1120 = vmatpush1.bf16.xpose.msra.mxu0 0
        %1121 = vmatprep.subr.bf16.mxu0 0
        %1122 = vmatpush1.bf16.xpose.msra.mxu0 0
        %1123 = vmatprep.subr.bf16.mxu0 0
        %1124 = vmatpush1.bf16.xpose.msra.mxu0 0
        %1125 = vmatprep.subr.bf16.mxu0 0
        %1126 = vmatpush1.bf16.xpose.msra.mxu0 0
        %1127 = vmatprep.subr.bf16.mxu0 0
        %1128 = vmatpush1.bf16.xpose.msra.mxu0 0
        %1129 = vmatprep.subr.bf16.mxu0 0
        %1130 = vmatpush1.bf16.xpose.msra.mxu0 0
        %1131 = vmatprep.subr.bf16.mxu0 0
        %1132 = vmatpush1.bf16.xpose.msra.mxu0 0
        %1133 = vmatprep.subr.bf16.mxu0 0
        %1134 = vmatpush1.bf16.xpose.msra.mxu0 0
        %1135 = vmatprep.subr.bf16.mxu0 0
        %1136 = vmatpush1.bf16.xpose.msra.mxu0 0
        %1137 = vmatprep.mubr.bf16.mxu0 0
        %1138 = vmatmul.mubr.bf16.gmra.mrb[0].mxu0 %v1100
        %v1139 = vpop.f32.mrb[0].mxu0
        %v1140 = vadd.f32 %v971, %v1139
        %v1141 = vpop.f32.mrb[0].mxu0
        %v1142 = vpop.f32.mrb[0].mxu0
        %v1143 = vpop.f32.mrb[0].mxu0
        %1144 = vdwg.mxu0
        %vm1145 = vcmask 130048
        %v1146 = vsel %vm1145, %v1140, -inf
        %1147 = vmax.xlane.f32.xlu0 %v1146
        %v1148 = vpop.xlane.xlu0 %1147
        %v1149 = vsub.f32 %v1140, %v1148
        %v1150 = vmul.f32 %v1149, 1.442695
        %v1151 = vpow.pop %v1150
        %v1152 = vsel %vm1145, %v1151, 0.0
        %1153 = vadd.xlane.f32.xlu0 %v1152
        %v1154 = vpop.xlane.xlu0 %1153
        %v1155 = vrcp.pop %v1154
        %v1156 = vmul.f32 %v1151, %v1155
        %v1157 = vpack.c.bf16 %v1156, %v1156
        %1159 = vrot.lane.b32.xlu0 %v1097, 96
        %v1160 = vpop.permute.xlu0 %1159
        %v1163 = vsel %vm1145, %v1157, 0
        %1165 = vmatprep.subr.bf16.mxu0 0
        %1166 = vmatpush1.bf16.msra.mxu0 %v1160
        %1167 = vmatprep.subr.bf16.mxu0 0
        %1168 = vmatpush1.bf16.msra.mxu0 0
        %1169 = vmatprep.subr.bf16.mxu0 0
        %1170 = vmatpush1.bf16.msra.mxu0 0
        %1171 = vmatprep.subr.bf16.mxu0 0
        %1172 = vmatpush1.bf16.msra.mxu0 0
        %1173 = vmatprep.subr.bf16.mxu0 0
        %1174 = vmatpush1.bf16.msra.mxu0 0
        %1175 = vmatprep.subr.bf16.mxu0 0
        %1176 = vmatpush1.bf16.msra.mxu0 0
        %1177 = vmatprep.subr.bf16.mxu0 0
        %1178 = vmatpush1.bf16.msra.mxu0 0
        %1179 = vmatprep.subr.bf16.mxu0 0
        %1180 = vmatpush1.bf16.msra.mxu0 0
        %1181 = vmatprep.subr.bf16.mxu0 0
        %1182 = vmatpush1.bf16.msra.mxu0 0
        %1183 = vmatprep.subr.bf16.mxu0 0
        %1184 = vmatpush1.bf16.msra.mxu0 0
        %1185 = vmatprep.subr.bf16.mxu0 0
        %1186 = vmatpush1.bf16.msra.mxu0 0
        %1187 = vmatprep.subr.bf16.mxu0 0
        %1188 = vmatpush1.bf16.msra.mxu0 0
        %1189 = vmatprep.subr.bf16.mxu0 0
        %1190 = vmatpush1.bf16.msra.mxu0 0
        %1191 = vmatprep.subr.bf16.mxu0 0
        %1192 = vmatpush1.bf16.msra.mxu0 0
        %1193 = vmatprep.subr.bf16.mxu0 0
        %1194 = vmatpush1.bf16.msra.mxu0 0
        %1195 = vmatprep.subr.bf16.mxu0 0
        %1196 = vmatpush1.bf16.msra.mxu0 0
        %1197 = vmatprep.mubr.bf16.mxu0 0
        %1198 = vmatmul.mubr.bf16.gmra.mrb[0].mxu0 %v1163
        %v1199 = vpop.f32.mrb[0].mxu0
        %v1200 = vadd.f32 0.0, %v1199
        %v1201 = vpop.f32.mrb[0].mxu0
        %v1202 = vpop.f32.mrb[0].mxu0
        %v1203 = vpop.f32.mrb[0].mxu0
        %1204 = vdwg.mxu0
        %1206 = vrot.lane.b32.xlu0 %v1096, 120
        %v1207 = vpop.permute.xlu0 %1206
        %1208 = vrot.lane.b32.xlu0 %v1097, 120
        %v1209 = vpop.permute.xlu0 %1208
        %v1211 = vsel %vm1098, %v1207, 0
        %v1214 = vsel %vm1098, %v1209, 0
        %1216 = vmatprep.subr.bf16.mxu0 0
        %1217 = vmatpush1.bf16.xpose.msra.mxu0 %v1214
        %1218 = vmatprep.subr.bf16.mxu0 0
        %1219 = vmatpush1.bf16.xpose.msra.mxu0 0
        %1220 = vmatprep.subr.bf16.mxu0 0
        %1221 = vmatpush1.bf16.xpose.msra.mxu0 0
        %1222 = vmatprep.subr.bf16.mxu0 0
        %1223 = vmatpush1.bf16.xpose.msra.mxu0 0
        %1224 = vmatprep.subr.bf16.mxu0 0
        %1225 = vmatpush1.bf16.xpose.msra.mxu0 0
        %1226 = vmatprep.subr.bf16.mxu0 0
        %1227 = vmatpush1.bf16.xpose.msra.mxu0 0
        %1228 = vmatprep.subr.bf16.mxu0 0
        %1229 = vmatpush1.bf16.xpose.msra.mxu0 0
        %1230 = vmatprep.subr.bf16.mxu0 0
        %1231 = vmatpush1.bf16.xpose.msra.mxu0 0
        %1232 = vmatprep.subr.bf16.mxu0 0
        %1233 = vmatpush1.bf16.xpose.msra.mxu0 0
        %1234 = vmatprep.subr.bf16.mxu0 0
        %1235 = vmatpush1.bf16.xpose.msra.mxu0 0
        %1236 = vmatprep.subr.bf16.mxu0 0
        %1237 = vmatpush1.bf16.xpose.msra.mxu0 0
        %1238 = vmatprep.subr.bf16.mxu0 0
        %1239 = vmatpush1.bf16.xpose.msra.mxu0 0
        %1240 = vmatprep.subr.bf16.mxu0 0
        %1241 = vmatpush1.bf16.xpose.msra.mxu0 0
        %1242 = vmatprep.subr.bf16.mxu0 0
        %1243 = vmatpush1.bf16.xpose.msra.mxu0 0
        %1244 = vmatprep.subr.bf16.mxu0 0
        %1245 = vmatpush1.bf16.xpose.msra.mxu0 0
        %1246 = vmatprep.subr.bf16.mxu0 0
        %1247 = vmatpush1.bf16.xpose.msra.mxu0 0
        %1248 = vmatprep.mubr.bf16.mxu0 0
        %1249 = vmatmul.mubr.bf16.gmra.mrb[0].mxu0 %v1211
        %v1250 = vpop.f32.mrb[0].mxu0
        %v1251 = vadd.f32 %v971, %v1250
        %v1252 = vpop.f32.mrb[0].mxu0
        %v1253 = vpop.f32.mrb[0].mxu0
        %v1254 = vpop.f32.mrb[0].mxu0
        %1255 = vdwg.mxu0
        %v1256 = vsel %vm1145, %v1251, -inf
        %1257 = vmax.xlane.f32.xlu0 %v1256
        %v1258 = vpop.xlane.xlu0 %1257
        %v1259 = vsub.f32 %v1251, %v1258
        %v1260 = vmul.f32 %v1259, 1.442695
        %v1261 = vpow.pop %v1260
        %v1262 = vsel %vm1145, %v1261, 0.0
        %1263 = vadd.xlane.f32.xlu0 %v1262
        %v1264 = vpop.xlane.xlu0 %1263
        %v1265 = vrcp.pop %v1264
        %v1266 = vmul.f32 %v1261, %v1265
        %v1267 = vpack.c.bf16 %v1266, %v1266
        %1268 = vrot.lane.b32.xlu0 %v1097, 88
        %v1269 = vpop.permute.xlu0 %1268
        %v1272 = vsel %vm1145, %v1267, 0
        %1274 = vmatprep.subr.bf16.mxu0 0
        %1275 = vmatpush1.bf16.msra.mxu0 %v1269
        %1276 = vmatprep.subr.bf16.mxu0 0
        %1277 = vmatpush1.bf16.msra.mxu0 0
        %1278 = vmatprep.subr.bf16.mxu0 0
        %1279 = vmatpush1.bf16.msra.mxu0 0
        %1280 = vmatprep.subr.bf16.mxu0 0
        %1281 = vmatpush1.bf16.msra.mxu0 0
        %1282 = vmatprep.subr.bf16.mxu0 0
        %1283 = vmatpush1.bf16.msra.mxu0 0
        %1284 = vmatprep.subr.bf16.mxu0 0
        %1285 = vmatpush1.bf16.msra.mxu0 0
        %1286 = vmatprep.subr.bf16.mxu0 0
        %1287 = vmatpush1.bf16.msra.mxu0 0
        %1288 = vmatprep.subr.bf16.mxu0 0
        %1289 = vmatpush1.bf16.msra.mxu0 0
        %1290 = vmatprep.subr.bf16.mxu0 0
        %1291 = vmatpush1.bf16.msra.mxu0 0
        %1292 = vmatprep.subr.bf16.mxu0 0
        %1293 = vmatpush1.bf16.msra.mxu0 0
        %1294 = vmatprep.subr.bf16.mxu0 0
        %1295 = vmatpush1.bf16.msra.mxu0 0
        %1296 = vmatprep.subr.bf16.mxu0 0
        %1297 = vmatpush1.bf16.msra.mxu0 0
        %1298 = vmatprep.subr.bf16.mxu0 0
        %1299 = vmatpush1.bf16.msra.mxu0 0
        %1300 = vmatprep.subr.bf16.mxu0 0
        %1301 = vmatpush1.bf16.msra.mxu0 0
        %1302 = vmatprep.subr.bf16.mxu0 0
        %1303 = vmatpush1.bf16.msra.mxu0 0
        %1304 = vmatprep.subr.bf16.mxu0 0
        %1305 = vmatpush1.bf16.msra.mxu0 0
        %1306 = vmatprep.mubr.bf16.mxu0 0
        %1307 = vmatmul.mubr.bf16.gmra.mrb[0].mxu0 %v1272
        %v1308 = vpop.f32.mrb[0].mxu0
        %v1309 = vadd.f32 0.0, %v1308
        %v1310 = vpop.f32.mrb[0].mxu0
        %v1311 = vpop.f32.mrb[0].mxu0
        %v1312 = vpop.f32.mrb[0].mxu0
        %1313 = vdwg.mxu0
        %1314 = vrot.lane.b32.xlu0 %v1096, 112
        %v1315 = vpop.permute.xlu0 %1314
        %1316 = vrot.lane.b32.xlu0 %v1097, 112
        %v1317 = vpop.permute.xlu0 %1316
        %v1319 = vsel %vm1098, %v1315, 0
        %v1322 = vsel %vm1098, %v1317, 0
        %1324 = vmatprep.subr.bf16.mxu0 0
        %1325 = vmatpush1.bf16.xpose.msra.mxu0 %v1322
        %1326 = vmatprep.subr.bf16.mxu0 0
        %1327 = vmatpush1.bf16.xpose.msra.mxu0 0
        %1328 = vmatprep.subr.bf16.mxu0 0
        %1329 = vmatpush1.bf16.xpose.msra.mxu0 0
        %1330 = vmatprep.subr.bf16.mxu0 0
        %1331 = vmatpush1.bf16.xpose.msra.mxu0 0
        %1332 = vmatprep.subr.bf16.mxu0 0
        %1333 = vmatpush1.bf16.xpose.msra.mxu0 0
        %1334 = vmatprep.subr.bf16.mxu0 0
        %1335 = vmatpush1.bf16.xpose.msra.mxu0 0
        %1336 = vmatprep.subr.bf16.mxu0 0
        %1337 = vmatpush1.bf16.xpose.msra.mxu0 0
        %1338 = vmatprep.subr.bf16.mxu0 0
        %1339 = vmatpush1.bf16.xpose.msra.mxu0 0
        %1340 = vmatprep.subr.bf16.mxu0 0
        %1341 = vmatpush1.bf16.xpose.msra.mxu0 0
        %1342 = vmatprep.subr.bf16.mxu0 0
        %1343 = vmatpush1.bf16.xpose.msra.mxu0 0
        %1344 = vmatprep.subr.bf16.mxu0 0
        %1345 = vmatpush1.bf16.xpose.msra.mxu0 0
        %1346 = vmatprep.subr.bf16.mxu0 0
        %1347 = vmatpush1.bf16.xpose.msra.mxu0 0
        %1348 = vmatprep.subr.bf16.mxu0 0
        %1349 = vmatpush1.bf16.xpose.msra.mxu0 0
        %1350 = vmatprep.subr.bf16.mxu0 0
        %1351 = vmatpush1.bf16.xpose.msra.mxu0 0
        %1352 = vmatprep.subr.bf16.mxu0 0
        %1353 = vmatpush1.bf16.xpose.msra.mxu0 0
        %1354 = vmatprep.subr.bf16.mxu0 0
        %1355 = vmatpush1.bf16.xpose.msra.mxu0 0
        %1356 = vmatprep.mubr.bf16.mxu0 0
        %1357 = vmatmul.mubr.bf16.gmra.mrb[0].mxu0 %v1319
        %v1358 = vpop.f32.mrb[0].mxu0
        %v1359 = vadd.f32 %v971, %v1358
        %v1360 = vpop.f32.mrb[0].mxu0
        %v1361 = vpop.f32.mrb[0].mxu0
        %v1362 = vpop.f32.mrb[0].mxu0
        %1363 = vdwg.mxu0
        %v1364 = vsel %vm1145, %v1359, -inf
        %1365 = vmax.xlane.f32.xlu0 %v1364
        %v1366 = vpop.xlane.xlu0 %1365
        %v1367 = vsub.f32 %v1359, %v1366
        %v1368 = vmul.f32 %v1367, 1.442695
        %v1369 = vpow.pop %v1368
        %v1370 = vsel %vm1145, %v1369, 0.0
        %1371 = vadd.xlane.f32.xlu0 %v1370
        %v1372 = vpop.xlane.xlu0 %1371
        %v1373 = vrcp.pop %v1372
        %v1374 = vmul.f32 %v1369, %v1373
        %v1375 = vpack.c.bf16 %v1374, %v1374
        %1376 = vrot.lane.b32.xlu0 %v1097, 80
        %v1377 = vpop.permute.xlu0 %1376
        %v1380 = vsel %vm1145, %v1375, 0
        %1382 = vmatprep.subr.bf16.mxu0 0
        %1383 = vmatpush1.bf16.msra.mxu0 %v1377
        %1384 = vmatprep.subr.bf16.mxu0 0
        %1385 = vmatpush1.bf16.msra.mxu0 0
        %1386 = vmatprep.subr.bf16.mxu0 0
        %1387 = vmatpush1.bf16.msra.mxu0 0
        %1388 = vmatprep.subr.bf16.mxu0 0
        %1389 = vmatpush1.bf16.msra.mxu0 0
        %1390 = vmatprep.subr.bf16.mxu0 0
        %1391 = vmatpush1.bf16.msra.mxu0 0
        %1392 = vmatprep.subr.bf16.mxu0 0
        %1393 = vmatpush1.bf16.msra.mxu0 0
        %1394 = vmatprep.subr.bf16.mxu0 0
        %1395 = vmatpush1.bf16.msra.mxu0 0
        %1396 = vmatprep.subr.bf16.mxu0 0
        %1397 = vmatpush1.bf16.msra.mxu0 0
        %1398 = vmatprep.subr.bf16.mxu0 0
        %1399 = vmatpush1.bf16.msra.mxu0 0
        %1400 = vmatprep.subr.bf16.mxu0 0
        %1401 = vmatpush1.bf16.msra.mxu0 0
        %1402 = vmatprep.subr.bf16.mxu0 0
        %1403 = vmatpush1.bf16.msra.mxu0 0
        %1404 = vmatprep.subr.bf16.mxu0 0
        %1405 = vmatpush1.bf16.msra.mxu0 0
        %1406 = vmatprep.subr.bf16.mxu0 0
        %1407 = vmatpush1.bf16.msra.mxu0 0
        %1408 = vmatprep.subr.bf16.mxu0 0
        %1409 = vmatpush1.bf16.msra.mxu0 0
        %1410 = vmatprep.subr.bf16.mxu0 0
        %1411 = vmatpush1.bf16.msra.mxu0 0
        %1412 = vmatprep.subr.bf16.mxu0 0
        %1413 = vmatpush1.bf16.msra.mxu0 0
        %1414 = vmatprep.mubr.bf16.mxu0 0
        %1415 = vmatmul.mubr.bf16.gmra.mrb[0].mxu0 %v1380
        %v1416 = vpop.f32.mrb[0].mxu0
        %v1417 = vadd.f32 0.0, %v1416
        %v1418 = vpop.f32.mrb[0].mxu0
        %v1419 = vpop.f32.mrb[0].mxu0
        %v1420 = vpop.f32.mrb[0].mxu0
        %1421 = vdwg.mxu0
        %1422 = vrot.lane.b32.xlu0 %v1096, 104
        %v1423 = vpop.permute.xlu0 %1422
        %1424 = vrot.lane.b32.xlu0 %v1097, 104
        %v1425 = vpop.permute.xlu0 %1424
        %v1427 = vsel %vm1098, %v1423, 0
        %v1430 = vsel %vm1098, %v1425, 0
        %1432 = vmatprep.subr.bf16.mxu0 0
        %1433 = vmatpush1.bf16.xpose.msra.mxu0 %v1430
        %1434 = vmatprep.subr.bf16.mxu0 0
        %1435 = vmatpush1.bf16.xpose.msra.mxu0 0
        %1436 = vmatprep.subr.bf16.mxu0 0
        %1437 = vmatpush1.bf16.xpose.msra.mxu0 0
        %1438 = vmatprep.subr.bf16.mxu0 0
        %1439 = vmatpush1.bf16.xpose.msra.mxu0 0
        %1440 = vmatprep.subr.bf16.mxu0 0
        %1441 = vmatpush1.bf16.xpose.msra.mxu0 0
        %1442 = vmatprep.subr.bf16.mxu0 0
        %1443 = vmatpush1.bf16.xpose.msra.mxu0 0
        %1444 = vmatprep.subr.bf16.mxu0 0
        %1445 = vmatpush1.bf16.xpose.msra.mxu0 0
        %1446 = vmatprep.subr.bf16.mxu0 0
        %1447 = vmatpush1.bf16.xpose.msra.mxu0 0
        %1448 = vmatprep.subr.bf16.mxu0 0
        %1449 = vmatpush1.bf16.xpose.msra.mxu0 0
        %1450 = vmatprep.subr.bf16.mxu0 0
        %1451 = vmatpush1.bf16.xpose.msra.mxu0 0
        %1452 = vmatprep.subr.bf16.mxu0 0
        %1453 = vmatpush1.bf16.xpose.msra.mxu0 0
        %1454 = vmatprep.subr.bf16.mxu0 0
        %1455 = vmatpush1.bf16.xpose.msra.mxu0 0
        %1456 = vmatprep.subr.bf16.mxu0 0
        %1457 = vmatpush1.bf16.xpose.msra.mxu0 0
        %1458 = vmatprep.subr.bf16.mxu0 0
        %1459 = vmatpush1.bf16.xpose.msra.mxu0 0
        %1460 = vmatprep.subr.bf16.mxu0 0
        %1461 = vmatpush1.bf16.xpose.msra.mxu0 0
        %1462 = vmatprep.subr.bf16.mxu0 0
        %1463 = vmatpush1.bf16.xpose.msra.mxu0 0
        %1464 = vmatprep.mubr.bf16.mxu0 0
        %1465 = vmatmul.mubr.bf16.gmra.mrb[0].mxu0 %v1427
        %v1466 = vpop.f32.mrb[0].mxu0
        %v1467 = vadd.f32 %v971, %v1466
        %v1468 = vpop.f32.mrb[0].mxu0
        %v1469 = vpop.f32.mrb[0].mxu0
        %v1470 = vpop.f32.mrb[0].mxu0
        %1471 = vdwg.mxu0
        %v1472 = vsel %vm1145, %v1467, -inf
        %1473 = vmax.xlane.f32.xlu0 %v1472
        %v1474 = vpop.xlane.xlu0 %1473
        %v1475 = vsub.f32 %v1467, %v1474
        %v1476 = vmul.f32 %v1475, 1.442695
        %v1477 = vpow.pop %v1476
        %v1478 = vsel %vm1145, %v1477, 0.0
        %1479 = vadd.xlane.f32.xlu0 %v1478
        %v1480 = vpop.xlane.xlu0 %1479
        %v1481 = vrcp.pop %v1480
        %v1482 = vmul.f32 %v1477, %v1481
        %v1483 = vpack.c.bf16 %v1482, %v1482
        %1484 = vrot.lane.b32.xlu0 %v1097, 72
        %v1485 = vpop.permute.xlu0 %1484
        %v1488 = vsel %vm1145, %v1483, 0
        %1490 = vmatprep.subr.bf16.mxu0 0
        %1491 = vmatpush1.bf16.msra.mxu0 %v1485
        %1492 = vmatprep.subr.bf16.mxu0 0
        %1493 = vmatpush1.bf16.msra.mxu0 0
        %1494 = vmatprep.subr.bf16.mxu0 0
        %1495 = vmatpush1.bf16.msra.mxu0 0
        %1496 = vmatprep.subr.bf16.mxu0 0
        %1497 = vmatpush1.bf16.msra.mxu0 0
        %1498 = vmatprep.subr.bf16.mxu0 0
        %1499 = vmatpush1.bf16.msra.mxu0 0
        %1500 = vmatprep.subr.bf16.mxu0 0
        %1501 = vmatpush1.bf16.msra.mxu0 0
        %1502 = vmatprep.subr.bf16.mxu0 0
        %1503 = vmatpush1.bf16.msra.mxu0 0
        %1504 = vmatprep.subr.bf16.mxu0 0
        %1505 = vmatpush1.bf16.msra.mxu0 0
        %1506 = vmatprep.subr.bf16.mxu0 0
        %1507 = vmatpush1.bf16.msra.mxu0 0
        %1508 = vmatprep.subr.bf16.mxu0 0
        %1509 = vmatpush1.bf16.msra.mxu0 0
        %1510 = vmatprep.subr.bf16.mxu0 0
        %1511 = vmatpush1.bf16.msra.mxu0 0
        %1512 = vmatprep.subr.bf16.mxu0 0
        %1513 = vmatpush1.bf16.msra.mxu0 0
        %1514 = vmatprep.subr.bf16.mxu0 0
        %1515 = vmatpush1.bf16.msra.mxu0 0
        %1516 = vmatprep.subr.bf16.mxu0 0
        %1517 = vmatpush1.bf16.msra.mxu0 0
        %1518 = vmatprep.subr.bf16.mxu0 0
        %1519 = vmatpush1.bf16.msra.mxu0 0
        %1520 = vmatprep.subr.bf16.mxu0 0
        %1521 = vmatpush1.bf16.msra.mxu0 0
        %1522 = vmatprep.mubr.bf16.mxu0 0
        %1523 = vmatmul.mubr.bf16.gmra.mrb[0].mxu0 %v1488
        %v1524 = vpop.f32.mrb[0].mxu0
        %v1525 = vadd.f32 0.0, %v1524
        %v1526 = vpop.f32.mrb[0].mxu0
        %v1527 = vpop.f32.mrb[0].mxu0
        %v1528 = vpop.f32.mrb[0].mxu0
        %1529 = vdwg.mxu0
        %1531 = vrot.lane.b32.xlu0 %v1309, 8
        %v1532 = vpop.permute.xlu0 %1531
        %1535 = vrot.lane.b32.xlu0 %v1417, 16
        %v1536 = vpop.permute.xlu0 %1535
        %1539 = vrot.lane.b32.xlu0 %v1525, 24
        %v1540 = vpop.permute.xlu0 %1539
        %v1542 = vsel %vm1098, %v1200, %v1532
        %v1543 = vsel %vm1145, %v1542, %v1536
        %vm1544 = vcmask 195584
        %v1545 = vsel %vm1544, %v1543, %v1540
        %v1546 = vpack.c.bf16 %v1545, %v1545
        %v1547 = vld [vmem:[#allocation11] sm:$0xf]
        %v1548 = vld [vmem:[#allocation11 + $0x4] sm:$0xf]
        %v1549 = vld [vmem:[#allocation11 + $0x8] sm:$0xf]
        %v1550 = vld [vmem:[#allocation11 + $0xc] sm:$0xf]
        %v1551 = vld [vmem:[#allocation13] sm:$0x1]
        %v1553 = vlaneseq
        %v1554 = vshrl.u32 %v1553, 7
        %v1555 = vsub.s32 0, %v1554
        %v1556 = vrot.slane %v1551, %v1555
        %v1562 = vunpack.c.l.b16 %v1547
        %v1563 = vunpack.c.l.b16 %v1548
        %v1564 = vunpack.c.l.b16 %v1549
        %v1565 = vunpack.c.l.b16 %v1550
        %v1566 = vpack.c.b16 %v1563, %v1562
        %v1567 = vpack.c.b16 %v1565, %v1564
        %v1571 = vsel %vm998, %v1546, 0
        %1573 = vmatprep.subr.bf16.mxu0 0
        %1574 = vmatpush1.bf16.msra.mxu0 %v1566
        %1575 = vmatprep.subr.bf16.mxu0 0
        %1576 = vmatpush1.bf16.msra.mxu0 %v1567
        %1577 = vmatprep.subr.bf16.mxu0 0
        %1578 = vmatpush1.bf16.msra.mxu0 0
        %1579 = vmatprep.subr.bf16.mxu0 0
        %1580 = vmatpush1.bf16.msra.mxu0 0
        %1581 = vmatprep.subr.bf16.mxu0 0
        %1582 = vmatpush1.bf16.msra.mxu0 0
        %1583 = vmatprep.subr.bf16.mxu0 0
        %1584 = vmatpush1.bf16.msra.mxu0 0
        %1585 = vmatprep.subr.bf16.mxu0 0
        %1586 = vmatpush1.bf16.msra.mxu0 0
        %1587 = vmatprep.subr.bf16.mxu0 0
        %1588 = vmatpush1.bf16.msra.mxu0 0
        %1589 = vmatprep.subr.bf16.mxu0 0
        %1590 = vmatpush1.bf16.msra.mxu0 0
        %1591 = vmatprep.subr.bf16.mxu0 0
        %1592 = vmatpush1.bf16.msra.mxu0 0
        %1593 = vmatprep.subr.bf16.mxu0 0
        %1594 = vmatpush1.bf16.msra.mxu0 0
        %1595 = vmatprep.subr.bf16.mxu0 0
        %1596 = vmatpush1.bf16.msra.mxu0 0
        %1597 = vmatprep.subr.bf16.mxu0 0
        %1598 = vmatpush1.bf16.msra.mxu0 0
        %1599 = vmatprep.subr.bf16.mxu0 0
        %1600 = vmatpush1.bf16.msra.mxu0 0
        %1601 = vmatprep.subr.bf16.mxu0 0
        %1602 = vmatpush1.bf16.msra.mxu0 0
        %1603 = vmatprep.subr.bf16.mxu0 0
        %1604 = vmatpush1.bf16.msra.mxu0 0
        %1605 = vmatprep.mubr.bf16.mxu0 0
        %1606 = vmatmul.mubr.bf16.gmra.mrb[0].mxu0 %v1571
        %v1607 = vpop.f32.mrb[0].mxu0
        %v1608 = vadd.f32 %v1556, %v1607
        %v1609 = vpop.f32.mrb[0].mxu0
        %v1610 = vpop.f32.mrb[0].mxu0
        %v1611 = vpop.f32.mrb[0].mxu0
        %1612 = vdwg.mxu0
        %v1613 = vadd.f32 %v967, %v1608
        %v1614 = vsel %vm998, %v1613, 0.0
        %1615 = vadd.xlane.f32.xlu0 %v1614
        %v1616 = vpop.xlane.xlu0 %1615
        %v1617 = vrcp.pop 32.0
        %v1618 = vmul.f32 %v1616, %v1617
        %v1619 = vsub.f32 %v1613, %v1618
        %v1620 = vmul.f32 %v1619, %v1619
        %v1621 = vsel %vm998, %v1620, 0.0
        %1622 = vadd.xlane.f32.xlu0 %v1621
        %v1623 = vpop.xlane.xlu0 %1622
        %v1624 = vmul.f32 %v1623, %v1617
        %v1625 = vld [vmem:[%s19] sm:$0x1]
        %v1626 = vld [vmem:[%s20] sm:$0x1]
        %v1627 = vadd.f32 %v1624, 1e-05
        %v1628 = vrsqrt.pop %v1627
        %v1629 = vmul.f32 %v1619, %v1628
        %v1630 = vlaneseq
        %v1631 = vshrl.u32 %v1630, 7
        %v1632 = vsub.s32 0, %v1631
        %v1633 = vrot.slane %v1625, %v1632
        %v1634 = vmul.f32 %v1629, %v1633
        %v1635 = vlaneseq
        %v1636 = vshrl.u32 %v1635, 7
        %v1637 = vsub.s32 0, %v1636
        %v1638 = vrot.slane %v1626, %v1637
        %v1639 = vadd.f32 %v1634, %v1638
        %v1640 = vpack.c.bf16 %v1639, %v1639
        %v1641 = vpack.c.bf16 %v970, %v970
        %v1642 = vld [vmem:[%s9] sm:$0xf]
        %v1643 = vld [vmem:[%s9 + $0x4] sm:$0xf]
        %v1644 = vld [vmem:[%s9 + $0x8] sm:$0xf]
        %v1645 = vld [vmem:[%s9 + $0xc] sm:$0xf]
        %v1646 = vld [vmem:[#allocation14] sm:$0x1]
        %v1648 = vlaneseq
        %v1649 = vshrl.u32 %v1648, 7
        %v1650 = vsub.s32 0, %v1649
        %v1651 = vrot.slane %v1646, %v1650
        %v1657 = vunpack.c.l.b16 %v1642
        %v1658 = vunpack.c.l.b16 %v1643
        %v1659 = vunpack.c.l.b16 %v1644
        %v1660 = vunpack.c.l.b16 %v1645
        %v1661 = vpack.c.b16 %v1658, %v1657
        %v1662 = vpack.c.b16 %v1660, %v1659
        %v1666 = vsel %vm998, %v1640, 0
        %1668 = vmatprep.subr.bf16.mxu0 0
        %1669 = vmatpush1.bf16.msra.mxu0 %v1661
        %1670 = vmatprep.subr.bf16.mxu0 0
        %1671 = vmatpush1.bf16.msra.mxu0 %v1662
        %1672 = vmatprep.subr.bf16.mxu0 0
        %1673 = vmatpush1.bf16.msra.mxu0 0
        %1674 = vmatprep.subr.bf16.mxu0 0
        %1675 = vmatpush1.bf16.msra.mxu0 0
        %1676 = vmatprep.subr.bf16.mxu0 0
        %1677 = vmatpush1.bf16.msra.mxu0 0
        %1678 = vmatprep.subr.bf16.mxu0 0
        %1679 = vmatpush1.bf16.msra.mxu0 0
        %1680 = vmatprep.subr.bf16.mxu0 0
        %1681 = vmatpush1.bf16.msra.mxu0 0
        %1682 = vmatprep.subr.bf16.mxu0 0
        %1683 = vmatpush1.bf16.msra.mxu0 0
        %1684 = vmatprep.subr.bf16.mxu0 0
        %1685 = vmatpush1.bf16.msra.mxu0 0
        %1686 = vmatprep.subr.bf16.mxu0 0
        %1687 = vmatpush1.bf16.msra.mxu0 0
        %1688 = vmatprep.subr.bf16.mxu0 0
        %1689 = vmatpush1.bf16.msra.mxu0 0
        %1690 = vmatprep.subr.bf16.mxu0 0
        %1691 = vmatpush1.bf16.msra.mxu0 0
        %1692 = vmatprep.subr.bf16.mxu0 0
        %1693 = vmatpush1.bf16.msra.mxu0 0
        %1694 = vmatprep.subr.bf16.mxu0 0
        %1695 = vmatpush1.bf16.msra.mxu0 0
        %1696 = vmatprep.subr.bf16.mxu0 0
        %1697 = vmatpush1.bf16.msra.mxu0 0
        %1698 = vmatprep.subr.bf16.mxu0 0
        %1699 = vmatpush1.bf16.msra.mxu0 0
        %1700 = vmatprep.mubr.bf16.mxu0 0
        %1701 = vmatmul.mubr.bf16.gmra.mrb[0].mxu0 %v1666
        %v1702 = vpop.f32.mrb[0].mxu0
        %v1703 = vadd.f32 %v1651, %v1702
        %v1704 = vpop.f32.mrb[0].mxu0
        %v1705 = vpop.f32.mrb[0].mxu0
        %v1706 = vpop.f32.mrb[0].mxu0
        %1707 = vdwg.mxu0
        %v1708 = vmul.f32 %v1703, 0.35355338
        %v1709 = vld [vmem:[#allocation16] sm:$0xf]
        %v1710 = vld [vmem:[#allocation16 + $0x4] sm:$0xf]
        %v1711 = vld [vmem:[#allocation16 + $0x8] sm:$0xf]
        %v1712 = vld [vmem:[#allocation16 + $0xc] sm:$0xf]
        %v1713 = vld [vmem:[#allocation17] sm:$0x1]
        %v1715 = vlaneseq
        %v1716 = vshrl.u32 %v1715, 7
        %v1717 = vsub.s32 0, %v1716
        %v1718 = vrot.slane %v1713, %v1717
        %v1724 = vunpack.c.l.b16 %v1709
        %v1725 = vunpack.c.l.b16 %v1710
        %v1726 = vunpack.c.l.b16 %v1711
        %v1727 = vunpack.c.l.b16 %v1712
        %v1728 = vpack.c.b16 %v1725, %v1724
        %v1729 = vpack.c.b16 %v1727, %v1726
        %v1733 = vsel %vm998, %v1641, 0
        %1735 = vmatprep.subr.bf16.mxu0 0
        %1736 = vmatpush1.bf16.msra.mxu0 %v1728
        %1737 = vmatprep.subr.bf16.mxu0 0
        %1738 = vmatpush1.bf16.msra.mxu0 %v1729
        %1739 = vmatprep.subr.bf16.mxu0 0
        %1740 = vmatpush1.bf16.msra.mxu0 0
        %1741 = vmatprep.subr.bf16.mxu0 0
        %1742 = vmatpush1.bf16.msra.mxu0 0
        %1743 = vmatprep.subr.bf16.mxu0 0
        %1744 = vmatpush1.bf16.msra.mxu0 0
        %1745 = vmatprep.subr.bf16.mxu0 0
        %1746 = vmatpush1.bf16.msra.mxu0 0
        %1747 = vmatprep.subr.bf16.mxu0 0
        %1748 = vmatpush1.bf16.msra.mxu0 0
        %1749 = vmatprep.subr.bf16.mxu0 0
        %1750 = vmatpush1.bf16.msra.mxu0 0
        %1751 = vmatprep.subr.bf16.mxu0 0
        %1752 = vmatpush1.bf16.msra.mxu0 0
        %1753 = vmatprep.subr.bf16.mxu0 0
        %1754 = vmatpush1.bf16.msra.mxu0 0
        %1755 = vmatprep.subr.bf16.mxu0 0
        %1756 = vmatpush1.bf16.msra.mxu0 0
        %1757 = vmatprep.subr.bf16.mxu0 0
        %1758 = vmatpush1.bf16.msra.mxu0 0
        %1759 = vmatprep.subr.bf16.mxu0 0
        %1760 = vmatpush1.bf16.msra.mxu0 0
        %1761 = vmatprep.subr.bf16.mxu0 0
        %1762 = vmatpush1.bf16.msra.mxu0 0
        %1763 = vmatprep.subr.bf16.mxu0 0
        %1764 = vmatpush1.bf16.msra.mxu0 0
        %1765 = vmatprep.subr.bf16.mxu0 0
        %1766 = vmatpush1.bf16.msra.mxu0 0
        %1767 = vmatprep.mubr.bf16.mxu0 0
        %1768 = vmatmul.mubr.bf16.gmra.mrb[0].mxu0 %v1733
        %v1769 = vpop.f32.mrb[0].mxu0
        %v1770 = vadd.f32 %v1718, %v1769
        %v1771 = vpop.f32.mrb[0].mxu0
        %v1772 = vpop.f32.mrb[0].mxu0
        %v1773 = vpop.f32.mrb[0].mxu0
        %1774 = vdwg.mxu0
        %v1775 = vpack.c.bf16 %v1708, %v1708
        %v1776 = vpack.c.bf16 %v1770, %v1770
        %v1778 = vlaneseq
        %v1779 = vshrl.u32 %v1778, 7
        %v1780 = vsub.s32 0, %v1779
        %v1781 = vrot.slane %v972, %v1780
        %v1784 = vsel %vm1098, %v1775, 0
        %v1787 = vsel %vm1098, %v1776, 0
        %1789 = vmatprep.subr.bf16.mxu0 0
        %1790 = vmatpush1.bf16.xpose.msra.mxu0 %v1787
        %1791 = vmatprep.subr.bf16.mxu0 0
        %1792 = vmatpush1.bf16.xpose.msra.mxu0 0
        %1793 = vmatprep.subr.bf16.mxu0 0
        %1794 = vmatpush1.bf16.xpose.msra.mxu0 0
        %1795 = vmatprep.subr.bf16.mxu0 0
        %1796 = vmatpush1.bf16.xpose.msra.mxu0 0
        %1797 = vmatprep.subr.bf16.mxu0 0
        %1798 = vmatpush1.bf16.xpose.msra.mxu0 0
        %1799 = vmatprep.subr.bf16.mxu0 0
        %1800 = vmatpush1.bf16.xpose.msra.mxu0 0
        %1801 = vmatprep.subr.bf16.mxu0 0
        %1802 = vmatpush1.bf16.xpose.msra.mxu0 0
        %1803 = vmatprep.subr.bf16.mxu0 0
        %1804 = vmatpush1.bf16.xpose.msra.mxu0 0
        %1805 = vmatprep.subr.bf16.mxu0 0
        %1806 = vmatpush1.bf16.xpose.msra.mxu0 0
        %1807 = vmatprep.subr.bf16.mxu0 0
        %1808 = vmatpush1.bf16.xpose.msra.mxu0 0
        %1809 = vmatprep.subr.bf16.mxu0 0
        %1810 = vmatpush1.bf16.xpose.msra.mxu0 0
        %1811 = vmatprep.subr.bf16.mxu0 0
        %1812 = vmatpush1.bf16.xpose.msra.mxu0 0
        %1813 = vmatprep.subr.bf16.mxu0 0
        %1814 = vmatpush1.bf16.xpose.msra.mxu0 0
        %1815 = vmatprep.subr.bf16.mxu0 0
        %1816 = vmatpush1.bf16.xpose.msra.mxu0 0
        %1817 = vmatprep.subr.bf16.mxu0 0
        %1818 = vmatpush1.bf16.xpose.msra.mxu0 0
        %1819 = vmatprep.subr.bf16.mxu0 0
        %1820 = vmatpush1.bf16.xpose.msra.mxu0 0
        %1821 = vmatprep.mubr.bf16.mxu0 0
        %1822 = vmatmul.mubr.bf16.gmra.mrb[0].mxu0 %v1784
        %v1823 = vpop.f32.mrb[0].mxu0
        %v1824 = vadd.f32 %v1781, %v1823
        %v1825 = vpop.f32.mrb[0].mxu0
        %v1826 = vpop.f32.mrb[0].mxu0
        %v1827 = vpop.f32.mrb[0].mxu0
        %1828 = vdwg.mxu0
        %v1829 = vsel %vm1098, %v1824, -inf
        %1830 = vmax.xlane.f32.xlu0 %v1829
        %v1831 = vpop.xlane.xlu0 %1830
        %v1832 = vsub.f32 %v1824, %v1831
        %v1833 = vmul.f32 %v1832, 1.442695
        %v1834 = vpow.pop %v1833
        %v1835 = vsel %vm1098, %v1834, 0.0
        %1836 = vadd.xlane.f32.xlu0 %v1835
        %v1837 = vpop.xlane.xlu0 %1836
        %v1838 = vrcp.pop %v1837
        %v1839 = vmul.f32 %v1834, %v1838
        %1840 = vst.msk [vmem:[%s953] sm:$0xff] %vm1098, %v1839
        %v1841 = vpack.c.bf16 %v1839, %v1839
        %1843 = vrot.lane.b32.xlu0 %v1776, 96
        %v1844 = vpop.permute.xlu0 %1843
        %v1846 = vsel %vm1098, %v1841, 0
        %vm1848 = vcmask 1043456
        %v1850 = vsel %vm1848, %v1844, 0
        %1852 = vmatprep.subr.bf16.mxu0 0
        %1853 = vmatpush1.bf16.msra.mxu0 %v1850
        %1854 = vmatprep.subr.bf16.mxu0 0
        %1855 = vmatpush1.bf16.msra.mxu0 0
        %1856 = vmatprep.subr.bf16.mxu0 0
        %1857 = vmatpush1.bf16.msra.mxu0 0
        %1858 = vmatprep.subr.bf16.mxu0 0
        %1859 = vmatpush1.bf16.msra.mxu0 0
        %1860 = vmatprep.subr.bf16.mxu0 0
        %1861 = vmatpush1.bf16.msra.mxu0 0
        %1862 = vmatprep.subr.bf16.mxu0 0
        %1863 = vmatpush1.bf16.msra.mxu0 0
        %1864 = vmatprep.subr.bf16.mxu0 0
        %1865 = vmatpush1.bf16.msra.mxu0 0
        %1866 = vmatprep.subr.bf16.mxu0 0
        %1867 = vmatpush1.bf16.msra.mxu0 0
        %1868 = vmatprep.subr.bf16.mxu0 0
        %1869 = vmatpush1.bf16.msra.mxu0 0
        %1870 = vmatprep.subr.bf16.mxu0 0
        %1871 = vmatpush1.bf16.msra.mxu0 0
        %1872 = vmatprep.subr.bf16.mxu0 0
        %1873 = vmatpush1.bf16.msra.mxu0 0
        %1874 = vmatprep.subr.bf16.mxu0 0
        %1875 = vmatpush1.bf16.msra.mxu0 0
        %1876 = vmatprep.subr.bf16.mxu0 0
        %1877 = vmatpush1.bf16.msra.mxu0 0
        %1878 = vmatprep.subr.bf16.mxu0 0
        %1879 = vmatpush1.bf16.msra.mxu0 0
        %1880 = vmatprep.subr.bf16.mxu0 0
        %1881 = vmatpush1.bf16.msra.mxu0 0
        %1882 = vmatprep.subr.bf16.mxu0 0
        %1883 = vmatpush1.bf16.msra.mxu0 0
        %1884 = vmatprep.mubr.bf16.mxu0 0
        %1885 = vmatmul.mubr.bf16.gmra.mrb[0].mxu0 %v1846
        %v1886 = vpop.f32.mrb[0].mxu0
        %v1887 = vadd.f32 0.0, %v1886
        %v1888 = vpop.f32.mrb[0].mxu0
        %v1889 = vpop.f32.mrb[0].mxu0
        %v1890 = vpop.f32.mrb[0].mxu0
        %1891 = vdwg.mxu0
        %1893 = vrot.lane.b32.xlu0 %v1775, 120
        %v1894 = vpop.permute.xlu0 %1893
        %1895 = vrot.lane.b32.xlu0 %v1776, 120
        %v1896 = vpop.permute.xlu0 %1895
        %v1898 = vsel %vm1098, %v1894, 0
        %v1901 = vsel %vm1098, %v1896, 0
        %1903 = vmatprep.subr.bf16.mxu0 0
        %1904 = vmatpush1.bf16.xpose.msra.mxu0 %v1901
        %1905 = vmatprep.subr.bf16.mxu0 0
        %1906 = vmatpush1.bf16.xpose.msra.mxu0 0
        %1907 = vmatprep.subr.bf16.mxu0 0
        %1908 = vmatpush1.bf16.xpose.msra.mxu0 0
        %1909 = vmatprep.subr.bf16.mxu0 0
        %1910 = vmatpush1.bf16.xpose.msra.mxu0 0
        %1911 = vmatprep.subr.bf16.mxu0 0
        %1912 = vmatpush1.bf16.xpose.msra.mxu0 0
        %1913 = vmatprep.subr.bf16.mxu0 0
        %1914 = vmatpush1.bf16.xpose.msra.mxu0 0
        %1915 = vmatprep.subr.bf16.mxu0 0
        %1916 = vmatpush1.bf16.xpose.msra.mxu0 0
        %1917 = vmatprep.subr.bf16.mxu0 0
        %1918 = vmatpush1.bf16.xpose.msra.mxu0 0
        %1919 = vmatprep.subr.bf16.mxu0 0
        %1920 = vmatpush1.bf16.xpose.msra.mxu0 0
        %1921 = vmatprep.subr.bf16.mxu0 0
        %1922 = vmatpush1.bf16.xpose.msra.mxu0 0
        %1923 = vmatprep.subr.bf16.mxu0 0
        %1924 = vmatpush1.bf16.xpose.msra.mxu0 0
        %1925 = vmatprep.subr.bf16.mxu0 0
        %1926 = vmatpush1.bf16.xpose.msra.mxu0 0
        %1927 = vmatprep.subr.bf16.mxu0 0
        %1928 = vmatpush1.bf16.xpose.msra.mxu0 0
        %1929 = vmatprep.subr.bf16.mxu0 0
        %1930 = vmatpush1.bf16.xpose.msra.mxu0 0
        %1931 = vmatprep.subr.bf16.mxu0 0
        %1932 = vmatpush1.bf16.xpose.msra.mxu0 0
        %1933 = vmatprep.subr.bf16.mxu0 0
        %1934 = vmatpush1.bf16.xpose.msra.mxu0 0
        %1935 = vmatprep.mubr.bf16.mxu0 0
        %1936 = vmatmul.mubr.bf16.gmra.mrb[0].mxu0 %v1898
        %v1937 = vpop.f32.mrb[0].mxu0
        %v1938 = vadd.f32 %v1781, %v1937
        %v1939 = vpop.f32.mrb[0].mxu0
        %v1940 = vpop.f32.mrb[0].mxu0
        %v1941 = vpop.f32.mrb[0].mxu0
        %1942 = vdwg.mxu0
        %v1943 = vsel %vm1098, %v1938, -inf
        %1944 = vmax.xlane.f32.xlu0 %v1943
        %v1945 = vpop.xlane.xlu0 %1944
        %v1946 = vsub.f32 %v1938, %v1945
        %v1947 = vmul.f32 %v1946, 1.442695
        %v1948 = vpow.pop %v1947
        %v1949 = vsel %vm1098, %v1948, 0.0
        %1950 = vadd.xlane.f32.xlu0 %v1949
        %v1951 = vpop.xlane.xlu0 %1950
        %v1952 = vrcp.pop %v1951
        %v1953 = vmul.f32 %v1948, %v1952
        %s1954 = scalar_lea.vmem %s953, 8 [#allocation23]
        %1955 = vst.msk [vmem:[%s1954] sm:$0xff] %vm1098, %v1953
        %v1956 = vpack.c.bf16 %v1953, %v1953
        %1957 = vrot.lane.b32.xlu0 %v1776, 88
        %v1958 = vpop.permute.xlu0 %1957
        %v1960 = vsel %vm1098, %v1956, 0
        %v1963 = vsel %vm1848, %v1958, 0
        %1965 = vmatprep.subr.bf16.mxu0 0
        %1966 = vmatpush1.bf16.msra.mxu0 %v1963
        %1967 = vmatprep.subr.bf16.mxu0 0
        %1968 = vmatpush1.bf16.msra.mxu0 0
        %1969 = vmatprep.subr.bf16.mxu0 0
        %1970 = vmatpush1.bf16.msra.mxu0 0
        %1971 = vmatprep.subr.bf16.mxu0 0
        %1972 = vmatpush1.bf16.msra.mxu0 0
        %1973 = vmatprep.subr.bf16.mxu0 0
        %1974 = vmatpush1.bf16.msra.mxu0 0
        %1975 = vmatprep.subr.bf16.mxu0 0
        %1976 = vmatpush1.bf16.msra.mxu0 0
        %1977 = vmatprep.subr.bf16.mxu0 0
        %1978 = vmatpush1.bf16.msra.mxu0 0
        %1979 = vmatprep.subr.bf16.mxu0 0
        %1980 = vmatpush1.bf16.msra.mxu0 0
        %1981 = vmatprep.subr.bf16.mxu0 0
        %1982 = vmatpush1.bf16.msra.mxu0 0
        %1983 = vmatprep.subr.bf16.mxu0 0
        %1984 = vmatpush1.bf16.msra.mxu0 0
        %1985 = vmatprep.subr.bf16.mxu0 0
        %1986 = vmatpush1.bf16.msra.mxu0 0
        %1987 = vmatprep.subr.bf16.mxu0 0
        %1988 = vmatpush1.bf16.msra.mxu0 0
        %1989 = vmatprep.subr.bf16.mxu0 0
        %1990 = vmatpush1.bf16.msra.mxu0 0
        %1991 = vmatprep.subr.bf16.mxu0 0
        %1992 = vmatpush1.bf16.msra.mxu0 0
        %1993 = vmatprep.subr.bf16.mxu0 0
        %1994 = vmatpush1.bf16.msra.mxu0 0
        %1995 = vmatprep.subr.bf16.mxu0 0
        %1996 = vmatpush1.bf16.msra.mxu0 0
        %1997 = vmatprep.mubr.bf16.mxu0 0
        %1998 = vmatmul.mubr.bf16.gmra.mrb[0].mxu0 %v1960
        %v1999 = vpop.f32.mrb[0].mxu0
        %v2000 = vadd.f32 0.0, %v1999
        %v2001 = vpop.f32.mrb[0].mxu0
        %v2002 = vpop.f32.mrb[0].mxu0
        %v2003 = vpop.f32.mrb[0].mxu0
        %2004 = vdwg.mxu0
        %2005 = vrot.lane.b32.xlu0 %v1775, 112
        %v2006 = vpop.permute.xlu0 %2005
        %2007 = vrot.lane.b32.xlu0 %v1776, 112
        %v2008 = vpop.permute.xlu0 %2007
        %v2010 = vsel %vm1098, %v2006, 0
        %v2013 = vsel %vm1098, %v2008, 0
        %2015 = vmatprep.subr.bf16.mxu0 0
        %2016 = vmatpush1.bf16.xpose.msra.mxu0 %v2013
        %2017 = vmatprep.subr.bf16.mxu0 0
        %2018 = vmatpush1.bf16.xpose.msra.mxu0 0
        %2019 = vmatprep.subr.bf16.mxu0 0
        %2020 = vmatpush1.bf16.xpose.msra.mxu0 0
        %2021 = vmatprep.subr.bf16.mxu0 0
        %2022 = vmatpush1.bf16.xpose.msra.mxu0 0
        %2023 = vmatprep.subr.bf16.mxu0 0
        %2024 = vmatpush1.bf16.xpose.msra.mxu0 0
        %2025 = vmatprep.subr.bf16.mxu0 0
        %2026 = vmatpush1.bf16.xpose.msra.mxu0 0
        %2027 = vmatprep.subr.bf16.mxu0 0
        %2028 = vmatpush1.bf16.xpose.msra.mxu0 0
        %2029 = vmatprep.subr.bf16.mxu0 0
        %2030 = vmatpush1.bf16.xpose.msra.mxu0 0
        %2031 = vmatprep.subr.bf16.mxu0 0
        %2032 = vmatpush1.bf16.xpose.msra.mxu0 0
        %2033 = vmatprep.subr.bf16.mxu0 0
        %2034 = vmatpush1.bf16.xpose.msra.mxu0 0
        %2035 = vmatprep.subr.bf16.mxu0 0
        %2036 = vmatpush1.bf16.xpose.msra.mxu0 0
        %2037 = vmatprep.subr.bf16.mxu0 0
        %2038 = vmatpush1.bf16.xpose.msra.mxu0 0
        %2039 = vmatprep.subr.bf16.mxu0 0
        %2040 = vmatpush1.bf16.xpose.msra.mxu0 0
        %2041 = vmatprep.subr.bf16.mxu0 0
        %2042 = vmatpush1.bf16.xpose.msra.mxu0 0
        %2043 = vmatprep.subr.bf16.mxu0 0
        %2044 = vmatpush1.bf16.xpose.msra.mxu0 0
        %2045 = vmatprep.subr.bf16.mxu0 0
        %2046 = vmatpush1.bf16.xpose.msra.mxu0 0
        %2047 = vmatprep.mubr.bf16.mxu0 0
        %2048 = vmatmul.mubr.bf16.gmra.mrb[0].mxu0 %v2010
        %v2049 = vpop.f32.mrb[0].mxu0
        %v2050 = vadd.f32 %v1781, %v2049
        %v2051 = vpop.f32.mrb[0].mxu0
        %v2052 = vpop.f32.mrb[0].mxu0
        %v2053 = vpop.f32.mrb[0].mxu0
        %2054 = vdwg.mxu0
        %v2055 = vsel %vm1098, %v2050, -inf
        %2056 = vmax.xlane.f32.xlu0 %v2055
        %v2057 = vpop.xlane.xlu0 %2056
        %v2058 = vsub.f32 %v2050, %v2057
        %v2059 = vmul.f32 %v2058, 1.442695
        %v2060 = vpow.pop %v2059
        %v2061 = vsel %vm1098, %v2060, 0.0
        %2062 = vadd.xlane.f32.xlu0 %v2061
        %v2063 = vpop.xlane.xlu0 %2062
        %v2064 = vrcp.pop %v2063
        %v2065 = vmul.f32 %v2060, %v2064
        %s2066 = scalar_lea.vmem %s953, 16 [#allocation23]
        %2067 = vst.msk [vmem:[%s2066] sm:$0xff] %vm1098, %v2065
        %v2068 = vpack.c.bf16 %v2065, %v2065
        %2069 = vrot.lane.b32.xlu0 %v1776, 80
        %v2070 = vpop.permute.xlu0 %2069
        %v2072 = vsel %vm1098, %v2068, 0
        %v2075 = vsel %vm1848, %v2070, 0
        %2077 = vmatprep.subr.bf16.mxu0 0
        %2078 = vmatpush1.bf16.msra.mxu0 %v2075
        %2079 = vmatprep.subr.bf16.mxu0 0
        %2080 = vmatpush1.bf16.msra.mxu0 0
        %2081 = vmatprep.subr.bf16.mxu0 0
        %2082 = vmatpush1.bf16.msra.mxu0 0
        %2083 = vmatprep.subr.bf16.mxu0 0
        %2084 = vmatpush1.bf16.msra.mxu0 0
        %2085 = vmatprep.subr.bf16.mxu0 0
        %2086 = vmatpush1.bf16.msra.mxu0 0
        %2087 = vmatprep.subr.bf16.mxu0 0
        %2088 = vmatpush1.bf16.msra.mxu0 0
        %2089 = vmatprep.subr.bf16.mxu0 0
        %2090 = vmatpush1.bf16.msra.mxu0 0
        %2091 = vmatprep.subr.bf16.mxu0 0
        %2092 = vmatpush1.bf16.msra.mxu0 0
        %2093 = vmatprep.subr.bf16.mxu0 0
        %2094 = vmatpush1.bf16.msra.mxu0 0
        %2095 = vmatprep.subr.bf16.mxu0 0
        %2096 = vmatpush1.bf16.msra.mxu0 0
        %2097 = vmatprep.subr.bf16.mxu0 0
        %2098 = vmatpush1.bf16.msra.mxu0 0
        %2099 = vmatprep.subr.bf16.mxu0 0
        %2100 = vmatpush1.bf16.msra.mxu0 0
        %2101 = vmatprep.subr.bf16.mxu0 0
        %2102 = vmatpush1.bf16.msra.mxu0 0
        %2103 = vmatprep.subr.bf16.mxu0 0
        %2104 = vmatpush1.bf16.msra.mxu0 0
        %2105 = vmatprep.subr.bf16.mxu0 0
        %2106 = vmatpush1.bf16.msra.mxu0 0
        %2107 = vmatprep.subr.bf16.mxu0 0
        %2108 = vmatpush1.bf16.msra.mxu0 0
        %2109 = vmatprep.mubr.bf16.mxu0 0
        %2110 = vmatmul.mubr.bf16.gmra.mrb[0].mxu0 %v2072
        %v2111 = vpop.f32.mrb[0].mxu0
        %v2112 = vadd.f32 0.0, %v2111
        %v2113 = vpop.f32.mrb[0].mxu0
        %v2114 = vpop.f32.mrb[0].mxu0
        %v2115 = vpop.f32.mrb[0].mxu0
        %2116 = vdwg.mxu0
        %2117 = vrot.lane.b32.xlu0 %v1775, 104
        %v2118 = vpop.permute.xlu0 %2117
        %2119 = vrot.lane.b32.xlu0 %v1776, 104
        %v2120 = vpop.permute.xlu0 %2119
        %v2122 = vsel %vm1098, %v2118, 0
        %v2125 = vsel %vm1098, %v2120, 0
        %2127 = vmatprep.subr.bf16.mxu0 0
        %2128 = vmatpush1.bf16.xpose.msra.mxu0 %v2125
        %2129 = vmatprep.subr.bf16.mxu0 0
        %2130 = vmatpush1.bf16.xpose.msra.mxu0 0
        %2131 = vmatprep.subr.bf16.mxu0 0
        %2132 = vmatpush1.bf16.xpose.msra.mxu0 0
        %2133 = vmatprep.subr.bf16.mxu0 0
        %2134 = vmatpush1.bf16.xpose.msra.mxu0 0
        %2135 = vmatprep.subr.bf16.mxu0 0
        %2136 = vmatpush1.bf16.xpose.msra.mxu0 0
        %2137 = vmatprep.subr.bf16.mxu0 0
        %2138 = vmatpush1.bf16.xpose.msra.mxu0 0
        %2139 = vmatprep.subr.bf16.mxu0 0
        %2140 = vmatpush1.bf16.xpose.msra.mxu0 0
        %2141 = vmatprep.subr.bf16.mxu0 0
        %2142 = vmatpush1.bf16.xpose.msra.mxu0 0
        %2143 = vmatprep.subr.bf16.mxu0 0
        %2144 = vmatpush1.bf16.xpose.msra.mxu0 0
        %2145 = vmatprep.subr.bf16.mxu0 0
        %2146 = vmatpush1.bf16.xpose.msra.mxu0 0
        %2147 = vmatprep.subr.bf16.mxu0 0
        %2148 = vmatpush1.bf16.xpose.msra.mxu0 0
        %2149 = vmatprep.subr.bf16.mxu0 0
        %2150 = vmatpush1.bf16.xpose.msra.mxu0 0
        %2151 = vmatprep.subr.bf16.mxu0 0
        %2152 = vmatpush1.bf16.xpose.msra.mxu0 0
        %2153 = vmatprep.subr.bf16.mxu0 0
        %2154 = vmatpush1.bf16.xpose.msra.mxu0 0
        %2155 = vmatprep.subr.bf16.mxu0 0
        %2156 = vmatpush1.bf16.xpose.msra.mxu0 0
        %2157 = vmatprep.subr.bf16.mxu0 0
        %2158 = vmatpush1.bf16.xpose.msra.mxu0 0
        %2159 = vmatprep.mubr.bf16.mxu0 0
        %2160 = vmatmul.mubr.bf16.gmra.mrb[0].mxu0 %v2122
        %v2161 = vpop.f32.mrb[0].mxu0
        %v2162 = vadd.f32 %v1781, %v2161
        %v2163 = vpop.f32.mrb[0].mxu0
        %v2164 = vpop.f32.mrb[0].mxu0
        %v2165 = vpop.f32.mrb[0].mxu0
        %2166 = vdwg.mxu0
        %v2167 = vsel %vm1098, %v2162, -inf
        %2168 = vmax.xlane.f32.xlu0 %v2167
        %v2169 = vpop.xlane.xlu0 %2168
        %v2170 = vsub.f32 %v2162, %v2169
        %v2171 = vmul.f32 %v2170, 1.442695
        %v2172 = vpow.pop %v2171
        %v2173 = vsel %vm1098, %v2172, 0.0
        %2174 = vadd.xlane.f32.xlu0 %v2173
        %v2175 = vpop.xlane.xlu0 %2174
        %v2176 = vrcp.pop %v2175
        %v2177 = vmul.f32 %v2172, %v2176
        %s2178 = scalar_lea.vmem %s953, 24 [#allocation23]
        %2179 = vst.msk [vmem:[%s2178] sm:$0xff] %vm1098, %v2177
        %v2180 = vpack.c.bf16 %v2177, %v2177
        %2181 = vrot.lane.b32.xlu0 %v1776, 72
        %v2182 = vpop.permute.xlu0 %2181
        %v2184 = vsel %vm1098, %v2180, 0
        %v2187 = vsel %vm1848, %v2182, 0
        %2189 = vmatprep.subr.bf16.mxu0 0
        %2190 = vmatpush1.bf16.msra.mxu0 %v2187
        %2191 = vmatprep.subr.bf16.mxu0 0
        %2192 = vmatpush1.bf16.msra.mxu0 0
        %2193 = vmatprep.subr.bf16.mxu0 0
        %2194 = vmatpush1.bf16.msra.mxu0 0
        %2195 = vmatprep.subr.bf16.mxu0 0
        %2196 = vmatpush1.bf16.msra.mxu0 0
        %2197 = vmatprep.subr.bf16.mxu0 0
        %2198 = vmatpush1.bf16.msra.mxu0 0
        %2199 = vmatprep.subr.bf16.mxu0 0
        %2200 = vmatpush1.bf16.msra.mxu0 0
        %2201 = vmatprep.subr.bf16.mxu0 0
        %2202 = vmatpush1.bf16.msra.mxu0 0
        %2203 = vmatprep.subr.bf16.mxu0 0
        %2204 = vmatpush1.bf16.msra.mxu0 0
        %2205 = vmatprep.subr.bf16.mxu0 0
        %2206 = vmatpush1.bf16.msra.mxu0 0
        %2207 = vmatprep.subr.bf16.mxu0 0
        %2208 = vmatpush1.bf16.msra.mxu0 0
        %2209 = vmatprep.subr.bf16.mxu0 0
        %2210 = vmatpush1.bf16.msra.mxu0 0
        %2211 = vmatprep.subr.bf16.mxu0 0
        %2212 = vmatpush1.bf16.msra.mxu0 0
        %2213 = vmatprep.subr.bf16.mxu0 0
        %2214 = vmatpush1.bf16.msra.mxu0 0
        %2215 = vmatprep.subr.bf16.mxu0 0
        %2216 = vmatpush1.bf16.msra.mxu0 0
        %2217 = vmatprep.subr.bf16.mxu0 0
        %2218 = vmatpush1.bf16.msra.mxu0 0
        %2219 = vmatprep.subr.bf16.mxu0 0
        %2220 = vmatpush1.bf16.msra.mxu0 0
        %2221 = vmatprep.mubr.bf16.mxu0 0
        %2222 = vmatmul.mubr.bf16.gmra.mrb[0].mxu0 %v2184
        %v2223 = vpop.f32.mrb[0].mxu0
        %v2224 = vadd.f32 0.0, %v2223
        %v2225 = vpop.f32.mrb[0].mxu0
        %v2226 = vpop.f32.mrb[0].mxu0
        %v2227 = vpop.f32.mrb[0].mxu0
        %2228 = vdwg.mxu0
        %2230 = vrot.lane.b32.xlu0 %v2000, 8
        %v2231 = vpop.permute.xlu0 %2230
        %2234 = vrot.lane.b32.xlu0 %v2112, 16
        %v2235 = vpop.permute.xlu0 %2234
        %2238 = vrot.lane.b32.xlu0 %v2224, 24
        %v2239 = vpop.permute.xlu0 %2238
        %v2241 = vsel %vm1098, %v1887, %v2231
        %v2242 = vsel %vm1145, %v2241, %v2235
        %v2243 = vsel %vm1544, %v2242, %v2239
        %v2244 = vpack.c.bf16 %v2243, %v2243
        %v2245 = vld [vmem:[%s13] sm:$0xf]
        %v2246 = vld [vmem:[%s13 + $0x4] sm:$0xf]
        %v2247 = vld [vmem:[%s13 + $0x8] sm:$0xf]
        %v2248 = vld [vmem:[%s13 + $0xc] sm:$0xf]
        %v2249 = vld [vmem:[#allocation19] sm:$0x1]
        %v2251 = vlaneseq
        %v2252 = vshrl.u32 %v2251, 7
        %v2253 = vsub.s32 0, %v2252
        %v2254 = vrot.slane %v2249, %v2253
        %v2260 = vunpack.c.l.b16 %v2245
        %v2261 = vunpack.c.l.b16 %v2246
        %v2262 = vunpack.c.l.b16 %v2247
        %v2263 = vunpack.c.l.b16 %v2248
        %v2264 = vpack.c.b16 %v2261, %v2260
        %v2265 = vpack.c.b16 %v2263, %v2262
        %v2269 = vsel %vm998, %v2244, 0
        %2271 = vmatprep.subr.bf16.mxu0 0
        %2272 = vmatpush1.bf16.msra.mxu0 %v2264
        %2273 = vmatprep.subr.bf16.mxu0 0
        %2274 = vmatpush1.bf16.msra.mxu0 %v2265
        %2275 = vmatprep.subr.bf16.mxu0 0
        %2276 = vmatpush1.bf16.msra.mxu0 0
        %2277 = vmatprep.subr.bf16.mxu0 0
        %2278 = vmatpush1.bf16.msra.mxu0 0
        %2279 = vmatprep.subr.bf16.mxu0 0
        %2280 = vmatpush1.bf16.msra.mxu0 0
        %2281 = vmatprep.subr.bf16.mxu0 0
        %2282 = vmatpush1.bf16.msra.mxu0 0
        %2283 = vmatprep.subr.bf16.mxu0 0
        %2284 = vmatpush1.bf16.msra.mxu0 0
        %2285 = vmatprep.subr.bf16.mxu0 0
        %2286 = vmatpush1.bf16.msra.mxu0 0
        %2287 = vmatprep.subr.bf16.mxu0 0
        %2288 = vmatpush1.bf16.msra.mxu0 0
        %2289 = vmatprep.subr.bf16.mxu0 0
        %2290 = vmatpush1.bf16.msra.mxu0 0
        %2291 = vmatprep.subr.bf16.mxu0 0
        %2292 = vmatpush1.bf16.msra.mxu0 0
        %2293 = vmatprep.subr.bf16.mxu0 0
        %2294 = vmatpush1.bf16.msra.mxu0 0
        %2295 = vmatprep.subr.bf16.mxu0 0
        %2296 = vmatpush1.bf16.msra.mxu0 0
        %2297 = vmatprep.subr.bf16.mxu0 0
        %2298 = vmatpush1.bf16.msra.mxu0 0
        %2299 = vmatprep.subr.bf16.mxu0 0
        %2300 = vmatpush1.bf16.msra.mxu0 0
        %2301 = vmatprep.subr.bf16.mxu0 0
        %2302 = vmatpush1.bf16.msra.mxu0 0
        %2303 = vmatprep.mubr.bf16.mxu0 0
        %2304 = vmatmul.mubr.bf16.gmra.mrb[0].mxu0 %v2269
        %v2305 = vpop.f32.mrb[0].mxu0
        %v2306 = vadd.f32 %v2254, %v2305
        %v2307 = vpop.f32.mrb[0].mxu0
        %v2308 = vpop.f32.mrb[0].mxu0
        %v2309 = vpop.f32.mrb[0].mxu0
        %2310 = vdwg.mxu0
        %v2311 = vadd.f32 %v1639, %v2306
        %v2312 = vsel %vm998, %v2311, 0.0
        %2313 = vadd.xlane.f32.xlu0 %v2312
        %v2314 = vpop.xlane.xlu0 %2313
        %v2315 = vmul.f32 %v2314, %v1617
        %v2316 = vsub.f32 %v2311, %v2315
        %v2317 = vmul.f32 %v2316, %v2316
        %v2318 = vsel %vm998, %v2317, 0.0
        %2319 = vadd.xlane.f32.xlu0 %v2318
        %v2320 = vpop.xlane.xlu0 %2319
        %v2321 = vmul.f32 %v2320, %v1617
        %v2322 = vld [vmem:[%s19 + $0x1] sm:$0x1]
        %v2323 = vld [vmem:[%s20 + $0x1] sm:$0x1]
        %v2324 = vadd.f32 %v2321, 1e-05
        %v2325 = vrsqrt.pop %v2324
        %v2326 = vmul.f32 %v2316, %v2325
        %v2327 = vlaneseq
        %v2328 = vshrl.u32 %v2327, 7
        %v2329 = vsub.s32 0, %v2328
        %v2330 = vrot.slane %v2322, %v2329
        %v2331 = vmul.f32 %v2326, %v2330
        %v2332 = vlaneseq
        %v2333 = vshrl.u32 %v2332, 7
        %v2334 = vsub.s32 0, %v2333
        %v2335 = vrot.slane %v2323, %v2334
        %v2336 = vadd.f32 %v2331, %v2335
        %v2337 = vpack.c.bf16 %v2336, %v2336
        %v2338 = vld [vmem:[#allocation20] sm:$0xf]
        %v2339 = vld [vmem:[#allocation20 + $0x4] sm:$0xf]
        %v2340 = vld [vmem:[#allocation20 + $0x8] sm:$0xf]
        %v2341 = vld [vmem:[#allocation20 + $0xc] sm:$0xf]
        %v2342 = vld [vmem:[%s16] sm:$0x1]
        %v2344 = vlaneseq
        %v2345 = vshrl.u32 %v2344, 7
        %v2346 = vsub.s32 0, %v2345
        %v2347 = vrot.slane %v2342, %v2346
        %v2353 = vunpack.c.l.b16 %v2338
        %v2354 = vunpack.c.l.b16 %v2339
        %v2355 = vunpack.c.l.b16 %v2340
        %v2356 = vunpack.c.l.b16 %v2341
        %v2357 = vpack.c.b16 %v2354, %v2353
        %v2358 = vpack.c.b16 %v2356, %v2355
        %v2362 = vsel %vm998, %v2337, 0
        %2364 = vmatprep.subr.bf16.mxu0 0
        %2365 = vmatpush1.bf16.msra.mxu0 %v2357
        %2366 = vmatprep.subr.bf16.mxu0 0
        %2367 = vmatpush1.bf16.msra.mxu0 %v2358
        %2368 = vmatprep.subr.bf16.mxu0 0
        %2369 = vmatpush1.bf16.msra.mxu0 0
        %2370 = vmatprep.subr.bf16.mxu0 0
        %2371 = vmatpush1.bf16.msra.mxu0 0
        %2372 = vmatprep.subr.bf16.mxu0 0
        %2373 = vmatpush1.bf16.msra.mxu0 0
        %2374 = vmatprep.subr.bf16.mxu0 0
        %2375 = vmatpush1.bf16.msra.mxu0 0
        %2376 = vmatprep.subr.bf16.mxu0 0
        %2377 = vmatpush1.bf16.msra.mxu0 0
        %2378 = vmatprep.subr.bf16.mxu0 0
        %2379 = vmatpush1.bf16.msra.mxu0 0
        %2380 = vmatprep.subr.bf16.mxu0 0
        %2381 = vmatpush1.bf16.msra.mxu0 0
        %2382 = vmatprep.subr.bf16.mxu0 0
        %2383 = vmatpush1.bf16.msra.mxu0 0
        %2384 = vmatprep.subr.bf16.mxu0 0
        %2385 = vmatpush1.bf16.msra.mxu0 0
        %2386 = vmatprep.subr.bf16.mxu0 0
        %2387 = vmatpush1.bf16.msra.mxu0 0
        %2388 = vmatprep.subr.bf16.mxu0 0
        %2389 = vmatpush1.bf16.msra.mxu0 0
        %2390 = vmatprep.subr.bf16.mxu0 0
        %2391 = vmatpush1.bf16.msra.mxu0 0
        %2392 = vmatprep.subr.bf16.mxu0 0
        %2393 = vmatpush1.bf16.msra.mxu0 0
        %2394 = vmatprep.subr.bf16.mxu0 0
        %2395 = vmatpush1.bf16.msra.mxu0 0
        %2396 = vmatprep.mubr.bf16.mxu0 0
        %2397 = vmatmul.mubr.bf16.gmra.mrb[0].mxu0 %v2362
        %v2398 = vpop.f32.mrb[0].mxu0
        %v2399 = vadd.f32 %v2347, %v2398
        %v2400 = vpop.f32.mrb[0].mxu0
        %v2401 = vpop.f32.mrb[0].mxu0
        %v2402 = vpop.f32.mrb[0].mxu0
        %2403 = vdwg.mxu0
        %v2404 = vmax.f32 %v2399, 0.0
        %v2405 = vpack.c.bf16 %v2404, %v2404
        %v2406 = vld [vmem:[%s17] sm:$0xf]
        %v2407 = vld [vmem:[%s17 + $0x4] sm:$0xf]
        %v2408 = vld [vmem:[%s17 + $0x8] sm:$0xf]
        %v2409 = vld [vmem:[%s17 + $0xc] sm:$0xf]
        %v2410 = vld [vmem:[%s17 + $0x10] sm:$0xf]
        %v2411 = vld [vmem:[%s17 + $0x14] sm:$0xf]
        %v2412 = vld [vmem:[%s17 + $0x18] sm:$0xf]
        %v2413 = vld [vmem:[%s17 + $0x1c] sm:$0xf]
        %v2414 = vld [vmem:[%s18] sm:$0x1]
        %v2416 = vlaneseq
        %v2417 = vshrl.u32 %v2416, 7
        %v2418 = vsub.s32 0, %v2417
        %v2419 = vrot.slane %v2414, %v2418
        %v2429 = vunpack.c.l.b16 %v2406
        %v2430 = vunpack.c.l.b16 %v2407
        %v2431 = vunpack.c.l.b16 %v2408
        %v2432 = vunpack.c.l.b16 %v2409
        %v2433 = vunpack.c.l.b16 %v2410
        %v2434 = vunpack.c.l.b16 %v2411
        %v2435 = vunpack.c.l.b16 %v2412
        %v2436 = vunpack.c.l.b16 %v2413
        %v2437 = vpack.c.b16 %v2430, %v2429
        %v2438 = vpack.c.b16 %v2432, %v2431
        %v2439 = vpack.c.b16 %v2434, %v2433
        %v2440 = vpack.c.b16 %v2436, %v2435
        %vm2445 = vcmask 523264
        %v2447 = vsel %vm2445, %v2405, 0
        %2449 = vmatprep.subr.bf16.mxu0 0
        %2450 = vmatpush1.bf16.msra.mxu0 %v2437
        %2451 = vmatprep.subr.bf16.mxu0 0
        %2452 = vmatpush1.bf16.msra.mxu0 %v2438
        %2453 = vmatprep.subr.bf16.mxu0 0
        %2454 = vmatpush1.bf16.msra.mxu0 %v2439
        %2455 = vmatprep.subr.bf16.mxu0 0
        %2456 = vmatpush1.bf16.msra.mxu0 %v2440
        %2457 = vmatprep.subr.bf16.mxu0 0
        %2458 = vmatpush1.bf16.msra.mxu0 0
        %2459 = vmatprep.subr.bf16.mxu0 0
        %2460 = vmatpush1.bf16.msra.mxu0 0
        %2461 = vmatprep.subr.bf16.mxu0 0
        %2462 = vmatpush1.bf16.msra.mxu0 0
        %2463 = vmatprep.subr.bf16.mxu0 0
        %2464 = vmatpush1.bf16.msra.mxu0 0
        %2465 = vmatprep.subr.bf16.mxu0 0
        %2466 = vmatpush1.bf16.msra.mxu0 0
        %2467 = vmatprep.subr.bf16.mxu0 0
        %2468 = vmatpush1.bf16.msra.mxu0 0
        %2469 = vmatprep.subr.bf16.mxu0 0
        %2470 = vmatpush1.bf16.msra.mxu0 0
        %2471 = vmatprep.subr.bf16.mxu0 0
        %2472 = vmatpush1.bf16.msra.mxu0 0
        %2473 = vmatprep.subr.bf16.mxu0 0
        %2474 = vmatpush1.bf16.msra.mxu0 0
        %2475 = vmatprep.subr.bf16.mxu0 0
        %2476 = vmatpush1.bf16.msra.mxu0 0
        %2477 = vmatprep.subr.bf16.mxu0 0
        %2478 = vmatpush1.bf16.msra.mxu0 0
        %2479 = vmatprep.subr.bf16.mxu0 0
        %2480 = vmatpush1.bf16.msra.mxu0 0
        %2481 = vmatprep.mubr.bf16.mxu0 0
        %2482 = vmatmul.mubr.bf16.gmra.mrb[0].mxu0 %v2447
        %v2483 = vpop.f32.mrb[0].mxu0
        %v2484 = vadd.f32 %v2419, %v2483
        %v2485 = vpop.f32.mrb[0].mxu0
        %v2486 = vpop.f32.mrb[0].mxu0
        %v2487 = vpop.f32.mrb[0].mxu0
        %2488 = vdwg.mxu0
        %v2489 = vadd.f32 %v2336, %v2484
        %v2490 = vsel %vm998, %v2489, 0.0
        %2491 = vadd.xlane.f32.xlu0 %v2490
        %v2492 = vpop.xlane.xlu0 %2491
        %v2493 = vmul.f32 %v2492, %v1617
        %v2494 = vsub.f32 %v2489, %v2493
        %v2495 = vmul.f32 %v2494, %v2494
        %v2496 = vsel %vm998, %v2495, 0.0
        %2497 = vadd.xlane.f32.xlu0 %v2496
        %v2498 = vpop.xlane.xlu0 %2497
        %v2499 = vmul.f32 %v2498, %v1617
        %v2500 = vld [vmem:[%s19 + $0x2] sm:$0x1]
        %v2501 = vld [vmem:[%s20 + $0x2] sm:$0x1]
        %v2502 = vadd.f32 %v2499, 1e-05
        %v2503 = vrsqrt.pop %v2502
        %v2504 = vmul.f32 %v2494, %v2503
        %v2505 = vlaneseq
        %v2506 = vshrl.u32 %v2505, 7
        %v2507 = vsub.s32 0, %v2506
        %v2508 = vrot.slane %v2500, %v2507
        %v2509 = vmul.f32 %v2504, %v2508
        %v2510 = vlaneseq
        %v2511 = vshrl.u32 %v2510, 7
        %v2512 = vsub.s32 0, %v2511
        %v2513 = vrot.slane %v2501, %v2512
        %v2514 = vadd.f32 %v2509, %v2513
        %2515 = vst.msk [vmem:[%s947] sm:$0xff] %vm998, %v2514
        %s2516 = sand.u32 %s540, 1
        %s2517 = scalar_lea.sflag [#allocation4], %s2516
        %s2518 = sand.u32 %s540, 1
        %s2519 = smul.addr %s2518, 8
        %s2520 = scalar_lea.vmem [#allocation22], %s2519
        %s2521 = sand.u32 %s568, 1
        %s2522 = sand.u32 %s568, 1
        %s2523 = smul.addr %s2522, 32
        %s2524 = scalar_lea.vmem [#allocation23], %s2523
        // Predicated region
        $region153: #{tpu_custom_call.1} parent=103 // pred_check
          %p2525 = pneg %p550
        $region154: #{tpu_custom_call.1} parent=103 // pred_check_branch
          %2527 = sbr.rel (%p2525) target = $region156
        $region155: #{tpu_custom_call.1} parent=103 // pred_region
          %s2529 = ssub.s32 128, 128
          %2530 = vsyncadd %s2517, %s2529
          %s2531 = smul.addr %s52, 2
          %s2532 = sadd.s32 %s53, %s2531
          %s2533 = smul.addr %s2532, 128
          %s2534 = scalar_lea.hbm %s21, %s2533
          %s2536 = sshll.u32 %s2520, 4
          %s2537 = int_to_ptr.vmem [resolvable:$true] %s2536
          %2539 = dma.vmem_to_hbm [thread:$0]  %s2537, 128, %s2534, %s2517
        $region156: #{tpu_custom_call.1} parent=103 // pred_fallthru
          _
        // Predicated region
        $region157: #{tpu_custom_call.1} parent=103 // pred_check
          %p2540 = pneg %p578
        $region158: #{tpu_custom_call.1} parent=103 // pred_check_branch
          %2542 = sbr.rel (%p2540) target = $region160
        $region159: #{tpu_custom_call.1} parent=103 // pred_region
          %s2543 = smul.addr %s52, 8
          %s2544 = sadd.s32 %s53, %s2543
          %s2545 = smul.addr %s2544, 8
          %s2546 = scalar_lea.vmem %s22, %s2545
          // Predicated region
          $region161: #{tpu_custom_call.1} parent=159 // pred_check
            _
          $region162: #{tpu_custom_call.1} parent=159 // pred_check_branch
            %2548 = sbr.rel (0) target = $region164
          $region163: #{tpu_custom_call.1} parent=159 // pred_region
            // Predicated region
            $region165: #{tpu_custom_call.1} parent=163 // pred_check
              _
            $region166: #{tpu_custom_call.1} parent=163 // pred_check_branch
              %2550 = sbr.rel (0) target = $region168
            $region167: #{tpu_custom_call.1} parent=163 // pred_region
              // Predicated region
              $region180: #{tpu_custom_call.1} parent=167 // pred_check
                _
              $region181: #{tpu_custom_call.1} parent=167 // pred_check_branch
                %2571 = sbr.rel (0) target = $region183
              $region182: #{tpu_custom_call.1} parent=167 // pred_region
                loop: start=0, step=1, limit=1
                $region184: #{tpu_custom_call.1} parent=182 // loop_pre_header
                  _
                $region185: #{tpu_custom_call.1} parent=182 // loop_header
                  %s2573 = sphi 0, %s2577
                  %p2574 = scmp.ge.s32.totalorder %s2573, 1
                  %s2578 = sphi %s2524, %s2524
                  %s2579 = sphi %s2546, %s2546
                $region186: #{tpu_custom_call.1} parent=182 // loop_header_branch
                  %2576 = sbr.rel (%p2574) target = $region190
                $region187: #{tpu_custom_call.1} parent=182 // loop_body
                  %v2580 = vld [vmem:[%s2578] sm:$0xff]
                  %2581 = vst [vmem:[%s2579] sm:$0xff] %v2580
                  %v2582 = vld [vmem:[%s2578 + $0x8] sm:$0xff]
                  %2583 = vst [vmem:[%s2579 + $0x10] sm:$0xff] %v2582
                  %v2584 = vld [vmem:[%s2578 + $0x10] sm:$0xff]
                  %2585 = vst [vmem:[%s2579 + $0x20] sm:$0xff] %v2584
                  %v2586 = vld [vmem:[%s2578 + $0x18] sm:$0xff]
                  %2587 = vst [vmem:[%s2579 + $0x30] sm:$0xff] %v2586
                $region188: #{tpu_custom_call.1} parent=182 // loop_footer
                  %s2577 = sadd.s32 1, %s2573
                $region189: #{tpu_custom_call.1} parent=182 // loop_footer_branch
                  %2572 = sbr.rel target = $region185
                $region190: #{tpu_custom_call.1} parent=182 // loop_exit
                  _
              $region183: #{tpu_custom_call.1} parent=167 // pred_fallthru
                _
              // Predicated region
              $region191: #{tpu_custom_call.1} parent=167 // pred_check
                _
              $region192: #{tpu_custom_call.1} parent=167 // pred_check_branch
                %2589 = sbr.rel target = $region194
              $region193: #{tpu_custom_call.1} parent=167 // pred_region
                _
              $region194: #{tpu_custom_call.1} parent=167 // pred_fallthru
                _
            $region168: #{tpu_custom_call.1} parent=163 // pred_fallthru
              _
            // Predicated region
            $region169: #{tpu_custom_call.1} parent=163 // pred_check
              _
            $region170: #{tpu_custom_call.1} parent=163 // pred_check_branch
              %2552 = sbr.rel target = $region172
            $region171: #{tpu_custom_call.1} parent=163 // pred_region
              loop: start=0, step=1, limit=1
              $region173: #{tpu_custom_call.1} parent=171 // loop_pre_header
                _
              $region174: #{tpu_custom_call.1} parent=171 // loop_header
                %s2555 = sphi 0, %s2559
                %p2556 = scmp.ge.s32.totalorder %s2555, 1
                %s2560 = sphi %s2524, %s2524
                %s2561 = sphi %s2546, %s2546
              $region175: #{tpu_custom_call.1} parent=171 // loop_header_branch
                %2558 = sbr.rel (%p2556) target = $region179
              $region176: #{tpu_custom_call.1} parent=171 // loop_body
                %v2562 = vld [vmem:[%s2560] sm:$0xff]
                %2563 = vst [vmem:[%s2561] sm:$0xff] %v2562
                %v2564 = vld [vmem:[%s2560 + $0x8] sm:$0xff]
                %2565 = vst [vmem:[%s2561 + $0x10] sm:$0xff] %v2564
                %v2566 = vld [vmem:[%s2560 + $0x10] sm:$0xff]
                %2567 = vst [vmem:[%s2561 + $0x20] sm:$0xff] %v2566
                %v2568 = vld [vmem:[%s2560 + $0x18] sm:$0xff]
                %2569 = vst [vmem:[%s2561 + $0x30] sm:$0xff] %v2568
              $region177: #{tpu_custom_call.1} parent=171 // loop_footer
                %s2559 = sadd.s32 1, %s2555
              $region178: #{tpu_custom_call.1} parent=171 // loop_footer_branch
                %2554 = sbr.rel target = $region174
              $region179: #{tpu_custom_call.1} parent=171 // loop_exit
                _
            $region172: #{tpu_custom_call.1} parent=163 // pred_fallthru
              _
          $region164: #{tpu_custom_call.1} parent=159 // pred_fallthru
            _
          %2590 = vnop
        $region160: #{tpu_custom_call.1} parent=103 // pred_fallthru
          _
      $region104: #{tpu_custom_call.1} parent=5 // pred_fallthru
        _
      %p2591 = scmp.le.s32.totalorder 2, %s43
      // Predicated region
      $region195: #{tpu_custom_call.1} parent=5 // pred_check
        %p2592 = pneg %p2591
      $region196: #{tpu_custom_call.1} parent=5 // pred_check_branch
        %2594 = sbr.rel (%p2592) target = $region198
      $region197: #{tpu_custom_call.1} parent=5 // pred_region
        %s2595 = ssub.s32 %s43, 2
        // Predicated region
        $region199: #{tpu_custom_call.1} parent=197 // pred_check
          %p2596 = pneg %p556
        $region200: #{tpu_custom_call.1} parent=197 // pred_check_branch
          %2598 = sbr.rel (%p2596) target = $region202
        $region201: #{tpu_custom_call.1} parent=197 // pred_region
          %s2599 = sand.u32 %s541, 1
          %s2600 = scalar_lea.sflag [#allocation4], %s2599
          %s2601 = sand.u32 %s541, 1
          %s2602 = smul.addr %s2601, 8
          %s2603 = scalar_lea.vmem [#allocation22], %s2602
          %2604 = dma.done %s2600, 128
        $region202: #{tpu_custom_call.1} parent=197 // pred_fallthru
          _
        // Predicated region
        $region203: #{tpu_custom_call.1} parent=197 // pred_check
          %p2605 = pneg %p584
        $region204: #{tpu_custom_call.1} parent=197 // pred_check_branch
          %2607 = sbr.rel (%p2605) target = $region206
        $region205: #{tpu_custom_call.1} parent=197 // pred_region
          %s2608 = sand.u32 %s569, 1
          %s2609 = sand.u32 %s569, 1
          %s2610 = smul.addr %s2609, 32
          %s2611 = scalar_lea.vmem [#allocation23], %s2610
        $region206: #{tpu_custom_call.1} parent=197 // pred_fallthru
          _
      $region198: #{tpu_custom_call.1} parent=5 // pred_fallthru
        _
    $region6: #{tpu_custom_call.1} parent=1 // loop_footer
      %s47 = sadd.s32 1, %s43
    $region7: #{tpu_custom_call.1} parent=1 // loop_footer_branch
      %42 = sbr.rel target = $region3
    $region8: #{tpu_custom_call.1} parent=1 // loop_exit
      _
    %2612 = vsyncpa [#allocation3], 1
    %s2613 = scalar_lea.sflag [#allocation3], 1
    %2614 = vsyncpa %s2613, 1
    %2615 = vsyncpa [#allocation6], 1
    %s2616 = scalar_lea.sflag [#allocation6], 1
    %2617 = vsyncpa %s2616, 1
    %2618 = vsyncpa [#allocation9], 1
    %2619 = vsyncpa [#allocation12], 1
    %2620 = vsyncpa [#allocation15], 1
    %2621 = vsyncpa [#allocation18], 1
    %2622 = vsyncpa [#allocation21], 1
    %2623 = vsyncpa [#allocation4], 1
    %s2624 = scalar_lea.sflag [#allocation4], 1
    %2625 = vsyncpa %s2624, 1

</llo_original>
